<compile_context>
chip_gen: v7x
topology: tpu7x:2x2x1
jax: 0.10.0
libtpu: 0.0.40
codegen_flags: <defaults>
</compile_context>

<pallas_src>
import jax
import jax.numpy as jnp
from jax.experimental import pallas as pl
from jax.experimental.pallas import tpu as pltpu


# --------------------------------- fused kernel --------------------------------------


def _cnn1d_fused_kernel(cols_ref, w1_ref, b1_ref, w2_ref, b2_ref, c2_ref,
                        w3_ref, b3_ref, w4_ref, b4_ref, out_ref):
    f32 = jnp.float32
    TB = out_ref.shape[0]              # items per grid step (multiple of 8)

    def mm(a, b):
        return jnp.dot(a, b, preferred_element_type=f32)

    # ---- conv1 + ReLU + MaxPool1d(4,4): one (128*TB,20)x(20,64) matmul -------------
    # cols rows are ordered [phase p(4)][group c(4)][u(8)][item t(TB)]; conv position
    # i = 72 + 16u + 4c + p, so the 4 phase blocks of a pool group are the 4 aligned
    # (32*TB)-row slices of one matmul result.
    h = mm(cols_ref[...], w1_ref[...])                            # (128*TB, 64)
    m1 = 32 * TB
    q = jnp.maximum(jnp.maximum(h[0:m1, :], h[m1:2 * m1, :]),
                    jnp.maximum(h[2 * m1:3 * m1, :], h[3 * m1:4 * m1, :]))
    # bias + ReLU hoisted after the pool (bias is position-invariant, ReLU monotone).
    p1 = jnp.maximum(q + b1_ref[...], 0.0)                        # (32*TB, 64)
    # p1 row (c*8+u)*TB + t  <->  pool1 position s = 18 + 4u + c of item t.

    # ---- conv2 (k=5, s=2) on mod-4 de-interleaved rows -----------------------------
    # Window R_c[n] = h1pad[4n+c]; its data rows (n=5..12 / 4..11 for the shifted
    # window) come from p1, everything else (constant relu(b1) rows and the conv2
    # zero-pad rows h1pad[0],[1],[65],[66]) is precomputed on the host into c2_ref.
    z5 = jnp.zeros((5 * TB, 64), f32)
    z4 = jnp.zeros((4 * TB, 64), f32)
    z3 = jnp.zeros((3 * TB, 64), f32)

    def dat(c):                                                   # data rows, residue c
        return p1[c * 8 * TB:(c * 8 + 8) * TB, :]                 # (8*TB, 64)

    def win_a(c):                                                 # data part of R_c[0:16]
        return jnp.concatenate([z5, dat(c), z3], axis=0)          # (16*TB, 64)

    def win_b(c):                                                 # data part of R_c[1:17]
        return jnp.concatenate([z4, dat(c), z4], axis=0)          # (16*TB, 64)

    d0a, d1a, d2a, d3a = win_a(0), win_a(1), win_a(2), win_a(3)
    d0b, d1b, d2b = win_b(0), win_b(1), win_b(2)

    def lhs(even, odd):                                           # even conv2 positions
        return jnp.concatenate([even, odd], axis=0)               # on top of odd ones

    y = (mm(lhs(d0a, d2a), w2_ref[0]) + mm(lhs(d1a, d3a), w2_ref[1])
         + mm(lhs(d2a, d0b), w2_ref[2]) + mm(lhs(d3a, d1b), w2_ref[3])
         + mm(lhs(d0b, d2b), w2_ref[4])
         + c2_ref[...])                                           # (32*TB, 64)

    # MaxPool1d(2,2): max of the aligned even/odd halves, then bias + ReLU.
    m2 = 16 * TB
    p2 = jnp.maximum(jnp.maximum(y[0:m2, :], y[m2:2 * m2, :]) + b2_ref[...], 0.0)
    # p2 row pos*TB + t  <->  pooled conv2 position pos of item t.

    # ---- Flatten (channel-major order folded into w3) -> fc1 -> ReLU ---------------
    acc = mm(p2[0:TB, :], w3_ref[0])                              # (TB, 32)
    for pos in range(1, 16):
        acc = acc + mm(p2[pos * TB:(pos + 1) * TB, :], w3_ref[pos])
    h3 = jnp.maximum(acc + b3_ref[...], 0.0)                      # (TB, 32)

    # TODO(synk): Dropout is eval-mode identity here; training-mode masking not implemented.
    out_ref[...] = mm(h3, w4_ref[...]) + b4_ref[...]              # (TB, 10)


# --------------------------- host-side glue (layout only) ----------------------------


def _conv1_cols_blocked(x, tb):
    """Conv1 im2col restricted to the 108 data-overlapping conv positions.

    Returns (B*128, 20) f32, blocked so that grid step s owns rows
    [s*tb*128, (s+1)*tb*128), ordered [phase p(4)][group c(4)][u(8)][item t(tb)];
    row (within a step) ((p*4+c)*8+u)*tb + t encodes conv position i = 72+16u+4c+p.
    Built with pad/reshape/slice/transpose only (no XLA gather).
    """
    B = x.shape[0]                                                # already multiple of tb
    xp = jnp.pad(x[:, 0, :], ((0, 0), (22, 26)))                  # (B, 880)
    xr = xp.reshape(B, 110, 8)
    cols = jnp.concatenate(
        [xr[:, 0:108, :], xr[:, 1:109, :], xr[:, 2:110, 0:4]], axis=2)   # (B,108,20)
    cols = jnp.pad(cols, ((0, 0), (0, 4), (0, 0)))                # (B, 112, 20)
    cols = cols.reshape(B, 7, 4, 4, 20)                           # [b, u, c, p, k]
    cols = jnp.pad(cols, ((0, 0), (0, 1), (0, 0), (0, 0), (0, 0)))  # u: 7 -> 8 (zero rows)
    cols = cols.reshape(B // tb, tb, 8, 4, 4, 20)                 # [s, t, u, c, p, k]
    cols = jnp.transpose(cols, (0, 4, 3, 2, 1, 5))                # [s, p, c, u, t, k]
    return cols.reshape(B * 128, 20)


def prepare_params(params):
    """One-time conversion of PyTorch-layout parameters into kernel layouts."""
    hp = jax.lax.Precision.HIGHEST
    w1 = params["w1"].reshape(64, 20).T                           # (20, 64)   [k, oc]
    w2 = jnp.transpose(params["w2"], (2, 1, 0))                   # (5,64,64)  [k, ic, oc]
    # Fold Flatten's channel-major (B,C,L)->(B,C*L) order into fc1's weight:
    # w3k[pos, ch, o] = w3[o, ch*16 + pos]
    w3 = jnp.transpose(params["w3"].reshape(32, 64, 16), (2, 1, 0))  # (16, 64, 32)
    w4 = params["w4"].T                                           # (32, 10)

    # Precompute the conv2 contribution of the constant window rows: rows whose value
    # is relu(b1) (pool1 positions whose windows never touch data) contribute
    # mask[row] * (relu(b1) @ w2[tap]); data rows and the conv2 zero-pad rows
    # (h1pad[0],[1],[65],[66]) contribute 0.  Exact by linearity of the matmul.
    rb1 = jnp.maximum(params["b1"], 0.0)                          # (64,)

    def const_rows(c, variant):
        m = [1.0] * 16
        if variant == "a":                                        # window R_c[0:16]
            for n in range(5, 13):
                m[n] = 0.0                                        # data rows
            if c in (0, 1):
                m[0] = 0.0                                        # h1pad[0] / h1pad[1]
        else:                                                     # window R_c[1:17]
            for n in range(4, 12):
                m[n] = 0.0                                        # data rows
            if c in (1, 2):
                m[15] = 0.0                                       # h1pad[65] / h1pad[66]
        return jnp.asarray(m, jnp.float32)

    # (even window, odd window) per conv2 tap, matching the kernel's lhs() stacking.
    taps = [((0, "a"), (2, "a")), ((1, "a"), (3, "a")), ((2, "a"), (0, "b")),
            ((3, "a"), (1, "b")), ((0, "b"), (2, "b"))]
    const2 = jnp.zeros((32, 64), jnp.float32)
    for t, ((ce, ve), (co, vo)) in enumerate(taps):
        mask = jnp.concatenate([const_rows(ce, ve), const_rows(co, vo)])   # (32,)
        lhs = mask[:, None] * rb1[None, :]                                 # (32, 64)
        const2 = const2 + jnp.dot(lhs, w2[t], precision=hp)

    return {
        "w1": w1, "b1": params["b1"].reshape(1, 64),
        "w2": w2, "b2": params["b2"].reshape(1, 64),
        "const2": const2,
        "w3": w3, "b3": params["b3"].reshape(1, 32),
        "w4": w4, "b4": params["b4"].reshape(1, 10),
    }


def cnn1d_forward(x, kp, tb=8):
    B, C_in, L = x.shape
    assert C_in == 1 and L == 832, "fc expects 64*16 features -> L must be 832"
    assert tb % 8 == 0, "batch tile must be a multiple of 8 (sublane alignment)"
    nsteps = -(-B // tb)
    Bp = nsteps * tb
    if Bp != B:
        x = jnp.pad(x, ((0, Bp - B), (0, 0), (0, 0)))

    cols = _conv1_cols_blocked(x, tb)                             # (Bp*128, 20)
    # Constant-window conv2 contribution, replicated item-minor to (32*tb, 64).
    c2b = jnp.broadcast_to(kp["const2"][:, None, :], (32, tb, 64)).reshape(32 * tb, 64)

    out = pl.pallas_call(
        _cnn1d_fused_kernel,
        out_shape=jax.ShapeDtypeStruct((Bp, 10), jnp.float32),
        grid=(nsteps,),
        in_specs=[
            pl.BlockSpec((tb * 128, 20), lambda b: (b, 0)),       # per-step im2col slab
            pl.BlockSpec((20, 64), lambda b: (0, 0)),             # weights stay VMEM-resident
            pl.BlockSpec((1, 64), lambda b: (0, 0)),
            pl.BlockSpec((5, 64, 64), lambda b: (0, 0, 0)),
            pl.BlockSpec((1, 64), lambda b: (0, 0)),
            pl.BlockSpec((32 * tb, 64), lambda b: (0, 0)),        # precomputed const slab
            pl.BlockSpec((16, 64, 32), lambda b: (0, 0, 0)),
            pl.BlockSpec((1, 32), lambda b: (0, 0)),
            pl.BlockSpec((32, 10), lambda b: (0, 0)),
            pl.BlockSpec((1, 10), lambda b: (0, 0)),
        ],
        out_specs=pl.BlockSpec((tb, 10), lambda b: (b, 0)),
        compiler_params=pltpu.CompilerParams(
            dimension_semantics=("parallel",),   # shard batch-tile steps across TCs (v7x)
        ),
    )(cols, kp["w1"], kp["b1"], kp["w2"], kp["b2"], c2b,
      kp["w3"], kp["b3"], kp["w4"], kp["b4"])
    return out[:B]


# ------------------- deterministic params + pure-XLA reference -----------------------


def init_params(key):
    ks = jax.random.split(key, 8)

    def u(k, shape, fan_in):
        bound = 1.0 / jnp.sqrt(jnp.float32(fan_in))
        return jax.random.uniform(k, shape, jnp.float32, -bound, bound)

    return {
        "w1": u(ks[0], (64, 1, 20), 1 * 20),    # Conv1d(1, 64, k=20, s=8, p=598)
        "b1": u(ks[1], (64,), 1 * 20),
        "w2": u(ks[2], (64, 64, 5), 64 * 5),    # Conv1d(64, 64, k=5, s=2, p=2)
        "b2": u(ks[3], (64,), 64 * 5),
        "w3": u(ks[4], (32, 1024), 1024),       # Linear(64*16, 32)
        "b3": u(ks[5], (32,), 1024),
        "w4": u(ks[6], (10, 32), 32),           # Linear(32, 10)
        "b4": u(ks[7], (10,), 32),
    }


def _reference_forward(x, params):
    """Plain-XLA reference of the PyTorch forward (eval mode), f32-accurate."""
    hp = jax.lax.Precision.HIGHEST
    B, _, L = x.shape
    xpad = jnp.pad(x[:, 0, :], ((0, 0), (598, 598)))
    Lc1 = (L + 2 * 598 - 20) // 8 + 1
    idx1 = 8 * jnp.arange(Lc1)[:, None] + jnp.arange(20)[None, :]
    cols = xpad[:, idx1]                                                     # (B, Lc1, 20)
    h1 = jnp.einsum("blk,ok->blo", cols, params["w1"][:, 0, :], precision=hp) + params["b1"]
    h1 = jnp.maximum(h1, 0.0)
    Lp1 = Lc1 // 4
    h1 = h1[:, :4 * Lp1].reshape(B, Lp1, 4, 64).max(axis=2)                  # (B, 63, 64)
    hpad = jnp.pad(h1, ((0, 0), (2, 2), (0, 0)))
    Lc2 = (Lp1 + 4 - 5) // 2 + 1
    idx2 = 2 * jnp.arange(Lc2)[:, None] + jnp.arange(5)[None, :]
    win = hpad[:, idx2, :]                                                   # (B, Lc2, 5, 64)
    h2 = jnp.einsum("bmki,oik->bmo", win, params["w2"], precision=hp) + params["b2"]
    h2 = jnp.maximum(h2, 0.0)
    Lp2 = Lc2 // 2
    h2 = h2[:, :2 * Lp2].reshape(B, Lp2, 2, 64).max(axis=2)                  # (B, 16, 64)
    feat = jnp.transpose(h2, (0, 2, 1)).reshape(B, 64 * Lp2)                 # channel-major
    z = jnp.maximum(jnp.dot(feat, params["w3"].T, precision=hp) + params["b3"], 0.0)
    return jnp.dot(z, params["w4"].T, precision=hp) + params["b4"]


if __name__ == "__main__":
    key = jax.random.PRNGKey(0)
    kx, kpkey = jax.random.split(key)
    # L=832 is the (smallest) input length for which the conv/pool stack yields the
    # 64*16 = 1024 features required by the first Linear layer.  B=16 with tb=8 gives
    # 2 grid steps so the 'parallel' batch axis can use both TensorCores on v7x.
    B, L = 16, 832
    x = jax.random.normal(kx, (B, 1, L), dtype=jnp.float32)
    params = init_params(kpkey)
    kparams = prepare_params(params)           # one-time weight re-layout

    fwd = jax.jit(cnn1d_forward, static_argnames=("tb",))
    y = fwd(x, kparams, tb=8)
    jax.block_until_ready(y)
    assert y.shape == (B, 10) and y.dtype == jnp.float32

    # Correctness guard against a plain-XLA reference of the PyTorch forward.
    y_ref = _reference_forward(x, params)
    err = float(jnp.max(jnp.abs(y - y_ref)))
    assert err < 2e-2, f"kernel/reference mismatch: {err}"

    print("KERNEL_OK")
</pallas_src>

<mosaic_0001>
module attributes {stable_mosaic.version = 11 : i64} {
  func.func @_cnn1d_fused_kernel(%arg0: i32, %arg1: memref<1024x20xf32, #tpu.memory_space<vmem>>, %arg2: memref<20x64xf32, #tpu.memory_space<vmem>>, %arg3: memref<1x64xf32, #tpu.memory_space<vmem>>, %arg4: memref<5x64x64xf32, #tpu.memory_space<vmem>>, %arg5: memref<1x64xf32, #tpu.memory_space<vmem>>, %arg6: memref<256x64xf32, #tpu.memory_space<vmem>>, %arg7: memref<16x64x32xf32, #tpu.memory_space<vmem>>, %arg8: memref<1x32xf32, #tpu.memory_space<vmem>>, %arg9: memref<32x10xf32, #tpu.memory_space<vmem>>, %arg10: memref<1x10xf32, #tpu.memory_space<vmem>>, %arg11: memref<8x10xf32, #tpu.memory_space<vmem>>) attributes {dimension_semantics = [#tpu.dimension_semantics<parallel>], iteration_bounds = array<i64: 2>, scalar_prefetch = 0 : i64, scratch_operands = 0 : i64, tpu.core_type = #tpu.core_type<tc>, window_params = [{transform_indices = @transform_0, window_bounds = array<i64: 1024, 20>}, {pipeline_mode = #tpu.pipeline_mode<synchronous>, transform_indices = @transform_1, window_bounds = array<i64: 20, 64>}, {pipeline_mode = #tpu.pipeline_mode<synchronous>, transform_indices = @transform_2, window_bounds = array<i64: 1, 64>}, {pipeline_mode = #tpu.pipeline_mode<synchronous>, transform_indices = @transform_3, window_bounds = array<i64: 5, 64, 64>}, {pipeline_mode = #tpu.pipeline_mode<synchronous>, transform_indices = @transform_4, window_bounds = array<i64: 1, 64>}, {pipeline_mode = #tpu.pipeline_mode<synchronous>, transform_indices = @transform_5, window_bounds = array<i64: 256, 64>}, {pipeline_mode = #tpu.pipeline_mode<synchronous>, transform_indices = @transform_6, window_bounds = array<i64: 16, 64, 32>}, {pipeline_mode = #tpu.pipeline_mode<synchronous>, transform_indices = @transform_7, window_bounds = array<i64: 1, 32>}, {pipeline_mode = #tpu.pipeline_mode<synchronous>, transform_indices = @transform_8, window_bounds = array<i64: 32, 10>}, {pipeline_mode = #tpu.pipeline_mode<synchronous>, transform_indices = @transform_9, window_bounds = array<i64: 1, 10>}, {transform_indices = @transform_10, window_bounds = array<i64: 8, 10>}]} {
    %c0 = arith.constant 0 : index
    %c0_0 = arith.constant 0 : index
    %0 = vector.load %arg1[%c0, %c0_0] : memref<1024x20xf32, #tpu.memory_space<vmem>>, vector<1024x20xf32>
    %c0_1 = arith.constant 0 : index
    %c0_2 = arith.constant 0 : index
    %1 = vector.load %arg2[%c0_1, %c0_2] : memref<20x64xf32, #tpu.memory_space<vmem>>, vector<20x64xf32>
    %cst = arith.constant dense<0.000000e+00> : vector<1024x64xf32>
    %2 = tpu.matmul %0, %1, %cst {dimension_numbers = #tpu.dot_dimension_numbers<[1], [0], [0], [1], [0, 0, 1, 1], [], []>} : vector<1024x20xf32>, vector<20x64xf32>, vector<1024x64xf32> -> vector<1024x64xf32>
    %3 = vector.extract_strided_slice %2 {offsets = [0, 0], sizes = [256, 64], strides = [1, 1]} : vector<1024x64xf32> to vector<256x64xf32>
    %4 = vector.extract_strided_slice %2 {offsets = [256, 0], sizes = [256, 64], strides = [1, 1]} : vector<1024x64xf32> to vector<256x64xf32>
    %5 = arith.maximumf %3, %4 : vector<256x64xf32>
    %6 = vector.extract_strided_slice %2 {offsets = [512, 0], sizes = [256, 64], strides = [1, 1]} : vector<1024x64xf32> to vector<256x64xf32>
    %7 = vector.extract_strided_slice %2 {offsets = [768, 0], sizes = [256, 64], strides = [1, 1]} : vector<1024x64xf32> to vector<256x64xf32>
    %8 = arith.maximumf %6, %7 : vector<256x64xf32>
    %9 = arith.maximumf %5, %8 : vector<256x64xf32>
    %c0_3 = arith.constant 0 : index
    %c0_4 = arith.constant 0 : index
    %10 = vector.load %arg3[%c0_3, %c0_4] : memref<1x64xf32, #tpu.memory_space<vmem>>, vector<1x64xf32>
    %11 = vector.broadcast %10 : vector<1x64xf32> to vector<256x64xf32>
    %12 = arith.addf %9, %11 : vector<256x64xf32>
    %cst_5 = arith.constant 0.000000e+00 : f32
    %13 = vector.broadcast %cst_5 : f32 to vector<256x64xf32>
    %14 = arith.maximumf %12, %13 : vector<256x64xf32>
    %cst_6 = arith.constant 0.000000e+00 : f32
    %15 = vector.broadcast %cst_6 : f32 to vector<40x64xf32>
    %cst_7 = arith.constant 0.000000e+00 : f32
    %16 = vector.broadcast %cst_7 : f32 to vector<32x64xf32>
    %cst_8 = arith.constant 0.000000e+00 : f32
    %17 = vector.broadcast %cst_8 : f32 to vector<24x64xf32>
    %18 = vector.extract_strided_slice %14 {offsets = [0, 0], sizes = [64, 64], strides = [1, 1]} : vector<256x64xf32> to vector<64x64xf32>
    %19 = tpu.concatenate %15, %18, %17 in 0 : vector<40x64xf32>, vector<64x64xf32>, vector<24x64xf32> -> vector<128x64xf32>
    %20 = vector.extract_strided_slice %14 {offsets = [64, 0], sizes = [64, 64], strides = [1, 1]} : vector<256x64xf32> to vector<64x64xf32>
    %21 = tpu.concatenate %15, %20, %17 in 0 : vector<40x64xf32>, vector<64x64xf32>, vector<24x64xf32> -> vector<128x64xf32>
    %22 = vector.extract_strided_slice %14 {offsets = [128, 0], sizes = [64, 64], strides = [1, 1]} : vector<256x64xf32> to vector<64x64xf32>
    %23 = tpu.concatenate %15, %22, %17 in 0 : vector<40x64xf32>, vector<64x64xf32>, vector<24x64xf32> -> vector<128x64xf32>
    %24 = vector.extract_strided_slice %14 {offsets = [192, 0], sizes = [64, 64], strides = [1, 1]} : vector<256x64xf32> to vector<64x64xf32>
    %25 = tpu.concatenate %15, %24, %17 in 0 : vector<40x64xf32>, vector<64x64xf32>, vector<24x64xf32> -> vector<128x64xf32>
    %26 = vector.extract_strided_slice %14 {offsets = [0, 0], sizes = [64, 64], strides = [1, 1]} : vector<256x64xf32> to vector<64x64xf32>
    %27 = tpu.concatenate %16, %26, %16 in 0 : vector<32x64xf32>, vector<64x64xf32>, vector<32x64xf32> -> vector<128x64xf32>
    %28 = vector.extract_strided_slice %14 {offsets = [64, 0], sizes = [64, 64], strides = [1, 1]} : vector<256x64xf32> to vector<64x64xf32>
    %29 = tpu.concatenate %16, %28, %16 in 0 : vector<32x64xf32>, vector<64x64xf32>, vector<32x64xf32> -> vector<128x64xf32>
    %30 = vector.extract_strided_slice %14 {offsets = [128, 0], sizes = [64, 64], strides = [1, 1]} : vector<256x64xf32> to vector<64x64xf32>
    %31 = tpu.concatenate %16, %30, %16 in 0 : vector<32x64xf32>, vector<64x64xf32>, vector<32x64xf32> -> vector<128x64xf32>
    %32 = tpu.concatenate %19, %23 in 0 : vector<128x64xf32>, vector<128x64xf32> -> vector<256x64xf32>
    %c0_9 = arith.constant 0 : index
    %c0_10 = arith.constant 0 : index
    %c0_11 = arith.constant 0 : index
    %33 = vector.load %arg4[%c0_9, %c0_10, %c0_11] : memref<5x64x64xf32, #tpu.memory_space<vmem>>, vector<1x64x64xf32>
    %34 = vector.shape_cast %33 : vector<1x64x64xf32> to vector<64x64xf32>
    %cst_12 = arith.constant dense<0.000000e+00> : vector<256x64xf32>
    %35 = tpu.matmul %32, %34, %cst_12 {dimension_numbers = #tpu.dot_dimension_numbers<[1], [0], [0], [1], [0, 0, 1, 1], [], []>} : vector<256x64xf32>, vector<64x64xf32>, vector<256x64xf32> -> vector<256x64xf32>
    %36 = tpu.concatenate %21, %25 in 0 : vector<128x64xf32>, vector<128x64xf32> -> vector<256x64xf32>
    %c1 = arith.constant 1 : index
    %c0_13 = arith.constant 0 : index
    %c0_14 = arith.constant 0 : index
    %37 = vector.load %arg4[%c1, %c0_13, %c0_14] : memref<5x64x64xf32, #tpu.memory_space<vmem>>, vector<1x64x64xf32>
    %38 = vector.shape_cast %37 : vector<1x64x64xf32> to vector<64x64xf32>
    %cst_15 = arith.constant dense<0.000000e+00> : vector<256x64xf32>
    %39 = tpu.matmul %36, %38, %cst_15 {dimension_numbers = #tpu.dot_dimension_numbers<[1], [0], [0], [1], [0, 0, 1, 1], [], []>} : vector<256x64xf32>, vector<64x64xf32>, vector<256x64xf32> -> vector<256x64xf32>
    %40 = arith.addf %35, %39 : vector<256x64xf32>
    %41 = tpu.concatenate %23, %27 in 0 : vector<128x64xf32>, vector<128x64xf32> -> vector<256x64xf32>
    %c2 = arith.constant 2 : index
    %c0_16 = arith.constant 0 : index
    %c0_17 = arith.constant 0 : index
    %42 = vector.load %arg4[%c2, %c0_16, %c0_17] : memref<5x64x64xf32, #tpu.memory_space<vmem>>, vector<1x64x64xf32>
    %43 = vector.shape_cast %42 : vector<1x64x64xf32> to vector<64x64xf32>
    %cst_18 = arith.constant dense<0.000000e+00> : vector<256x64xf32>
    %44 = tpu.matmul %41, %43, %cst_18 {dimension_numbers = #tpu.dot_dimension_numbers<[1], [0], [0], [1], [0, 0, 1, 1], [], []>} : vector<256x64xf32>, vector<64x64xf32>, vector<256x64xf32> -> vector<256x64xf32>
    %45 = arith.addf %40, %44 : vector<256x64xf32>
    %46 = tpu.concatenate %25, %29 in 0 : vector<128x64xf32>, vector<128x64xf32> -> vector<256x64xf32>
    %c3 = arith.constant 3 : index
    %c0_19 = arith.constant 0 : index
    %c0_20 = arith.constant 0 : index
    %47 = vector.load %arg4[%c3, %c0_19, %c0_20] : memref<5x64x64xf32, #tpu.memory_space<vmem>>, vector<1x64x64xf32>
    %48 = vector.shape_cast %47 : vector<1x64x64xf32> to vector<64x64xf32>
    %cst_21 = arith.constant dense<0.000000e+00> : vector<256x64xf32>
    %49 = tpu.matmul %46, %48, %cst_21 {dimension_numbers = #tpu.dot_dimension_numbers<[1], [0], [0], [1], [0, 0, 1, 1], [], []>} : vector<256x64xf32>, vector<64x64xf32>, vector<256x64xf32> -> vector<256x64xf32>
    %50 = arith.addf %45, %49 : vector<256x64xf32>
    %51 = tpu.concatenate %27, %31 in 0 : vector<128x64xf32>, vector<128x64xf32> -> vector<256x64xf32>
    %c4 = arith.constant 4 : index
    %c0_22 = arith.constant 0 : index
    %c0_23 = arith.constant 0 : index
    %52 = vector.load %arg4[%c4, %c0_22, %c0_23] : memref<5x64x64xf32, #tpu.memory_space<vmem>>, vector<1x64x64xf32>
    %53 = vector.shape_cast %52 : vector<1x64x64xf32> to vector<64x64xf32>
    %cst_24 = arith.constant dense<0.000000e+00> : vector<256x64xf32>
    %54 = tpu.matmul %51, %53, %cst_24 {dimension_numbers = #tpu.dot_dimension_numbers<[1], [0], [0], [1], [0, 0, 1, 1], [], []>} : vector<256x64xf32>, vector<64x64xf32>, vector<256x64xf32> -> vector<256x64xf32>
    %55 = arith.addf %50, %54 : vector<256x64xf32>
    %c0_25 = arith.constant 0 : index
    %c0_26 = arith.constant 0 : index
    %56 = vector.load %arg6[%c0_25, %c0_26] : memref<256x64xf32, #tpu.memory_space<vmem>>, vector<256x64xf32>
    %57 = arith.addf %55, %56 : vector<256x64xf32>
    %58 = vector.extract_strided_slice %57 {offsets = [0, 0], sizes = [128, 64], strides = [1, 1]} : vector<256x64xf32> to vector<128x64xf32>
    %59 = vector.extract_strided_slice %57 {offsets = [128, 0], sizes = [128, 64], strides = [1, 1]} : vector<256x64xf32> to vector<128x64xf32>
    %60 = arith.maximumf %58, %59 : vector<128x64xf32>
    %c0_27 = arith.constant 0 : index
    %c0_28 = arith.constant 0 : index
    %61 = vector.load %arg5[%c0_27, %c0_28] : memref<1x64xf32, #tpu.memory_space<vmem>>, vector<1x64xf32>
    %62 = vector.broadcast %61 : vector<1x64xf32> to vector<128x64xf32>
    %63 = arith.addf %60, %62 : vector<128x64xf32>
    %cst_29 = arith.constant 0.000000e+00 : f32
    %64 = vector.broadcast %cst_29 : f32 to vector<128x64xf32>
    %65 = arith.maximumf %63, %64 : vector<128x64xf32>
    %66 = vector.extract_strided_slice %65 {offsets = [0, 0], sizes = [8, 64], strides = [1, 1]} : vector<128x64xf32> to vector<8x64xf32>
    %c0_30 = arith.constant 0 : index
    %c0_31 = arith.constant 0 : index
    %c0_32 = arith.constant 0 : index
    %67 = vector.load %arg7[%c0_30, %c0_31, %c0_32] : memref<16x64x32xf32, #tpu.memory_space<vmem>>, vector<1x64x32xf32>
    %68 = vector.shape_cast %67 : vector<1x64x32xf32> to vector<64x32xf32>
    %cst_33 = arith.constant dense<0.000000e+00> : vector<8x32xf32>
    %69 = tpu.matmul %66, %68, %cst_33 {dimension_numbers = #tpu.dot_dimension_numbers<[1], [0], [0], [1], [0, 0, 1, 1], [], []>} : vector<8x64xf32>, vector<64x32xf32>, vector<8x32xf32> -> vector<8x32xf32>
    %70 = vector.extract_strided_slice %65 {offsets = [8, 0], sizes = [8, 64], strides = [1, 1]} : vector<128x64xf32> to vector<8x64xf32>
    %c1_34 = arith.constant 1 : index
    %c0_35 = arith.constant 0 : index
    %c0_36 = arith.constant 0 : index
    %71 = vector.load %arg7[%c1_34, %c0_35, %c0_36] : memref<16x64x32xf32, #tpu.memory_space<vmem>>, vector<1x64x32xf32>
    %72 = vector.shape_cast %71 : vector<1x64x32xf32> to vector<64x32xf32>
    %cst_37 = arith.constant dense<0.000000e+00> : vector<8x32xf32>
    %73 = tpu.matmul %70, %72, %cst_37 {dimension_numbers = #tpu.dot_dimension_numbers<[1], [0], [0], [1], [0, 0, 1, 1], [], []>} : vector<8x64xf32>, vector<64x32xf32>, vector<8x32xf32> -> vector<8x32xf32>
    %74 = arith.addf %69, %73 : vector<8x32xf32>
    %75 = vector.extract_strided_slice %65 {offsets = [16, 0], sizes = [8, 64], strides = [1, 1]} : vector<128x64xf32> to vector<8x64xf32>
    %c2_38 = arith.constant 2 : index
    %c0_39 = arith.constant 0 : index
    %c0_40 = arith.constant 0 : index
    %76 = vector.load %arg7[%c2_38, %c0_39, %c0_40] : memref<16x64x32xf32, #tpu.memory_space<vmem>>, vector<1x64x32xf32>
    %77 = vector.shape_cast %76 : vector<1x64x32xf32> to vector<64x32xf32>
    %cst_41 = arith.constant dense<0.000000e+00> : vector<8x32xf32>
    %78 = tpu.matmul %75, %77, %cst_41 {dimension_numbers = #tpu.dot_dimension_numbers<[1], [0], [0], [1], [0, 0, 1, 1], [], []>} : vector<8x64xf32>, vector<64x32xf32>, vector<8x32xf32> -> vector<8x32xf32>
    %79 = arith.addf %74, %78 : vector<8x32xf32>
    %80 = vector.extract_strided_slice %65 {offsets = [24, 0], sizes = [8, 64], strides = [1, 1]} : vector<128x64xf32> to vector<8x64xf32>
    %c3_42 = arith.constant 3 : index
    %c0_43 = arith.constant 0 : index
    %c0_44 = arith.constant 0 : index
    %81 = vector.load %arg7[%c3_42, %c0_43, %c0_44] : memref<16x64x32xf32, #tpu.memory_space<vmem>>, vector<1x64x32xf32>
    %82 = vector.shape_cast %81 : vector<1x64x32xf32> to vector<64x32xf32>
    %cst_45 = arith.constant dense<0.000000e+00> : vector<8x32xf32>
    %83 = tpu.matmul %80, %82, %cst_45 {dimension_numbers = #tpu.dot_dimension_numbers<[1], [0], [0], [1], [0, 0, 1, 1], [], []>} : vector<8x64xf32>, vector<64x32xf32>, vector<8x32xf32> -> vector<8x32xf32>
    %84 = arith.addf %79, %83 : vector<8x32xf32>
    %85 = vector.extract_strided_slice %65 {offsets = [32, 0], sizes = [8, 64], strides = [1, 1]} : vector<128x64xf32> to vector<8x64xf32>
    %c4_46 = arith.constant 4 : index
    %c0_47 = arith.constant 0 : index
    %c0_48 = arith.constant 0 : index
    %86 = vector.load %arg7[%c4_46, %c0_47, %c0_48] : memref<16x64x32xf32, #tpu.memory_space<vmem>>, vector<1x64x32xf32>
    %87 = vector.shape_cast %86 : vector<1x64x32xf32> to vector<64x32xf32>
    %cst_49 = arith.constant dense<0.000000e+00> : vector<8x32xf32>
    %88 = tpu.matmul %85, %87, %cst_49 {dimension_numbers = #tpu.dot_dimension_numbers<[1], [0], [0], [1], [0, 0, 1, 1], [], []>} : vector<8x64xf32>, vector<64x32xf32>, vector<8x32xf32> -> vector<8x32xf32>
    %89 = arith.addf %84, %88 : vector<8x32xf32>
    %90 = vector.extract_strided_slice %65 {offsets = [40, 0], sizes = [8, 64], strides = [1, 1]} : vector<128x64xf32> to vector<8x64xf32>
    %c5 = arith.constant 5 : index
    %c0_50 = arith.constant 0 : index
    %c0_51 = arith.constant 0 : index
    %91 = vector.load %arg7[%c5, %c0_50, %c0_51] : memref<16x64x32xf32, #tpu.memory_space<vmem>>, vector<1x64x32xf32>
    %92 = vector.shape_cast %91 : vector<1x64x32xf32> to vector<64x32xf32>
    %cst_52 = arith.constant dense<0.000000e+00> : vector<8x32xf32>
    %93 = tpu.matmul %90, %92, %cst_52 {dimension_numbers = #tpu.dot_dimension_numbers<[1], [0], [0], [1], [0, 0, 1, 1], [], []>} : vector<8x64xf32>, vector<64x32xf32>, vector<8x32xf32> -> vector<8x32xf32>
    %94 = arith.addf %89, %93 : vector<8x32xf32>
    %95 = vector.extract_strided_slice %65 {offsets = [48, 0], sizes = [8, 64], strides = [1, 1]} : vector<128x64xf32> to vector<8x64xf32>
    %c6 = arith.constant 6 : index
    %c0_53 = arith.constant 0 : index
    %c0_54 = arith.constant 0 : index
    %96 = vector.load %arg7[%c6, %c0_53, %c0_54] : memref<16x64x32xf32, #tpu.memory_space<vmem>>, vector<1x64x32xf32>
    %97 = vector.shape_cast %96 : vector<1x64x32xf32> to vector<64x32xf32>
    %cst_55 = arith.constant dense<0.000000e+00> : vector<8x32xf32>
    %98 = tpu.matmul %95, %97, %cst_55 {dimension_numbers = #tpu.dot_dimension_numbers<[1], [0], [0], [1], [0, 0, 1, 1], [], []>} : vector<8x64xf32>, vector<64x32xf32>, vector<8x32xf32> -> vector<8x32xf32>
    %99 = arith.addf %94, %98 : vector<8x32xf32>
    %100 = vector.extract_strided_slice %65 {offsets = [56, 0], sizes = [8, 64], strides = [1, 1]} : vector<128x64xf32> to vector<8x64xf32>
    %c7 = arith.constant 7 : index
    %c0_56 = arith.constant 0 : index
    %c0_57 = arith.constant 0 : index
    %101 = vector.load %arg7[%c7, %c0_56, %c0_57] : memref<16x64x32xf32, #tpu.memory_space<vmem>>, vector<1x64x32xf32>
    %102 = vector.shape_cast %101 : vector<1x64x32xf32> to vector<64x32xf32>
    %cst_58 = arith.constant dense<0.000000e+00> : vector<8x32xf32>
    %103 = tpu.matmul %100, %102, %cst_58 {dimension_numbers = #tpu.dot_dimension_numbers<[1], [0], [0], [1], [0, 0, 1, 1], [], []>} : vector<8x64xf32>, vector<64x32xf32>, vector<8x32xf32> -> vector<8x32xf32>
    %104 = arith.addf %99, %103 : vector<8x32xf32>
    %105 = vector.extract_strided_slice %65 {offsets = [64, 0], sizes = [8, 64], strides = [1, 1]} : vector<128x64xf32> to vector<8x64xf32>
    %c8 = arith.constant 8 : index
    %c0_59 = arith.constant 0 : index
    %c0_60 = arith.constant 0 : index
    %106 = vector.load %arg7[%c8, %c0_59, %c0_60] : memref<16x64x32xf32, #tpu.memory_space<vmem>>, vector<1x64x32xf32>
    %107 = vector.shape_cast %106 : vector<1x64x32xf32> to vector<64x32xf32>
    %cst_61 = arith.constant dense<0.000000e+00> : vector<8x32xf32>
    %108 = tpu.matmul %105, %107, %cst_61 {dimension_numbers = #tpu.dot_dimension_numbers<[1], [0], [0], [1], [0, 0, 1, 1], [], []>} : vector<8x64xf32>, vector<64x32xf32>, vector<8x32xf32> -> vector<8x32xf32>
    %109 = arith.addf %104, %108 : vector<8x32xf32>
    %110 = vector.extract_strided_slice %65 {offsets = [72, 0], sizes = [8, 64], strides = [1, 1]} : vector<128x64xf32> to vector<8x64xf32>
    %c9 = arith.constant 9 : index
    %c0_62 = arith.constant 0 : index
    %c0_63 = arith.constant 0 : index
    %111 = vector.load %arg7[%c9, %c0_62, %c0_63] : memref<16x64x32xf32, #tpu.memory_space<vmem>>, vector<1x64x32xf32>
    %112 = vector.shape_cast %111 : vector<1x64x32xf32> to vector<64x32xf32>
    %cst_64 = arith.constant dense<0.000000e+00> : vector<8x32xf32>
    %113 = tpu.matmul %110, %112, %cst_64 {dimension_numbers = #tpu.dot_dimension_numbers<[1], [0], [0], [1], [0, 0, 1, 1], [], []>} : vector<8x64xf32>, vector<64x32xf32>, vector<8x32xf32> -> vector<8x32xf32>
    %114 = arith.addf %109, %113 : vector<8x32xf32>
    %115 = vector.extract_strided_slice %65 {offsets = [80, 0], sizes = [8, 64], strides = [1, 1]} : vector<128x64xf32> to vector<8x64xf32>
    %c10 = arith.constant 10 : index
    %c0_65 = arith.constant 0 : index
    %c0_66 = arith.constant 0 : index
    %116 = vector.load %arg7[%c10, %c0_65, %c0_66] : memref<16x64x32xf32, #tpu.memory_space<vmem>>, vector<1x64x32xf32>
    %117 = vector.shape_cast %116 : vector<1x64x32xf32> to vector<64x32xf32>
    %cst_67 = arith.constant dense<0.000000e+00> : vector<8x32xf32>
    %118 = tpu.matmul %115, %117, %cst_67 {dimension_numbers = #tpu.dot_dimension_numbers<[1], [0], [0], [1], [0, 0, 1, 1], [], []>} : vector<8x64xf32>, vector<64x32xf32>, vector<8x32xf32> -> vector<8x32xf32>
    %119 = arith.addf %114, %118 : vector<8x32xf32>
    %120 = vector.extract_strided_slice %65 {offsets = [88, 0], sizes = [8, 64], strides = [1, 1]} : vector<128x64xf32> to vector<8x64xf32>
    %c11 = arith.constant 11 : index
    %c0_68 = arith.constant 0 : index
    %c0_69 = arith.constant 0 : index
    %121 = vector.load %arg7[%c11, %c0_68, %c0_69] : memref<16x64x32xf32, #tpu.memory_space<vmem>>, vector<1x64x32xf32>
    %122 = vector.shape_cast %121 : vector<1x64x32xf32> to vector<64x32xf32>
    %cst_70 = arith.constant dense<0.000000e+00> : vector<8x32xf32>
    %123 = tpu.matmul %120, %122, %cst_70 {dimension_numbers = #tpu.dot_dimension_numbers<[1], [0], [0], [1], [0, 0, 1, 1], [], []>} : vector<8x64xf32>, vector<64x32xf32>, vector<8x32xf32> -> vector<8x32xf32>
    %124 = arith.addf %119, %123 : vector<8x32xf32>
    %125 = vector.extract_strided_slice %65 {offsets = [96, 0], sizes = [8, 64], strides = [1, 1]} : vector<128x64xf32> to vector<8x64xf32>
    %c12 = arith.constant 12 : index
    %c0_71 = arith.constant 0 : index
    %c0_72 = arith.constant 0 : index
    %126 = vector.load %arg7[%c12, %c0_71, %c0_72] : memref<16x64x32xf32, #tpu.memory_space<vmem>>, vector<1x64x32xf32>
    %127 = vector.shape_cast %126 : vector<1x64x32xf32> to vector<64x32xf32>
    %cst_73 = arith.constant dense<0.000000e+00> : vector<8x32xf32>
    %128 = tpu.matmul %125, %127, %cst_73 {dimension_numbers = #tpu.dot_dimension_numbers<[1], [0], [0], [1], [0, 0, 1, 1], [], []>} : vector<8x64xf32>, vector<64x32xf32>, vector<8x32xf32> -> vector<8x32xf32>
    %129 = arith.addf %124, %128 : vector<8x32xf32>
    %130 = vector.extract_strided_slice %65 {offsets = [104, 0], sizes = [8, 64], strides = [1, 1]} : vector<128x64xf32> to vector<8x64xf32>
    %c13 = arith.constant 13 : index
    %c0_74 = arith.constant 0 : index
    %c0_75 = arith.constant 0 : index
    %131 = vector.load %arg7[%c13, %c0_74, %c0_75] : memref<16x64x32xf32, #tpu.memory_space<vmem>>, vector<1x64x32xf32>
    %132 = vector.shape_cast %131 : vector<1x64x32xf32> to vector<64x32xf32>
    %cst_76 = arith.constant dense<0.000000e+00> : vector<8x32xf32>
    %133 = tpu.matmul %130, %132, %cst_76 {dimension_numbers = #tpu.dot_dimension_numbers<[1], [0], [0], [1], [0, 0, 1, 1], [], []>} : vector<8x64xf32>, vector<64x32xf32>, vector<8x32xf32> -> vector<8x32xf32>
    %134 = arith.addf %129, %133 : vector<8x32xf32>
    %135 = vector.extract_strided_slice %65 {offsets = [112, 0], sizes = [8, 64], strides = [1, 1]} : vector<128x64xf32> to vector<8x64xf32>
    %c14 = arith.constant 14 : index
    %c0_77 = arith.constant 0 : index
    %c0_78 = arith.constant 0 : index
    %136 = vector.load %arg7[%c14, %c0_77, %c0_78] : memref<16x64x32xf32, #tpu.memory_space<vmem>>, vector<1x64x32xf32>
    %137 = vector.shape_cast %136 : vector<1x64x32xf32> to vector<64x32xf32>
    %cst_79 = arith.constant dense<0.000000e+00> : vector<8x32xf32>
    %138 = tpu.matmul %135, %137, %cst_79 {dimension_numbers = #tpu.dot_dimension_numbers<[1], [0], [0], [1], [0, 0, 1, 1], [], []>} : vector<8x64xf32>, vector<64x32xf32>, vector<8x32xf32> -> vector<8x32xf32>
    %139 = arith.addf %134, %138 : vector<8x32xf32>
    %140 = vector.extract_strided_slice %65 {offsets = [120, 0], sizes = [8, 64], strides = [1, 1]} : vector<128x64xf32> to vector<8x64xf32>
    %c15 = arith.constant 15 : index
    %c0_80 = arith.constant 0 : index
    %c0_81 = arith.constant 0 : index
    %141 = vector.load %arg7[%c15, %c0_80, %c0_81] : memref<16x64x32xf32, #tpu.memory_space<vmem>>, vector<1x64x32xf32>
    %142 = vector.shape_cast %141 : vector<1x64x32xf32> to vector<64x32xf32>
    %cst_82 = arith.constant dense<0.000000e+00> : vector<8x32xf32>
    %143 = tpu.matmul %140, %142, %cst_82 {dimension_numbers = #tpu.dot_dimension_numbers<[1], [0], [0], [1], [0, 0, 1, 1], [], []>} : vector<8x64xf32>, vector<64x32xf32>, vector<8x32xf32> -> vector<8x32xf32>
    %144 = arith.addf %139, %143 : vector<8x32xf32>
    %c0_83 = arith.constant 0 : index
    %c0_84 = arith.constant 0 : index
    %145 = vector.load %arg8[%c0_83, %c0_84] : memref<1x32xf32, #tpu.memory_space<vmem>>, vector<1x32xf32>
    %146 = vector.broadcast %145 : vector<1x32xf32> to vector<8x32xf32>
    %147 = arith.addf %144, %146 : vector<8x32xf32>
    %cst_85 = arith.constant 0.000000e+00 : f32
    %148 = vector.broadcast %cst_85 : f32 to vector<8x32xf32>
    %149 = arith.maximumf %147, %148 : vector<8x32xf32>
    %c0_86 = arith.constant 0 : index
    %c0_87 = arith.constant 0 : index
    %150 = vector.load %arg9[%c0_86, %c0_87] : memref<32x10xf32, #tpu.memory_space<vmem>>, vector<32x10xf32>
    %cst_88 = arith.constant dense<0.000000e+00> : vector<8x10xf32>
    %151 = tpu.matmul %149, %150, %cst_88 {dimension_numbers = #tpu.dot_dimension_numbers<[1], [0], [0], [1], [0, 0, 1, 1], [], []>} : vector<8x32xf32>, vector<32x10xf32>, vector<8x10xf32> -> vector<8x10xf32>
    %c0_89 = arith.constant 0 : index
    %c0_90 = arith.constant 0 : index
    %152 = vector.load %arg10[%c0_89, %c0_90] : memref<1x10xf32, #tpu.memory_space<vmem>>, vector<1x10xf32>
    %153 = vector.broadcast %152 : vector<1x10xf32> to vector<8x10xf32>
    %154 = arith.addf %151, %153 : vector<8x10xf32>
    %c0_91 = arith.constant 0 : index
    %c0_92 = arith.constant 0 : index
    %155 = vector.load %arg11[%c0_91, %c0_92] : memref<8x10xf32, #tpu.memory_space<vmem>>, vector<8x10xf32>
    tpu.vector_store %arg11[%c0_91, %c0_92], %154 {strides = array<i32>} : memref<8x10xf32, #tpu.memory_space<vmem>>, vector<8x10xf32>,
    return
  }
  func.func @transform_0(%arg0: i32) -> (i32, i32) {
    %c0_i32 = arith.constant 0 : i32
    %c0_i32_0 = arith.constant 0 : i32
    return %arg0, %c0_i32 : i32, i32
  }
  func.func @transform_1(%arg0: i32) -> (i32, i32) {
    %c0_i32 = arith.constant 0 : i32
    %c0_i32_0 = arith.constant 0 : i32
    %c0_i32_1 = arith.constant 0 : i32
    return %c0_i32, %c0_i32_0 : i32, i32
  }
  func.func @transform_2(%arg0: i32) -> (i32, i32) {
    %c0_i32 = arith.constant 0 : i32
    %c0_i32_0 = arith.constant 0 : i32
    %c0_i32_1 = arith.constant 0 : i32
    return %c0_i32, %c0_i32_0 : i32, i32
  }
  func.func @transform_3(%arg0: i32) -> (i32, i32, i32) {
    %c0_i32 = arith.constant 0 : i32
    %c0_i32_0 = arith.constant 0 : i32
    %c0_i32_1 = arith.constant 0 : i32
    %c0_i32_2 = arith.constant 0 : i32
    return %c0_i32, %c0_i32_0, %c0_i32_1 : i32, i32, i32
  }
  func.func @transform_4(%arg0: i32) -> (i32, i32) {
    %c0_i32 = arith.constant 0 : i32
    %c0_i32_0 = arith.constant 0 : i32
    %c0_i32_1 = arith.constant 0 : i32
    return %c0_i32, %c0_i32_0 : i32, i32
  }
  func.func @transform_5(%arg0: i32) -> (i32, i32) {
    %c0_i32 = arith.constant 0 : i32
    %c0_i32_0 = arith.constant 0 : i32
    %c0_i32_1 = arith.constant 0 : i32
    return %c0_i32, %c0_i32_0 : i32, i32
  }
  func.func @transform_6(%arg0: i32) -> (i32, i32, i32) {
    %c0_i32 = arith.constant 0 : i32
    %c0_i32_0 = arith.constant 0 : i32
    %c0_i32_1 = arith.constant 0 : i32
    %c0_i32_2 = arith.constant 0 : i32
    return %c0_i32, %c0_i32_0, %c0_i32_1 : i32, i32, i32
  }
  func.func @transform_7(%arg0: i32) -> (i32, i32) {
    %c0_i32 = arith.constant 0 : i32
    %c0_i32_0 = arith.constant 0 : i32
    %c0_i32_1 = arith.constant 0 : i32
    return %c0_i32, %c0_i32_0 : i32, i32
  }
  func.func @transform_8(%arg0: i32) -> (i32, i32) {
    %c0_i32 = arith.constant 0 : i32
    %c0_i32_0 = arith.constant 0 : i32
    %c0_i32_1 = arith.constant 0 : i32
    return %c0_i32, %c0_i32_0 : i32, i32
  }
  func.func @transform_9(%arg0: i32) -> (i32, i32) {
    %c0_i32 = arith.constant 0 : i32
    %c0_i32_0 = arith.constant 0 : i32
    %c0_i32_1 = arith.constant 0 : i32
    return %c0_i32, %c0_i32_0 : i32, i32
  }
  func.func @transform_10(%arg0: i32) -> (i32, i32) {
    %c0_i32 = arith.constant 0 : i32
    %c0_i32_0 = arith.constant 0 : i32
    return %arg0, %c0_i32 : i32, i32
  }
}

</mosaic_0001>

<llo_original>
// kernel: cnn1d_forward.1
$region0: #{cnn1d_forward.1}
  #allocation0 [shape = 'u32[]', space=smem, size = 0x4, offset = 0x4, fixed_abs, tag = 'smem constant byte address 0x4 - core index']
  #allocation1 [shape = 'u32[144,128]{1,0:T(1,128)}', space=vmem, size = 0x12000, scoped, tag = 'internal scratch']
  %s0 = inlined_call_operand.vmem [shape: f32[2048,20], index: 0, kind: input, shape index: {}]
  %s1 = inlined_call_operand.vmem [shape: f32[20,64], index: 1, kind: input, shape index: {}]
  %s2 = inlined_call_operand.vmem [shape: f32[1,64], index: 2, kind: input, shape index: {}]
  %s3 = inlined_call_operand.vmem [shape: f32[5,64,64], index: 3, kind: input, shape index: {}]
  %s4 = inlined_call_operand.vmem [shape: f32[1,64], index: 4, kind: input, shape index: {}]
  %s5 = inlined_call_operand.vmem [shape: f32[256,64], index: 5, kind: input, shape index: {}]
  %s6 = inlined_call_operand.vmem [shape: f32[16,64,32], index: 6, kind: input, shape index: {}]
  %s7 = inlined_call_operand.vmem [shape: f32[1,32], index: 7, kind: input, shape index: {}]
  %s8 = inlined_call_operand.vmem [shape: f32[32,10], index: 8, kind: input, shape index: {}]
  %s9 = inlined_call_operand.vmem [shape: f32[1,10], index: 9, kind: input, shape index: {}]
  %s10 = inlined_call_operand.hbm [shape: f32[16,10], index: 10, kind: output, shape index: {}]
  %s11 = sld [smem:[#allocation0]]
  $region73: #{cnn1d_forward.1} parent=0
    _
  %s13 = ssub.s32 1, %s11
  %s14 = scalar_select 0, %s13, %s11
  $region1: #{cnn1d_forward.1} parent=0
    #allocation2 [shape = 'u8[8192]{0}', space=vmem, size = 0x2000, scoped, tag = 'output window, operand 0']
    #allocation3 [shape = 's32[2]{0}', space=sflag, size = 0x8, scoped, tag = 'scoped memory for cnn1d_forward.1']
    %15 = vsyncpa [#allocation3], 0
    %s16 = scalar_lea.sflag [#allocation3], 1
    %17 = vsyncpa %s16, 0
    loop: start=0, step=1, limit=4
    $region2: #{cnn1d_forward.1} parent=1 // loop_pre_header
      _
    $region3: #{cnn1d_forward.1} parent=1 // loop_header
      %s19 = sphi 0, %s23
      %p20 = scmp.ge.s32.totalorder %s19, 4
      %s29 = sphi 0, %s31
      %s32 = sphi 0, %s29
      %s33 = sphi 0, %s32
      %s49 = sphi 0, %s33
      %s53 = sphi 0, %s53
      %s55 = sphi 0, %s53
      %s56 = sphi 0, %s55
      %s70 = sphi 0, %s56
      %s74 = sphi 0, %s74
      %s76 = sphi 0, %s74
      %s77 = sphi 0, %s76
      %s91 = sphi 0, %s77
      %s95 = sphi 0, %s95
      %s97 = sphi 0, %s95
      %s98 = sphi 0, %s97
      %s112 = sphi 0, %s98
      %s116 = sphi 0, %s116
      %s118 = sphi 0, %s116
      %s119 = sphi 0, %s118
      %s133 = sphi 0, %s119
      %s137 = sphi 0, %s137
      %s139 = sphi 0, %s137
      %s140 = sphi 0, %s139
      %s154 = sphi 0, %s140
      %s158 = sphi 0, %s158
      %s160 = sphi 0, %s158
      %s161 = sphi 0, %s160
      %s175 = sphi 0, %s161
      %s179 = sphi 0, %s179
      %s181 = sphi 0, %s179
      %s182 = sphi 0, %s181
      %s196 = sphi 0, %s182
      %s200 = sphi 0, %s200
      %s202 = sphi 0, %s200
      %s203 = sphi 0, %s202
      %s217 = sphi 0, %s203
      %s221 = sphi 0, %s221
      %s223 = sphi 0, %s221
      %s224 = sphi 0, %s223
      %s238 = sphi 0, %s224
      %s244 = sphi 0, %s246
      %s247 = sphi 0, %s244
      %s248 = sphi 0, %s247
      %s264 = sphi 0, %s248
    $region4: #{cnn1d_forward.1} parent=1 // loop_header_branch
      %22 = sbr.rel (%p20) target = $region8
    $region5: #{cnn1d_forward.1} parent=1 // loop_body
      %s24 = ssub.s32 %s19, 1
      %s25 = ssub.s32 %s19, 2
      %s26 = sadd.s32 %s19, 1
      %s27 = ssub.s32 %s19, %s26
      %p28 = scmp.eq.s32.totalorder %s27, 0
      %s30 = sadd.s32 %s29, 1
      %s31 = scalar_select %p28, %s29, %s30
      %p34 = pneg %p28
      %p35 = scmp.eq.s32.totalorder %s19, 1
      %p36 = por %p34, %p35
      %p37 = scmp.ne.s32.totalorder %s29, %s32
      %p38 = scmp.eq.s32.totalorder %s19, 0
      %p39 = por %p37, %p38
      %p40 = scmp.ne.s32.totalorder %s29, %s32
      %p41 = scmp.eq.s32.totalorder %s24, 1
      %p42 = por %p40, %p41
      %p43 = scmp.ne.s32.totalorder %s32, %s33
      %p44 = scmp.eq.s32.totalorder %s24, 0
      %p45 = por %p43, %p44
      %p46 = scmp.ne.s32.totalorder %s32, %s33
      %p47 = scmp.eq.s32.totalorder %s25, 1
      %p48 = por %p46, %p47
      %p50 = scmp.ne.s32.totalorder %s33, %s49
      %p51 = scmp.eq.s32.totalorder %s25, 0
      %p52 = por %p50, %p51
      %s54 = sadd.s32 %s53, 1
      %p57 = scmp.eq.s32.totalorder %s19, 1
      %p58 = scmp.ne.s32.totalorder %s53, %s55
      %p59 = scmp.eq.s32.totalorder %s19, 0
      %p60 = por %p58, %p59
      %p61 = scmp.ne.s32.totalorder %s53, %s55
      %p62 = scmp.eq.s32.totalorder %s24, 1
      %p63 = por %p61, %p62
      %p64 = scmp.ne.s32.totalorder %s55, %s56
      %p65 = scmp.eq.s32.totalorder %s24, 0
      %p66 = por %p64, %p65
      %p67 = scmp.ne.s32.totalorder %s55, %s56
      %p68 = scmp.eq.s32.totalorder %s25, 1
      %p69 = por %p67, %p68
      %p71 = scmp.ne.s32.totalorder %s56, %s70
      %p72 = scmp.eq.s32.totalorder %s25, 0
      %p73 = por %p71, %p72
      %s75 = sadd.s32 %s74, 1
      %p78 = scmp.eq.s32.totalorder %s19, 1
      %p79 = scmp.ne.s32.totalorder %s74, %s76
      %p80 = scmp.eq.s32.totalorder %s19, 0
      %p81 = por %p79, %p80
      %p82 = scmp.ne.s32.totalorder %s74, %s76
      %p83 = scmp.eq.s32.totalorder %s24, 1
      %p84 = por %p82, %p83
      %p85 = scmp.ne.s32.totalorder %s76, %s77
      %p86 = scmp.eq.s32.totalorder %s24, 0
      %p87 = por %p85, %p86
      %p88 = scmp.ne.s32.totalorder %s76, %s77
      %p89 = scmp.eq.s32.totalorder %s25, 1
      %p90 = por %p88, %p89
      %p92 = scmp.ne.s32.totalorder %s77, %s91
      %p93 = scmp.eq.s32.totalorder %s25, 0
      %p94 = por %p92, %p93
      %s96 = sadd.s32 %s95, 1
      %p99 = scmp.eq.s32.totalorder %s19, 1
      %p100 = scmp.ne.s32.totalorder %s95, %s97
      %p101 = scmp.eq.s32.totalorder %s19, 0
      %p102 = por %p100, %p101
      %p103 = scmp.ne.s32.totalorder %s95, %s97
      %p104 = scmp.eq.s32.totalorder %s24, 1
      %p105 = por %p103, %p104
      %p106 = scmp.ne.s32.totalorder %s97, %s98
      %p107 = scmp.eq.s32.totalorder %s24, 0
      %p108 = por %p106, %p107
      %p109 = scmp.ne.s32.totalorder %s97, %s98
      %p110 = scmp.eq.s32.totalorder %s25, 1
      %p111 = por %p109, %p110
      %p113 = scmp.ne.s32.totalorder %s98, %s112
      %p114 = scmp.eq.s32.totalorder %s25, 0
      %p115 = por %p113, %p114
      %s117 = sadd.s32 %s116, 1
      %p120 = scmp.eq.s32.totalorder %s19, 1
      %p121 = scmp.ne.s32.totalorder %s116, %s118
      %p122 = scmp.eq.s32.totalorder %s19, 0
      %p123 = por %p121, %p122
      %p124 = scmp.ne.s32.totalorder %s116, %s118
      %p125 = scmp.eq.s32.totalorder %s24, 1
      %p126 = por %p124, %p125
      %p127 = scmp.ne.s32.totalorder %s118, %s119
      %p128 = scmp.eq.s32.totalorder %s24, 0
      %p129 = por %p127, %p128
      %p130 = scmp.ne.s32.totalorder %s118, %s119
      %p131 = scmp.eq.s32.totalorder %s25, 1
      %p132 = por %p130, %p131
      %p134 = scmp.ne.s32.totalorder %s119, %s133
      %p135 = scmp.eq.s32.totalorder %s25, 0
      %p136 = por %p134, %p135
      %s138 = sadd.s32 %s137, 1
      %p141 = scmp.eq.s32.totalorder %s19, 1
      %p142 = scmp.ne.s32.totalorder %s137, %s139
      %p143 = scmp.eq.s32.totalorder %s19, 0
      %p144 = por %p142, %p143
      %p145 = scmp.ne.s32.totalorder %s137, %s139
      %p146 = scmp.eq.s32.totalorder %s24, 1
      %p147 = por %p145, %p146
      %p148 = scmp.ne.s32.totalorder %s139, %s140
      %p149 = scmp.eq.s32.totalorder %s24, 0
      %p150 = por %p148, %p149
      %p151 = scmp.ne.s32.totalorder %s139, %s140
      %p152 = scmp.eq.s32.totalorder %s25, 1
      %p153 = por %p151, %p152
      %p155 = scmp.ne.s32.totalorder %s140, %s154
      %p156 = scmp.eq.s32.totalorder %s25, 0
      %p157 = por %p155, %p156
      %s159 = sadd.s32 %s158, 1
      %p162 = scmp.eq.s32.totalorder %s19, 1
      %p163 = scmp.ne.s32.totalorder %s158, %s160
      %p164 = scmp.eq.s32.totalorder %s19, 0
      %p165 = por %p163, %p164
      %p166 = scmp.ne.s32.totalorder %s158, %s160
      %p167 = scmp.eq.s32.totalorder %s24, 1
      %p168 = por %p166, %p167
      %p169 = scmp.ne.s32.totalorder %s160, %s161
      %p170 = scmp.eq.s32.totalorder %s24, 0
      %p171 = por %p169, %p170
      %p172 = scmp.ne.s32.totalorder %s160, %s161
      %p173 = scmp.eq.s32.totalorder %s25, 1
      %p174 = por %p172, %p173
      %p176 = scmp.ne.s32.totalorder %s161, %s175
      %p177 = scmp.eq.s32.totalorder %s25, 0
      %p178 = por %p176, %p177
      %s180 = sadd.s32 %s179, 1
      %p183 = scmp.eq.s32.totalorder %s19, 1
      %p184 = scmp.ne.s32.totalorder %s179, %s181
      %p185 = scmp.eq.s32.totalorder %s19, 0
      %p186 = por %p184, %p185
      %p187 = scmp.ne.s32.totalorder %s179, %s181
      %p188 = scmp.eq.s32.totalorder %s24, 1
      %p189 = por %p187, %p188
      %p190 = scmp.ne.s32.totalorder %s181, %s182
      %p191 = scmp.eq.s32.totalorder %s24, 0
      %p192 = por %p190, %p191
      %p193 = scmp.ne.s32.totalorder %s181, %s182
      %p194 = scmp.eq.s32.totalorder %s25, 1
      %p195 = por %p193, %p194
      %p197 = scmp.ne.s32.totalorder %s182, %s196
      %p198 = scmp.eq.s32.totalorder %s25, 0
      %p199 = por %p197, %p198
      %s201 = sadd.s32 %s200, 1
      %p204 = scmp.eq.s32.totalorder %s19, 1
      %p205 = scmp.ne.s32.totalorder %s200, %s202
      %p206 = scmp.eq.s32.totalorder %s19, 0
      %p207 = por %p205, %p206
      %p208 = scmp.ne.s32.totalorder %s200, %s202
      %p209 = scmp.eq.s32.totalorder %s24, 1
      %p210 = por %p208, %p209
      %p211 = scmp.ne.s32.totalorder %s202, %s203
      %p212 = scmp.eq.s32.totalorder %s24, 0
      %p213 = por %p211, %p212
      %p214 = scmp.ne.s32.totalorder %s202, %s203
      %p215 = scmp.eq.s32.totalorder %s25, 1
      %p216 = por %p214, %p215
      %p218 = scmp.ne.s32.totalorder %s203, %s217
      %p219 = scmp.eq.s32.totalorder %s25, 0
      %p220 = por %p218, %p219
      %s222 = sadd.s32 %s221, 1
      %p225 = scmp.eq.s32.totalorder %s19, 1
      %p226 = scmp.ne.s32.totalorder %s221, %s223
      %p227 = scmp.eq.s32.totalorder %s19, 0
      %p228 = por %p226, %p227
      %p229 = scmp.ne.s32.totalorder %s221, %s223
      %p230 = scmp.eq.s32.totalorder %s24, 1
      %p231 = por %p229, %p230
      %p232 = scmp.ne.s32.totalorder %s223, %s224
      %p233 = scmp.eq.s32.totalorder %s24, 0
      %p234 = por %p232, %p233
      %p235 = scmp.ne.s32.totalorder %s223, %s224
      %p236 = scmp.eq.s32.totalorder %s25, 1
      %p237 = por %p235, %p236
      %p239 = scmp.ne.s32.totalorder %s224, %s238
      %p240 = scmp.eq.s32.totalorder %s25, 0
      %p241 = por %p239, %p240
      %s242 = ssub.s32 %s19, %s26
      %p243 = scmp.eq.s32.totalorder %s242, 0
      %s245 = sadd.s32 %s244, 1
      %s246 = scalar_select %p243, %s244, %s245
      %p249 = pneg %p243
      %p250 = scmp.eq.s32.totalorder %s19, 1
      %p251 = por %p249, %p250
      %p252 = scmp.ne.s32.totalorder %s244, %s247
      %p253 = scmp.eq.s32.totalorder %s19, 0
      %p254 = por %p252, %p253
      %p255 = scmp.ne.s32.totalorder %s244, %s247
      %p256 = scmp.eq.s32.totalorder %s24, 1
      %p257 = por %p255, %p256
      %p258 = scmp.ne.s32.totalorder %s247, %s248
      %p259 = scmp.eq.s32.totalorder %s24, 0
      %p260 = por %p258, %p259
      %p261 = scmp.ne.s32.totalorder %s247, %s248
      %p262 = scmp.eq.s32.totalorder %s25, 1
      %p263 = por %p261, %p262
      %p265 = scmp.ne.s32.totalorder %s248, %s264
      %p266 = scmp.eq.s32.totalorder %s25, 0
      %p267 = por %p265, %p266
      %p268 = scmp.le.s32.totalorder 1, %s19
      %p269 = scmp.lt.s32.totalorder %s19, 3
      %p270 = pnand %p268, %p269
      %p271 = pneg %p270
      // Predicated region
      $region9: #{cnn1d_forward.1} parent=5 // pred_check
        _
      $region10: #{cnn1d_forward.1} parent=5 // pred_check_branch
        %273 = sbr.rel (%p270) target = $region12
      $region11: #{cnn1d_forward.1} parent=5 // pred_region
        %s274 = ssub.s32 %s19, 1
        // Predicated region
        $region13: #{cnn1d_forward.1} parent=11 // pred_check
          %p275 = pneg %p66
        $region14: #{cnn1d_forward.1} parent=11 // pred_check_branch
          %277 = sbr.rel (%p275) target = $region16
        $region15: #{cnn1d_forward.1} parent=11 // pred_region
          _
        $region16: #{cnn1d_forward.1} parent=11 // pred_fallthru
          _
        // Predicated region
        $region17: #{cnn1d_forward.1} parent=11 // pred_check
          %p278 = pneg %p87
        $region18: #{cnn1d_forward.1} parent=11 // pred_check_branch
          %280 = sbr.rel (%p278) target = $region20
        $region19: #{cnn1d_forward.1} parent=11 // pred_region
          _
        $region20: #{cnn1d_forward.1} parent=11 // pred_fallthru
          _
        // Predicated region
        $region21: #{cnn1d_forward.1} parent=11 // pred_check
          %p281 = pneg %p108
        $region22: #{cnn1d_forward.1} parent=11 // pred_check_branch
          %283 = sbr.rel (%p281) target = $region24
        $region23: #{cnn1d_forward.1} parent=11 // pred_region
          _
        $region24: #{cnn1d_forward.1} parent=11 // pred_fallthru
          _
        // Predicated region
        $region25: #{cnn1d_forward.1} parent=11 // pred_check
          %p284 = pneg %p129
        $region26: #{cnn1d_forward.1} parent=11 // pred_check_branch
          %286 = sbr.rel (%p284) target = $region28
        $region27: #{cnn1d_forward.1} parent=11 // pred_region
          _
        $region28: #{cnn1d_forward.1} parent=11 // pred_fallthru
          _
        // Predicated region
        $region29: #{cnn1d_forward.1} parent=11 // pred_check
          %p287 = pneg %p150
        $region30: #{cnn1d_forward.1} parent=11 // pred_check_branch
          %289 = sbr.rel (%p287) target = $region32
        $region31: #{cnn1d_forward.1} parent=11 // pred_region
          _
        $region32: #{cnn1d_forward.1} parent=11 // pred_fallthru
          _
        // Predicated region
        $region33: #{cnn1d_forward.1} parent=11 // pred_check
          %p290 = pneg %p171
        $region34: #{cnn1d_forward.1} parent=11 // pred_check_branch
          %292 = sbr.rel (%p290) target = $region36
        $region35: #{cnn1d_forward.1} parent=11 // pred_region
          _
        $region36: #{cnn1d_forward.1} parent=11 // pred_fallthru
          _
        // Predicated region
        $region37: #{cnn1d_forward.1} parent=11 // pred_check
          %p293 = pneg %p192
        $region38: #{cnn1d_forward.1} parent=11 // pred_check_branch
          %295 = sbr.rel (%p293) target = $region40
        $region39: #{cnn1d_forward.1} parent=11 // pred_region
          _
        $region40: #{cnn1d_forward.1} parent=11 // pred_fallthru
          _
        // Predicated region
        $region41: #{cnn1d_forward.1} parent=11 // pred_check
          %p296 = pneg %p213
        $region42: #{cnn1d_forward.1} parent=11 // pred_check_branch
          %298 = sbr.rel (%p296) target = $region44
        $region43: #{cnn1d_forward.1} parent=11 // pred_region
          _
        $region44: #{cnn1d_forward.1} parent=11 // pred_fallthru
          _
        // Predicated region
        $region45: #{cnn1d_forward.1} parent=11 // pred_check
          %p299 = pneg %p234
        $region46: #{cnn1d_forward.1} parent=11 // pred_check_branch
          %301 = sbr.rel (%p299) target = $region48
        $region47: #{cnn1d_forward.1} parent=11 // pred_region
          _
        $region48: #{cnn1d_forward.1} parent=11 // pred_fallthru
          _
      $region12: #{cnn1d_forward.1} parent=5 // pred_fallthru
        _
      %p302 = scmp.lt.s32.totalorder %s19, 2
      // Predicated region
      $region49: #{cnn1d_forward.1} parent=5 // pred_check
        %p303 = pneg %p302
      $region50: #{cnn1d_forward.1} parent=5 // pred_check_branch
        %305 = sbr.rel (%p303) target = $region52
      $region51: #{cnn1d_forward.1} parent=5 // pred_region
        // Predicated region
        $region53: #{cnn1d_forward.1} parent=51 // pred_check
          %p306 = pneg %p39
        $region54: #{cnn1d_forward.1} parent=51 // pred_check_branch
          %308 = sbr.rel (%p306) target = $region56
        $region55: #{cnn1d_forward.1} parent=51 // pred_region
          %s309 = smul.u32 128, %s19
          %p310 = scmp.lt.s32.totalorder %s309, 255
          %s311 = scalar_select %p310, %s309, 255
          %s312 = smul.addr %s311, 8
          %s313 = scalar_lea.vmem %s0, %s312
          %s314 = smul.u32 128, %s19
        $region56: #{cnn1d_forward.1} parent=51 // pred_fallthru
          _
      $region52: #{cnn1d_forward.1} parent=5 // pred_fallthru
        _
      %p315 = scmp.le.s32.totalorder 1, %s19
      %p316 = scmp.lt.s32.totalorder %s19, 3
      %p317 = pnand %p315, %p316
      %p318 = pneg %p317
      // Predicated region
      $region57: #{cnn1d_forward.1} parent=5 // pred_check
        _
      $region58: #{cnn1d_forward.1} parent=5 // pred_check_branch
        %320 = sbr.rel (%p317) target = $region60
      $region59: #{cnn1d_forward.1} parent=5 // pred_region
        %s321 = ssub.s32 %s19, 1
        %s322 = smul.u32 128, %s24
        %p323 = scmp.lt.s32.totalorder %s322, 255
        %s324 = scalar_select %p323, %s322, 255
        %s325 = smul.addr %s324, 8
        %s326 = scalar_lea.vmem %s0, %s325
        %p327 = pneg %p45
        %p328 = pneg %p42
        %p329 = pneg %p66
        %p330 = pneg %p63
        %p331 = pneg %p87
        %p332 = pneg %p84
        %p333 = pneg %p108
        %p334 = pneg %p105
        %p335 = pneg %p129
        %p336 = pneg %p126
        %p337 = pneg %p150
        %p338 = pneg %p147
        %p339 = pneg %p171
        %p340 = pneg %p168
        %p341 = pneg %p192
        %p342 = pneg %p189
        %p343 = pneg %p213
        %p344 = pneg %p210
        %p345 = pneg %p234
        %p346 = pneg %p231
        %p347 = pneg %p260
        %p348 = pneg %p257
        %s349 = sand.u32 %s247, 1
        %s350 = scalar_lea.sflag [#allocation3], %s349
        %s351 = sand.u32 %s247, 1
        %s352 = smul.addr %s351, 8
        %s353 = scalar_lea.vmem [#allocation2], %s352
        %s354 = smul.u32 128, %s24
        %p355 = scmp.lt.s32.totalorder %s354, 255
        %s356 = scalar_select %p355, %s354, 255
        %s357 = smul.addr %s356, 8
        %s358 = scalar_lea.vmem %s0, %s357
        %s359 = smul.u32 128, %s24
        %v360 = vld [vmem:[%s358] sm:$0xff]
        %v361 = vld [vmem:[%s358 + $0x8] sm:$0xff]
        %v362 = vld [vmem:[%s358 + $0x10] sm:$0xff]
        %v363 = vld [vmem:[%s358 + $0x18] sm:$0xff]
        %v364 = vld [vmem:[%s358 + $0x20] sm:$0xff]
        %v365 = vld [vmem:[%s358 + $0x28] sm:$0xff]
        %v366 = vld [vmem:[%s358 + $0x30] sm:$0xff]
        %v367 = vld [vmem:[%s358 + $0x38] sm:$0xff]
        %v368 = vld [vmem:[%s358 + $0x40] sm:$0xff]
        %v369 = vld [vmem:[%s358 + $0x48] sm:$0xff]
        %v370 = vld [vmem:[%s358 + $0x50] sm:$0xff]
        %v371 = vld [vmem:[%s358 + $0x58] sm:$0xff]
        %v372 = vld [vmem:[%s358 + $0x60] sm:$0xff]
        %v373 = vld [vmem:[%s358 + $0x68] sm:$0xff]
        %v374 = vld [vmem:[%s358 + $0x70] sm:$0xff]
        %v375 = vld [vmem:[%s358 + $0x78] sm:$0xff]
        %v376 = vld [vmem:[%s358 + $0x80] sm:$0xff]
        %v377 = vld [vmem:[%s358 + $0x88] sm:$0xff]
        %v378 = vld [vmem:[%s358 + $0x90] sm:$0xff]
        %v379 = vld [vmem:[%s358 + $0x98] sm:$0xff]
        %v380 = vld [vmem:[%s358 + $0xa0] sm:$0xff]
        %v381 = vld [vmem:[%s358 + $0xa8] sm:$0xff]
        %v382 = vld [vmem:[%s358 + $0xb0] sm:$0xff]
        %v383 = vld [vmem:[%s358 + $0xb8] sm:$0xff]
        %v384 = vld [vmem:[%s358 + $0xc0] sm:$0xff]
        %v385 = vld [vmem:[%s358 + $0xc8] sm:$0xff]
        %v386 = vld [vmem:[%s358 + $0xd0] sm:$0xff]
        %v387 = vld [vmem:[%s358 + $0xd8] sm:$0xff]
        %v388 = vld [vmem:[%s358 + $0xe0] sm:$0xff]
        %v389 = vld [vmem:[%s358 + $0xe8] sm:$0xff]
        %v390 = vld [vmem:[%s358 + $0xf0] sm:$0xff]
        %v391 = vld [vmem:[%s358 + $0xf8] sm:$0xff]
        %v392 = vld [vmem:[%s358 + $0x100] sm:$0xff]
        %v393 = vld [vmem:[%s358 + $0x108] sm:$0xff]
        %v394 = vld [vmem:[%s358 + $0x110] sm:$0xff]
        %v395 = vld [vmem:[%s358 + $0x118] sm:$0xff]
        %v396 = vld [vmem:[%s358 + $0x120] sm:$0xff]
        %v397 = vld [vmem:[%s358 + $0x128] sm:$0xff]
        %v398 = vld [vmem:[%s358 + $0x130] sm:$0xff]
        %v399 = vld [vmem:[%s358 + $0x138] sm:$0xff]
        %v400 = vld [vmem:[%s358 + $0x140] sm:$0xff]
        %v401 = vld [vmem:[%s358 + $0x148] sm:$0xff]
        %v402 = vld [vmem:[%s358 + $0x150] sm:$0xff]
        %v403 = vld [vmem:[%s358 + $0x158] sm:$0xff]
        %v404 = vld [vmem:[%s358 + $0x160] sm:$0xff]
        %v405 = vld [vmem:[%s358 + $0x168] sm:$0xff]
        %v406 = vld [vmem:[%s358 + $0x170] sm:$0xff]
        %v407 = vld [vmem:[%s358 + $0x178] sm:$0xff]
        %v408 = vld [vmem:[%s358 + $0x180] sm:$0xff]
        %v409 = vld [vmem:[%s358 + $0x188] sm:$0xff]
        %v410 = vld [vmem:[%s358 + $0x190] sm:$0xff]
        %v411 = vld [vmem:[%s358 + $0x198] sm:$0xff]
        %v412 = vld [vmem:[%s358 + $0x1a0] sm:$0xff]
        %v413 = vld [vmem:[%s358 + $0x1a8] sm:$0xff]
        %v414 = vld [vmem:[%s358 + $0x1b0] sm:$0xff]
        %v415 = vld [vmem:[%s358 + $0x1b8] sm:$0xff]
        %v416 = vld [vmem:[%s358 + $0x1c0] sm:$0xff]
        %v417 = vld [vmem:[%s358 + $0x1c8] sm:$0xff]
        %v418 = vld [vmem:[%s358 + $0x1d0] sm:$0xff]
        %v419 = vld [vmem:[%s358 + $0x1d8] sm:$0xff]
        %v420 = vld [vmem:[%s358 + $0x1e0] sm:$0xff]
        %v421 = vld [vmem:[%s358 + $0x1e8] sm:$0xff]
        %v422 = vld [vmem:[%s358 + $0x1f0] sm:$0xff]
        %v423 = vld [vmem:[%s358 + $0x1f8] sm:$0xff]
        %v424 = vld [vmem:[%s358 + $0x200] sm:$0xff]
        %v425 = vld [vmem:[%s358 + $0x208] sm:$0xff]
        %v426 = vld [vmem:[%s358 + $0x210] sm:$0xff]
        %v427 = vld [vmem:[%s358 + $0x218] sm:$0xff]
        %v428 = vld [vmem:[%s358 + $0x220] sm:$0xff]
        %v429 = vld [vmem:[%s358 + $0x228] sm:$0xff]
        %v430 = vld [vmem:[%s358 + $0x230] sm:$0xff]
        %v431 = vld [vmem:[%s358 + $0x238] sm:$0xff]
        %v432 = vld [vmem:[%s358 + $0x240] sm:$0xff]
        %v433 = vld [vmem:[%s358 + $0x248] sm:$0xff]
        %v434 = vld [vmem:[%s358 + $0x250] sm:$0xff]
        %v435 = vld [vmem:[%s358 + $0x258] sm:$0xff]
        %v436 = vld [vmem:[%s358 + $0x260] sm:$0xff]
        %v437 = vld [vmem:[%s358 + $0x268] sm:$0xff]
        %v438 = vld [vmem:[%s358 + $0x270] sm:$0xff]
        %v439 = vld [vmem:[%s358 + $0x278] sm:$0xff]
        %v440 = vld [vmem:[%s358 + $0x280] sm:$0xff]
        %v441 = vld [vmem:[%s358 + $0x288] sm:$0xff]
        %v442 = vld [vmem:[%s358 + $0x290] sm:$0xff]
        %v443 = vld [vmem:[%s358 + $0x298] sm:$0xff]
        %v444 = vld [vmem:[%s358 + $0x2a0] sm:$0xff]
        %v445 = vld [vmem:[%s358 + $0x2a8] sm:$0xff]
        %v446 = vld [vmem:[%s358 + $0x2b0] sm:$0xff]
        %v447 = vld [vmem:[%s358 + $0x2b8] sm:$0xff]
        %v448 = vld [vmem:[%s358 + $0x2c0] sm:$0xff]
        %v449 = vld [vmem:[%s358 + $0x2c8] sm:$0xff]
        %v450 = vld [vmem:[%s358 + $0x2d0] sm:$0xff]
        %v451 = vld [vmem:[%s358 + $0x2d8] sm:$0xff]
        %v452 = vld [vmem:[%s358 + $0x2e0] sm:$0xff]
        %v453 = vld [vmem:[%s358 + $0x2e8] sm:$0xff]
        %v454 = vld [vmem:[%s358 + $0x2f0] sm:$0xff]
        %v455 = vld [vmem:[%s358 + $0x2f8] sm:$0xff]
        %v456 = vld [vmem:[%s358 + $0x300] sm:$0xff]
        %v457 = vld [vmem:[%s358 + $0x308] sm:$0xff]
        %v458 = vld [vmem:[%s358 + $0x310] sm:$0xff]
        %v459 = vld [vmem:[%s358 + $0x318] sm:$0xff]
        %v460 = vld [vmem:[%s358 + $0x320] sm:$0xff]
        %v461 = vld [vmem:[%s358 + $0x328] sm:$0xff]
        %v462 = vld [vmem:[%s358 + $0x330] sm:$0xff]
        %v463 = vld [vmem:[%s358 + $0x338] sm:$0xff]
        %v464 = vld [vmem:[%s358 + $0x340] sm:$0xff]
        %v465 = vld [vmem:[%s358 + $0x348] sm:$0xff]
        %v466 = vld [vmem:[%s358 + $0x350] sm:$0xff]
        %v467 = vld [vmem:[%s358 + $0x358] sm:$0xff]
        %v468 = vld [vmem:[%s358 + $0x360] sm:$0xff]
        %v469 = vld [vmem:[%s358 + $0x368] sm:$0xff]
        %v470 = vld [vmem:[%s358 + $0x370] sm:$0xff]
        %v471 = vld [vmem:[%s358 + $0x378] sm:$0xff]
        %v472 = vld [vmem:[%s358 + $0x380] sm:$0xff]
        %v473 = vld [vmem:[%s358 + $0x388] sm:$0xff]
        %v474 = vld [vmem:[%s358 + $0x390] sm:$0xff]
        %v475 = vld [vmem:[%s358 + $0x398] sm:$0xff]
        %v476 = vld [vmem:[%s358 + $0x3a0] sm:$0xff]
        %v477 = vld [vmem:[%s358 + $0x3a8] sm:$0xff]
        %v478 = vld [vmem:[%s358 + $0x3b0] sm:$0xff]
        %v479 = vld [vmem:[%s358 + $0x3b8] sm:$0xff]
        %v480 = vld [vmem:[%s358 + $0x3c0] sm:$0xff]
        %v481 = vld [vmem:[%s358 + $0x3c8] sm:$0xff]
        %v482 = vld [vmem:[%s358 + $0x3d0] sm:$0xff]
        %v483 = vld [vmem:[%s358 + $0x3d8] sm:$0xff]
        %v484 = vld [vmem:[%s358 + $0x3e0] sm:$0xff]
        %v485 = vld [vmem:[%s358 + $0x3e8] sm:$0xff]
        %v486 = vld [vmem:[%s358 + $0x3f0] sm:$0xff]
        %v487 = vld [vmem:[%s358 + $0x3f8] sm:$0xff]
        %v488 = vld [vmem:[%s1] sm:$0xff]
        %v489 = vld [vmem:[%s1 + $0x8] sm:$0xff]
        %v490 = vld [vmem:[%s1 + $0x10] sm:$0xf]
        %vm491 = vcmask 162816
        %v493 = vsel %vm491, %v360, 0
        %v496 = vsel %vm491, %v361, 0
        %v499 = vsel %vm491, %v362, 0
        %v502 = vsel %vm491, %v363, 0
        %v505 = vsel %vm491, %v364, 0
        %v508 = vsel %vm491, %v365, 0
        %v511 = vsel %vm491, %v366, 0
        %v514 = vsel %vm491, %v367, 0
        %v517 = vsel %vm491, %v368, 0
        %v520 = vsel %vm491, %v369, 0
        %v523 = vsel %vm491, %v370, 0
        %v526 = vsel %vm491, %v371, 0
        %v529 = vsel %vm491, %v372, 0
        %v532 = vsel %vm491, %v373, 0
        %v535 = vsel %vm491, %v374, 0
        %v538 = vsel %vm491, %v375, 0
        %v541 = vsel %vm491, %v376, 0
        %v544 = vsel %vm491, %v377, 0
        %v547 = vsel %vm491, %v378, 0
        %v550 = vsel %vm491, %v379, 0
        %v553 = vsel %vm491, %v380, 0
        %v556 = vsel %vm491, %v381, 0
        %v559 = vsel %vm491, %v382, 0
        %v562 = vsel %vm491, %v383, 0
        %v565 = vsel %vm491, %v384, 0
        %v568 = vsel %vm491, %v385, 0
        %v571 = vsel %vm491, %v386, 0
        %v574 = vsel %vm491, %v387, 0
        %v577 = vsel %vm491, %v388, 0
        %v580 = vsel %vm491, %v389, 0
        %v583 = vsel %vm491, %v390, 0
        %v586 = vsel %vm491, %v391, 0
        %v589 = vsel %vm491, %v392, 0
        %v592 = vsel %vm491, %v393, 0
        %v595 = vsel %vm491, %v394, 0
        %v598 = vsel %vm491, %v395, 0
        %v601 = vsel %vm491, %v396, 0
        %v604 = vsel %vm491, %v397, 0
        %v607 = vsel %vm491, %v398, 0
        %v610 = vsel %vm491, %v399, 0
        %v613 = vsel %vm491, %v400, 0
        %v616 = vsel %vm491, %v401, 0
        %v619 = vsel %vm491, %v402, 0
        %v622 = vsel %vm491, %v403, 0
        %v625 = vsel %vm491, %v404, 0
        %v628 = vsel %vm491, %v405, 0
        %v631 = vsel %vm491, %v406, 0
        %v634 = vsel %vm491, %v407, 0
        %v637 = vsel %vm491, %v408, 0
        %v640 = vsel %vm491, %v409, 0
        %v643 = vsel %vm491, %v410, 0
        %v646 = vsel %vm491, %v411, 0
        %v649 = vsel %vm491, %v412, 0
        %v652 = vsel %vm491, %v413, 0
        %v655 = vsel %vm491, %v414, 0
        %v658 = vsel %vm491, %v415, 0
        %v661 = vsel %vm491, %v416, 0
        %v664 = vsel %vm491, %v417, 0
        %v667 = vsel %vm491, %v418, 0
        %v670 = vsel %vm491, %v419, 0
        %v673 = vsel %vm491, %v420, 0
        %v676 = vsel %vm491, %v421, 0
        %v679 = vsel %vm491, %v422, 0
        %v682 = vsel %vm491, %v423, 0
        %v685 = vsel %vm491, %v424, 0
        %v688 = vsel %vm491, %v425, 0
        %v691 = vsel %vm491, %v426, 0
        %v694 = vsel %vm491, %v427, 0
        %v697 = vsel %vm491, %v428, 0
        %v700 = vsel %vm491, %v429, 0
        %v703 = vsel %vm491, %v430, 0
        %v706 = vsel %vm491, %v431, 0
        %v709 = vsel %vm491, %v432, 0
        %v712 = vsel %vm491, %v433, 0
        %v715 = vsel %vm491, %v434, 0
        %v718 = vsel %vm491, %v435, 0
        %v721 = vsel %vm491, %v436, 0
        %v724 = vsel %vm491, %v437, 0
        %v727 = vsel %vm491, %v438, 0
        %v730 = vsel %vm491, %v439, 0
        %v733 = vsel %vm491, %v440, 0
        %v736 = vsel %vm491, %v441, 0
        %v739 = vsel %vm491, %v442, 0
        %v742 = vsel %vm491, %v443, 0
        %v745 = vsel %vm491, %v444, 0
        %v748 = vsel %vm491, %v445, 0
        %v751 = vsel %vm491, %v446, 0
        %v754 = vsel %vm491, %v447, 0
        %v757 = vsel %vm491, %v448, 0
        %v760 = vsel %vm491, %v449, 0
        %v763 = vsel %vm491, %v450, 0
        %v766 = vsel %vm491, %v451, 0
        %v769 = vsel %vm491, %v452, 0
        %v772 = vsel %vm491, %v453, 0
        %v775 = vsel %vm491, %v454, 0
        %v778 = vsel %vm491, %v455, 0
        %v781 = vsel %vm491, %v456, 0
        %v784 = vsel %vm491, %v457, 0
        %v787 = vsel %vm491, %v458, 0
        %v790 = vsel %vm491, %v459, 0
        %v793 = vsel %vm491, %v460, 0
        %v796 = vsel %vm491, %v461, 0
        %v799 = vsel %vm491, %v462, 0
        %v802 = vsel %vm491, %v463, 0
        %v805 = vsel %vm491, %v464, 0
        %v808 = vsel %vm491, %v465, 0
        %v811 = vsel %vm491, %v466, 0
        %v814 = vsel %vm491, %v467, 0
        %v817 = vsel %vm491, %v468, 0
        %v820 = vsel %vm491, %v469, 0
        %v823 = vsel %vm491, %v470, 0
        %v826 = vsel %vm491, %v471, 0
        %v829 = vsel %vm491, %v472, 0
        %v832 = vsel %vm491, %v473, 0
        %v835 = vsel %vm491, %v474, 0
        %v838 = vsel %vm491, %v475, 0
        %v841 = vsel %vm491, %v476, 0
        %v844 = vsel %vm491, %v477, 0
        %v847 = vsel %vm491, %v478, 0
        %v850 = vsel %vm491, %v479, 0
        %v853 = vsel %vm491, %v480, 0
        %v856 = vsel %vm491, %v481, 0
        %v859 = vsel %vm491, %v482, 0
        %v862 = vsel %vm491, %v483, 0
        %v865 = vsel %vm491, %v484, 0
        %v868 = vsel %vm491, %v485, 0
        %v871 = vsel %vm491, %v486, 0
        %v874 = vsel %vm491, %v487, 0
        %vm876 = vcmask 1043456
        %v878 = vsel %vm876, %v490, 0
        %880 = vmatprep.subr.mxu0 0.0
        %881 = vmatpush1.msra.mxu0 %v488
        %882 = vmatprep.subr.mxu0 0.0
        %883 = vmatpush1.msra.mxu0 %v489
        %884 = vmatprep.subr.mxu0 0.0
        %885 = vmatpush1.msra.mxu0 %v878
        %886 = vmatprep.subr.mxu0 0.0
        %887 = vmatpush1.msra.mxu0 0.0
        %888 = vmatprep.subr.mxu0 0.0
        %889 = vmatpush1.msra.mxu0 0.0
        %890 = vmatprep.subr.mxu0 0.0
        %891 = vmatpush1.msra.mxu0 0.0
        %892 = vmatprep.subr.mxu0 0.0
        %893 = vmatpush1.msra.mxu0 0.0
        %894 = vmatprep.subr.mxu0 0.0
        %895 = vmatpush1.msra.mxu0 0.0
        %896 = vmatprep.subr.mxu0 0.0
        %897 = vmatpush1.msra.mxu0 0.0
        %898 = vmatprep.subr.mxu0 0.0
        %899 = vmatpush1.msra.mxu0 0.0
        %900 = vmatprep.subr.mxu0 0.0
        %901 = vmatpush1.msra.mxu0 0.0
        %902 = vmatprep.subr.mxu0 0.0
        %903 = vmatpush1.msra.mxu0 0.0
        %904 = vmatprep.subr.mxu0 0.0
        %905 = vmatpush1.msra.mxu0 0.0
        %906 = vmatprep.subr.mxu0 0.0
        %907 = vmatpush1.msra.mxu0 0.0
        %908 = vmatprep.subr.mxu0 0.0
        %909 = vmatpush1.msra.mxu0 0.0
        %910 = vmatprep.subr.mxu0 0.0
        %911 = vmatpush1.msra.mxu0 0.0
        %912 = vmatprep.subr.mxu0 0.0
        %913 = vmatpush1.msra.mxu0 0.0
        %914 = vmatprep.subr.mxu0 0.0
        %915 = vmatpush1.msra.mxu0 0.0
        %916 = vmatprep.subr.mxu0 0.0
        %917 = vmatpush1.msra.mxu0 0.0
        %918 = vmatprep.subr.mxu0 0.0
        %919 = vmatpush1.msra.mxu0 0.0
        %920 = vmatprep.subr.mxu0 0.0
        %921 = vmatpush1.msra.mxu0 0.0
        %922 = vmatprep.subr.mxu0 0.0
        %923 = vmatpush1.msra.mxu0 0.0
        %924 = vmatprep.subr.mxu0 0.0
        %925 = vmatpush1.msra.mxu0 0.0
        %926 = vmatprep.subr.mxu0 0.0
        %927 = vmatpush1.msra.mxu0 0.0
        %928 = vmatprep.subr.mxu0 0.0
        %929 = vmatpush1.msra.mxu0 0.0
        %930 = vmatprep.subr.mxu0 0.0
        %931 = vmatpush1.msra.mxu0 0.0
        %932 = vmatprep.subr.mxu0 0.0
        %933 = vmatpush1.msra.mxu0 0.0
        %934 = vmatprep.subr.mxu0 0.0
        %935 = vmatpush1.msra.mxu0 0.0
        %936 = vmatprep.subr.mxu0 0.0
        %937 = vmatpush1.msra.mxu0 0.0
        %938 = vmatprep.subr.mxu0 0.0
        %939 = vmatpush1.msra.mxu0 0.0
        %940 = vmatprep.subr.mxu0 0.0
        %941 = vmatpush1.msra.mxu0 0.0
        %942 = vmatprep.subr.mxu0 0.0
        %943 = vmatpush1.msra.mxu0 0.0
        %944 = vmatprep.mubr.f32.mxu0 0.0
        %945 = vmatmul.mubr.f32.gmra.mrb[0].mxu0 %v493
        %v946 = vpop.f32.mrb[0].mxu0
        %v947 = vadd.f32 0.0, %v946
        %v948 = vpop.f32.mrb[0].mxu0
        %949 = vmatprep.mubr.f32.mxu0 0.0
        %950 = vmatmul.mubr.f32.gmra.mrb[0].mxu0 %v496
        %v951 = vpop.f32.mrb[0].mxu0
        %v952 = vadd.f32 0.0, %v951
        %v953 = vpop.f32.mrb[0].mxu0
        %954 = vmatprep.mubr.f32.mxu0 0.0
        %955 = vmatmul.mubr.f32.gmra.mrb[0].mxu0 %v499
        %v956 = vpop.f32.mrb[0].mxu0
        %v957 = vadd.f32 0.0, %v956
        %v958 = vpop.f32.mrb[0].mxu0
        %959 = vmatprep.mubr.f32.mxu0 0.0
        %960 = vmatmul.mubr.f32.gmra.mrb[0].mxu0 %v502
        %v961 = vpop.f32.mrb[0].mxu0
        %v962 = vadd.f32 0.0, %v961
        %v963 = vpop.f32.mrb[0].mxu0
        %964 = vmatprep.mubr.f32.mxu0 0.0
        %965 = vmatmul.mubr.f32.gmra.mrb[0].mxu0 %v505
        %v966 = vpop.f32.mrb[0].mxu0
        %v967 = vadd.f32 0.0, %v966
        %v968 = vpop.f32.mrb[0].mxu0
        %969 = vmatprep.mubr.f32.mxu0 0.0
        %970 = vmatmul.mubr.f32.gmra.mrb[0].mxu0 %v508
        %v971 = vpop.f32.mrb[0].mxu0
        %v972 = vadd.f32 0.0, %v971
        %v973 = vpop.f32.mrb[0].mxu0
        %974 = vmatprep.mubr.f32.mxu0 0.0
        %975 = vmatmul.mubr.f32.gmra.mrb[0].mxu0 %v511
        %v976 = vpop.f32.mrb[0].mxu0
        %v977 = vadd.f32 0.0, %v976
        %v978 = vpop.f32.mrb[0].mxu0
        %979 = vmatprep.mubr.f32.mxu0 0.0
        %980 = vmatmul.mubr.f32.gmra.mrb[0].mxu0 %v514
        %v981 = vpop.f32.mrb[0].mxu0
        %v982 = vadd.f32 0.0, %v981
        %v983 = vpop.f32.mrb[0].mxu0
        %984 = vmatprep.mubr.f32.mxu0 0.0
        %985 = vmatmul.mubr.f32.gmra.mrb[0].mxu0 %v517
        %v986 = vpop.f32.mrb[0].mxu0
        %v987 = vadd.f32 0.0, %v986
        %v988 = vpop.f32.mrb[0].mxu0
        %989 = vmatprep.mubr.f32.mxu0 0.0
        %990 = vmatmul.mubr.f32.gmra.mrb[0].mxu0 %v520
        %v991 = vpop.f32.mrb[0].mxu0
        %v992 = vadd.f32 0.0, %v991
        %v993 = vpop.f32.mrb[0].mxu0
        %994 = vmatprep.mubr.f32.mxu0 0.0
        %995 = vmatmul.mubr.f32.gmra.mrb[0].mxu0 %v523
        %v996 = vpop.f32.mrb[0].mxu0
        %v997 = vadd.f32 0.0, %v996
        %v998 = vpop.f32.mrb[0].mxu0
        %999 = vmatprep.mubr.f32.mxu0 0.0
        %1000 = vmatmul.mubr.f32.gmra.mrb[0].mxu0 %v526
        %v1001 = vpop.f32.mrb[0].mxu0
        %v1002 = vadd.f32 0.0, %v1001
        %v1003 = vpop.f32.mrb[0].mxu0
        %1004 = vmatprep.mubr.f32.mxu0 0.0
        %1005 = vmatmul.mubr.f32.gmra.mrb[0].mxu0 %v529
        %v1006 = vpop.f32.mrb[0].mxu0
        %v1007 = vadd.f32 0.0, %v1006
        %v1008 = vpop.f32.mrb[0].mxu0
        %1009 = vmatprep.mubr.f32.mxu0 0.0
        %1010 = vmatmul.mubr.f32.gmra.mrb[0].mxu0 %v532
        %v1011 = vpop.f32.mrb[0].mxu0
        %v1012 = vadd.f32 0.0, %v1011
        %v1013 = vpop.f32.mrb[0].mxu0
        %1014 = vmatprep.mubr.f32.mxu0 0.0
        %1015 = vmatmul.mubr.f32.gmra.mrb[0].mxu0 %v535
        %v1016 = vpop.f32.mrb[0].mxu0
        %v1017 = vadd.f32 0.0, %v1016
        %v1018 = vpop.f32.mrb[0].mxu0
        %1019 = vmatprep.mubr.f32.mxu0 0.0
        %1020 = vmatmul.mubr.f32.gmra.mrb[0].mxu0 %v538
        %v1021 = vpop.f32.mrb[0].mxu0
        %v1022 = vadd.f32 0.0, %v1021
        %v1023 = vpop.f32.mrb[0].mxu0
        %1024 = vmatprep.mubr.f32.mxu0 0.0
        %1025 = vmatmul.mubr.f32.gmra.mrb[0].mxu0 %v541
        %v1026 = vpop.f32.mrb[0].mxu0
        %v1027 = vadd.f32 0.0, %v1026
        %v1028 = vpop.f32.mrb[0].mxu0
        %1029 = vmatprep.mubr.f32.mxu0 0.0
        %1030 = vmatmul.mubr.f32.gmra.mrb[0].mxu0 %v544
        %v1031 = vpop.f32.mrb[0].mxu0
        %v1032 = vadd.f32 0.0, %v1031
        %v1033 = vpop.f32.mrb[0].mxu0
        %1034 = vmatprep.mubr.f32.mxu0 0.0
        %1035 = vmatmul.mubr.f32.gmra.mrb[0].mxu0 %v547
        %v1036 = vpop.f32.mrb[0].mxu0
        %v1037 = vadd.f32 0.0, %v1036
        %v1038 = vpop.f32.mrb[0].mxu0
        %1039 = vmatprep.mubr.f32.mxu0 0.0
        %1040 = vmatmul.mubr.f32.gmra.mrb[0].mxu0 %v550
        %v1041 = vpop.f32.mrb[0].mxu0
        %v1042 = vadd.f32 0.0, %v1041
        %v1043 = vpop.f32.mrb[0].mxu0
        %1044 = vmatprep.mubr.f32.mxu0 0.0
        %1045 = vmatmul.mubr.f32.gmra.mrb[0].mxu0 %v553
        %v1046 = vpop.f32.mrb[0].mxu0
        %v1047 = vadd.f32 0.0, %v1046
        %v1048 = vpop.f32.mrb[0].mxu0
        %1049 = vmatprep.mubr.f32.mxu0 0.0
        %1050 = vmatmul.mubr.f32.gmra.mrb[0].mxu0 %v556
        %v1051 = vpop.f32.mrb[0].mxu0
        %v1052 = vadd.f32 0.0, %v1051
        %v1053 = vpop.f32.mrb[0].mxu0
        %1054 = vmatprep.mubr.f32.mxu0 0.0
        %1055 = vmatmul.mubr.f32.gmra.mrb[0].mxu0 %v559
        %v1056 = vpop.f32.mrb[0].mxu0
        %v1057 = vadd.f32 0.0, %v1056
        %v1058 = vpop.f32.mrb[0].mxu0
        %1059 = vmatprep.mubr.f32.mxu0 0.0
        %1060 = vmatmul.mubr.f32.gmra.mrb[0].mxu0 %v562
        %v1061 = vpop.f32.mrb[0].mxu0
        %v1062 = vadd.f32 0.0, %v1061
        %v1063 = vpop.f32.mrb[0].mxu0
        %1064 = vmatprep.mubr.f32.mxu0 0.0
        %1065 = vmatmul.mubr.f32.gmra.mrb[0].mxu0 %v565
        %v1066 = vpop.f32.mrb[0].mxu0
        %v1067 = vadd.f32 0.0, %v1066
        %v1068 = vpop.f32.mrb[0].mxu0
        %1069 = vmatprep.mubr.f32.mxu0 0.0
        %1070 = vmatmul.mubr.f32.gmra.mrb[0].mxu0 %v568
        %v1071 = vpop.f32.mrb[0].mxu0
        %v1072 = vadd.f32 0.0, %v1071
        %v1073 = vpop.f32.mrb[0].mxu0
        %1074 = vmatprep.mubr.f32.mxu0 0.0
        %1075 = vmatmul.mubr.f32.gmra.mrb[0].mxu0 %v571
        %v1076 = vpop.f32.mrb[0].mxu0
        %v1077 = vadd.f32 0.0, %v1076
        %v1078 = vpop.f32.mrb[0].mxu0
        %1079 = vmatprep.mubr.f32.mxu0 0.0
        %1080 = vmatmul.mubr.f32.gmra.mrb[0].mxu0 %v574
        %v1081 = vpop.f32.mrb[0].mxu0
        %v1082 = vadd.f32 0.0, %v1081
        %v1083 = vpop.f32.mrb[0].mxu0
        %1084 = vmatprep.mubr.f32.mxu0 0.0
        %1085 = vmatmul.mubr.f32.gmra.mrb[0].mxu0 %v577
        %v1086 = vpop.f32.mrb[0].mxu0
        %v1087 = vadd.f32 0.0, %v1086
        %v1088 = vpop.f32.mrb[0].mxu0
        %1089 = vmatprep.mubr.f32.mxu0 0.0
        %1090 = vmatmul.mubr.f32.gmra.mrb[0].mxu0 %v580
        %v1091 = vpop.f32.mrb[0].mxu0
        %v1092 = vadd.f32 0.0, %v1091
        %v1093 = vpop.f32.mrb[0].mxu0
        %1094 = vmatprep.mubr.f32.mxu0 0.0
        %1095 = vmatmul.mubr.f32.gmra.mrb[0].mxu0 %v583
        %v1096 = vpop.f32.mrb[0].mxu0
        %v1097 = vadd.f32 0.0, %v1096
        %v1098 = vpop.f32.mrb[0].mxu0
        %1099 = vmatprep.mubr.f32.mxu0 0.0
        %1100 = vmatmul.mubr.f32.gmra.mrb[0].mxu0 %v586
        %v1101 = vpop.f32.mrb[0].mxu0
        %v1102 = vadd.f32 0.0, %v1101
        %v1103 = vpop.f32.mrb[0].mxu0
        %1104 = vmatprep.mubr.f32.mxu0 0.0
        %1105 = vmatmul.mubr.f32.gmra.mrb[0].mxu0 %v589
        %v1106 = vpop.f32.mrb[0].mxu0
        %v1107 = vadd.f32 0.0, %v1106
        %v1108 = vpop.f32.mrb[0].mxu0
        %1109 = vmatprep.mubr.f32.mxu0 0.0
        %1110 = vmatmul.mubr.f32.gmra.mrb[0].mxu0 %v592
        %v1111 = vpop.f32.mrb[0].mxu0
        %v1112 = vadd.f32 0.0, %v1111
        %v1113 = vpop.f32.mrb[0].mxu0
        %1114 = vmatprep.mubr.f32.mxu0 0.0
        %1115 = vmatmul.mubr.f32.gmra.mrb[0].mxu0 %v595
        %v1116 = vpop.f32.mrb[0].mxu0
        %v1117 = vadd.f32 0.0, %v1116
        %v1118 = vpop.f32.mrb[0].mxu0
        %1119 = vmatprep.mubr.f32.mxu0 0.0
        %1120 = vmatmul.mubr.f32.gmra.mrb[0].mxu0 %v598
        %v1121 = vpop.f32.mrb[0].mxu0
        %v1122 = vadd.f32 0.0, %v1121
        %v1123 = vpop.f32.mrb[0].mxu0
        %1124 = vmatprep.mubr.f32.mxu0 0.0
        %1125 = vmatmul.mubr.f32.gmra.mrb[0].mxu0 %v601
        %v1126 = vpop.f32.mrb[0].mxu0
        %v1127 = vadd.f32 0.0, %v1126
        %v1128 = vpop.f32.mrb[0].mxu0
        %1129 = vmatprep.mubr.f32.mxu0 0.0
        %1130 = vmatmul.mubr.f32.gmra.mrb[0].mxu0 %v604
        %v1131 = vpop.f32.mrb[0].mxu0
        %v1132 = vadd.f32 0.0, %v1131
        %v1133 = vpop.f32.mrb[0].mxu0
        %1134 = vmatprep.mubr.f32.mxu0 0.0
        %1135 = vmatmul.mubr.f32.gmra.mrb[0].mxu0 %v607
        %v1136 = vpop.f32.mrb[0].mxu0
        %v1137 = vadd.f32 0.0, %v1136
        %v1138 = vpop.f32.mrb[0].mxu0
        %1139 = vmatprep.mubr.f32.mxu0 0.0
        %1140 = vmatmul.mubr.f32.gmra.mrb[0].mxu0 %v610
        %v1141 = vpop.f32.mrb[0].mxu0
        %v1142 = vadd.f32 0.0, %v1141
        %v1143 = vpop.f32.mrb[0].mxu0
        %1144 = vmatprep.mubr.f32.mxu0 0.0
        %1145 = vmatmul.mubr.f32.gmra.mrb[0].mxu0 %v613
        %v1146 = vpop.f32.mrb[0].mxu0
        %v1147 = vadd.f32 0.0, %v1146
        %v1148 = vpop.f32.mrb[0].mxu0
        %1149 = vmatprep.mubr.f32.mxu0 0.0
        %1150 = vmatmul.mubr.f32.gmra.mrb[0].mxu0 %v616
        %v1151 = vpop.f32.mrb[0].mxu0
        %v1152 = vadd.f32 0.0, %v1151
        %v1153 = vpop.f32.mrb[0].mxu0
        %1154 = vmatprep.mubr.f32.mxu0 0.0
        %1155 = vmatmul.mubr.f32.gmra.mrb[0].mxu0 %v619
        %v1156 = vpop.f32.mrb[0].mxu0
        %v1157 = vadd.f32 0.0, %v1156
        %v1158 = vpop.f32.mrb[0].mxu0
        %1159 = vmatprep.mubr.f32.mxu0 0.0
        %1160 = vmatmul.mubr.f32.gmra.mrb[0].mxu0 %v622
        %v1161 = vpop.f32.mrb[0].mxu0
        %v1162 = vadd.f32 0.0, %v1161
        %v1163 = vpop.f32.mrb[0].mxu0
        %1164 = vmatprep.mubr.f32.mxu0 0.0
        %1165 = vmatmul.mubr.f32.gmra.mrb[0].mxu0 %v625
        %v1166 = vpop.f32.mrb[0].mxu0
        %v1167 = vadd.f32 0.0, %v1166
        %v1168 = vpop.f32.mrb[0].mxu0
        %1169 = vmatprep.mubr.f32.mxu0 0.0
        %1170 = vmatmul.mubr.f32.gmra.mrb[0].mxu0 %v628
        %v1171 = vpop.f32.mrb[0].mxu0
        %v1172 = vadd.f32 0.0, %v1171
        %v1173 = vpop.f32.mrb[0].mxu0
        %1174 = vmatprep.mubr.f32.mxu0 0.0
        %1175 = vmatmul.mubr.f32.gmra.mrb[0].mxu0 %v631
        %v1176 = vpop.f32.mrb[0].mxu0
        %v1177 = vadd.f32 0.0, %v1176
        %v1178 = vpop.f32.mrb[0].mxu0
        %1179 = vmatprep.mubr.f32.mxu0 0.0
        %1180 = vmatmul.mubr.f32.gmra.mrb[0].mxu0 %v634
        %v1181 = vpop.f32.mrb[0].mxu0
        %v1182 = vadd.f32 0.0, %v1181
        %v1183 = vpop.f32.mrb[0].mxu0
        %1184 = vmatprep.mubr.f32.mxu0 0.0
        %1185 = vmatmul.mubr.f32.gmra.mrb[0].mxu0 %v637
        %v1186 = vpop.f32.mrb[0].mxu0
        %v1187 = vadd.f32 0.0, %v1186
        %v1188 = vpop.f32.mrb[0].mxu0
        %1189 = vmatprep.mubr.f32.mxu0 0.0
        %1190 = vmatmul.mubr.f32.gmra.mrb[0].mxu0 %v640
        %v1191 = vpop.f32.mrb[0].mxu0
        %v1192 = vadd.f32 0.0, %v1191
        %v1193 = vpop.f32.mrb[0].mxu0
        %1194 = vmatprep.mubr.f32.mxu0 0.0
        %1195 = vmatmul.mubr.f32.gmra.mrb[0].mxu0 %v643
        %v1196 = vpop.f32.mrb[0].mxu0
        %v1197 = vadd.f32 0.0, %v1196
        %v1198 = vpop.f32.mrb[0].mxu0
        %1199 = vmatprep.mubr.f32.mxu0 0.0
        %1200 = vmatmul.mubr.f32.gmra.mrb[0].mxu0 %v646
        %v1201 = vpop.f32.mrb[0].mxu0
        %v1202 = vadd.f32 0.0, %v1201
        %v1203 = vpop.f32.mrb[0].mxu0
        %1204 = vmatprep.mubr.f32.mxu0 0.0
        %1205 = vmatmul.mubr.f32.gmra.mrb[0].mxu0 %v649
        %v1206 = vpop.f32.mrb[0].mxu0
        %v1207 = vadd.f32 0.0, %v1206
        %v1208 = vpop.f32.mrb[0].mxu0
        %1209 = vmatprep.mubr.f32.mxu0 0.0
        %1210 = vmatmul.mubr.f32.gmra.mrb[0].mxu0 %v652
        %v1211 = vpop.f32.mrb[0].mxu0
        %v1212 = vadd.f32 0.0, %v1211
        %v1213 = vpop.f32.mrb[0].mxu0
        %1214 = vmatprep.mubr.f32.mxu0 0.0
        %1215 = vmatmul.mubr.f32.gmra.mrb[0].mxu0 %v655
        %v1216 = vpop.f32.mrb[0].mxu0
        %v1217 = vadd.f32 0.0, %v1216
        %v1218 = vpop.f32.mrb[0].mxu0
        %1219 = vmatprep.mubr.f32.mxu0 0.0
        %1220 = vmatmul.mubr.f32.gmra.mrb[0].mxu0 %v658
        %v1221 = vpop.f32.mrb[0].mxu0
        %v1222 = vadd.f32 0.0, %v1221
        %v1223 = vpop.f32.mrb[0].mxu0
        %1224 = vmatprep.mubr.f32.mxu0 0.0
        %1225 = vmatmul.mubr.f32.gmra.mrb[0].mxu0 %v661
        %v1226 = vpop.f32.mrb[0].mxu0
        %v1227 = vadd.f32 0.0, %v1226
        %v1228 = vpop.f32.mrb[0].mxu0
        %1229 = vmatprep.mubr.f32.mxu0 0.0
        %1230 = vmatmul.mubr.f32.gmra.mrb[0].mxu0 %v664
        %v1231 = vpop.f32.mrb[0].mxu0
        %v1232 = vadd.f32 0.0, %v1231
        %v1233 = vpop.f32.mrb[0].mxu0
        %1234 = vmatprep.mubr.f32.mxu0 0.0
        %1235 = vmatmul.mubr.f32.gmra.mrb[0].mxu0 %v667
        %v1236 = vpop.f32.mrb[0].mxu0
        %v1237 = vadd.f32 0.0, %v1236
        %v1238 = vpop.f32.mrb[0].mxu0
        %1239 = vmatprep.mubr.f32.mxu0 0.0
        %1240 = vmatmul.mubr.f32.gmra.mrb[0].mxu0 %v670
        %v1241 = vpop.f32.mrb[0].mxu0
        %v1242 = vadd.f32 0.0, %v1241
        %v1243 = vpop.f32.mrb[0].mxu0
        %1244 = vmatprep.mubr.f32.mxu0 0.0
        %1245 = vmatmul.mubr.f32.gmra.mrb[0].mxu0 %v673
        %v1246 = vpop.f32.mrb[0].mxu0
        %v1247 = vadd.f32 0.0, %v1246
        %v1248 = vpop.f32.mrb[0].mxu0
        %1249 = vmatprep.mubr.f32.mxu0 0.0
        %1250 = vmatmul.mubr.f32.gmra.mrb[0].mxu0 %v676
        %v1251 = vpop.f32.mrb[0].mxu0
        %v1252 = vadd.f32 0.0, %v1251
        %v1253 = vpop.f32.mrb[0].mxu0
        %1254 = vmatprep.mubr.f32.mxu0 0.0
        %1255 = vmatmul.mubr.f32.gmra.mrb[0].mxu0 %v679
        %v1256 = vpop.f32.mrb[0].mxu0
        %v1257 = vadd.f32 0.0, %v1256
        %v1258 = vpop.f32.mrb[0].mxu0
        %1259 = vmatprep.mubr.f32.mxu0 0.0
        %1260 = vmatmul.mubr.f32.gmra.mrb[0].mxu0 %v682
        %v1261 = vpop.f32.mrb[0].mxu0
        %v1262 = vadd.f32 0.0, %v1261
        %v1263 = vpop.f32.mrb[0].mxu0
        %1264 = vmatprep.mubr.f32.mxu0 0.0
        %1265 = vmatmul.mubr.f32.gmra.mrb[0].mxu0 %v685
        %v1266 = vpop.f32.mrb[0].mxu0
        %v1267 = vadd.f32 0.0, %v1266
        %v1268 = vpop.f32.mrb[0].mxu0
        %1269 = vmatprep.mubr.f32.mxu0 0.0
        %1270 = vmatmul.mubr.f32.gmra.mrb[0].mxu0 %v688
        %v1271 = vpop.f32.mrb[0].mxu0
        %v1272 = vadd.f32 0.0, %v1271
        %v1273 = vpop.f32.mrb[0].mxu0
        %1274 = vmatprep.mubr.f32.mxu0 0.0
        %1275 = vmatmul.mubr.f32.gmra.mrb[0].mxu0 %v691
        %v1276 = vpop.f32.mrb[0].mxu0
        %v1277 = vadd.f32 0.0, %v1276
        %v1278 = vpop.f32.mrb[0].mxu0
        %1279 = vmatprep.mubr.f32.mxu0 0.0
        %1280 = vmatmul.mubr.f32.gmra.mrb[0].mxu0 %v694
        %v1281 = vpop.f32.mrb[0].mxu0
        %v1282 = vadd.f32 0.0, %v1281
        %v1283 = vpop.f32.mrb[0].mxu0
        %1284 = vmatprep.mubr.f32.mxu0 0.0
        %1285 = vmatmul.mubr.f32.gmra.mrb[0].mxu0 %v697
        %v1286 = vpop.f32.mrb[0].mxu0
        %v1287 = vadd.f32 0.0, %v1286
        %v1288 = vpop.f32.mrb[0].mxu0
        %1289 = vmatprep.mubr.f32.mxu0 0.0
        %1290 = vmatmul.mubr.f32.gmra.mrb[0].mxu0 %v700
        %v1291 = vpop.f32.mrb[0].mxu0
        %v1292 = vadd.f32 0.0, %v1291
        %v1293 = vpop.f32.mrb[0].mxu0
        %1294 = vmatprep.mubr.f32.mxu0 0.0
        %1295 = vmatmul.mubr.f32.gmra.mrb[0].mxu0 %v703
        %v1296 = vpop.f32.mrb[0].mxu0
        %v1297 = vadd.f32 0.0, %v1296
        %v1298 = vpop.f32.mrb[0].mxu0
        %1299 = vmatprep.mubr.f32.mxu0 0.0
        %1300 = vmatmul.mubr.f32.gmra.mrb[0].mxu0 %v706
        %v1301 = vpop.f32.mrb[0].mxu0
        %v1302 = vadd.f32 0.0, %v1301
        %v1303 = vpop.f32.mrb[0].mxu0
        %1304 = vmatprep.mubr.f32.mxu0 0.0
        %1305 = vmatmul.mubr.f32.gmra.mrb[0].mxu0 %v709
        %v1306 = vpop.f32.mrb[0].mxu0
        %v1307 = vadd.f32 0.0, %v1306
        %v1308 = vpop.f32.mrb[0].mxu0
        %1309 = vmatprep.mubr.f32.mxu0 0.0
        %1310 = vmatmul.mubr.f32.gmra.mrb[0].mxu0 %v712
        %v1311 = vpop.f32.mrb[0].mxu0
        %v1312 = vadd.f32 0.0, %v1311
        %v1313 = vpop.f32.mrb[0].mxu0
        %1314 = vmatprep.mubr.f32.mxu0 0.0
        %1315 = vmatmul.mubr.f32.gmra.mrb[0].mxu0 %v715
        %v1316 = vpop.f32.mrb[0].mxu0
        %v1317 = vadd.f32 0.0, %v1316
        %v1318 = vpop.f32.mrb[0].mxu0
        %1319 = vmatprep.mubr.f32.mxu0 0.0
        %1320 = vmatmul.mubr.f32.gmra.mrb[0].mxu0 %v718
        %v1321 = vpop.f32.mrb[0].mxu0
        %v1322 = vadd.f32 0.0, %v1321
        %v1323 = vpop.f32.mrb[0].mxu0
        %1324 = vmatprep.mubr.f32.mxu0 0.0
        %1325 = vmatmul.mubr.f32.gmra.mrb[0].mxu0 %v721
        %v1326 = vpop.f32.mrb[0].mxu0
        %v1327 = vadd.f32 0.0, %v1326
        %v1328 = vpop.f32.mrb[0].mxu0
        %1329 = vmatprep.mubr.f32.mxu0 0.0
        %1330 = vmatmul.mubr.f32.gmra.mrb[0].mxu0 %v724
        %v1331 = vpop.f32.mrb[0].mxu0
        %v1332 = vadd.f32 0.0, %v1331
        %v1333 = vpop.f32.mrb[0].mxu0
        %1334 = vmatprep.mubr.f32.mxu0 0.0
        %1335 = vmatmul.mubr.f32.gmra.mrb[0].mxu0 %v727
        %v1336 = vpop.f32.mrb[0].mxu0
        %v1337 = vadd.f32 0.0, %v1336
        %v1338 = vpop.f32.mrb[0].mxu0
        %1339 = vmatprep.mubr.f32.mxu0 0.0
        %1340 = vmatmul.mubr.f32.gmra.mrb[0].mxu0 %v730
        %v1341 = vpop.f32.mrb[0].mxu0
        %v1342 = vadd.f32 0.0, %v1341
        %v1343 = vpop.f32.mrb[0].mxu0
        %1344 = vmatprep.mubr.f32.mxu0 0.0
        %1345 = vmatmul.mubr.f32.gmra.mrb[0].mxu0 %v733
        %v1346 = vpop.f32.mrb[0].mxu0
        %v1347 = vadd.f32 0.0, %v1346
        %v1348 = vpop.f32.mrb[0].mxu0
        %1349 = vmatprep.mubr.f32.mxu0 0.0
        %1350 = vmatmul.mubr.f32.gmra.mrb[0].mxu0 %v736
        %v1351 = vpop.f32.mrb[0].mxu0
        %v1352 = vadd.f32 0.0, %v1351
        %v1353 = vpop.f32.mrb[0].mxu0
        %1354 = vmatprep.mubr.f32.mxu0 0.0
        %1355 = vmatmul.mubr.f32.gmra.mrb[0].mxu0 %v739
        %v1356 = vpop.f32.mrb[0].mxu0
        %v1357 = vadd.f32 0.0, %v1356
        %v1358 = vpop.f32.mrb[0].mxu0
        %1359 = vmatprep.mubr.f32.mxu0 0.0
        %1360 = vmatmul.mubr.f32.gmra.mrb[0].mxu0 %v742
        %v1361 = vpop.f32.mrb[0].mxu0
        %v1362 = vadd.f32 0.0, %v1361
        %v1363 = vpop.f32.mrb[0].mxu0
        %1364 = vmatprep.mubr.f32.mxu0 0.0
        %1365 = vmatmul.mubr.f32.gmra.mrb[0].mxu0 %v745
        %v1366 = vpop.f32.mrb[0].mxu0
        %v1367 = vadd.f32 0.0, %v1366
        %v1368 = vpop.f32.mrb[0].mxu0
        %1369 = vmatprep.mubr.f32.mxu0 0.0
        %1370 = vmatmul.mubr.f32.gmra.mrb[0].mxu0 %v748
        %v1371 = vpop.f32.mrb[0].mxu0
        %v1372 = vadd.f32 0.0, %v1371
        %v1373 = vpop.f32.mrb[0].mxu0
        %1374 = vmatprep.mubr.f32.mxu0 0.0
        %1375 = vmatmul.mubr.f32.gmra.mrb[0].mxu0 %v751
        %v1376 = vpop.f32.mrb[0].mxu0
        %v1377 = vadd.f32 0.0, %v1376
        %v1378 = vpop.f32.mrb[0].mxu0
        %1379 = vmatprep.mubr.f32.mxu0 0.0
        %1380 = vmatmul.mubr.f32.gmra.mrb[0].mxu0 %v754
        %v1381 = vpop.f32.mrb[0].mxu0
        %v1382 = vadd.f32 0.0, %v1381
        %v1383 = vpop.f32.mrb[0].mxu0
        %1384 = vmatprep.mubr.f32.mxu0 0.0
        %1385 = vmatmul.mubr.f32.gmra.mrb[0].mxu0 %v757
        %v1386 = vpop.f32.mrb[0].mxu0
        %v1387 = vadd.f32 0.0, %v1386
        %v1388 = vpop.f32.mrb[0].mxu0
        %1389 = vmatprep.mubr.f32.mxu0 0.0
        %1390 = vmatmul.mubr.f32.gmra.mrb[0].mxu0 %v760
        %v1391 = vpop.f32.mrb[0].mxu0
        %v1392 = vadd.f32 0.0, %v1391
        %v1393 = vpop.f32.mrb[0].mxu0
        %1394 = vmatprep.mubr.f32.mxu0 0.0
        %1395 = vmatmul.mubr.f32.gmra.mrb[0].mxu0 %v763
        %v1396 = vpop.f32.mrb[0].mxu0
        %v1397 = vadd.f32 0.0, %v1396
        %v1398 = vpop.f32.mrb[0].mxu0
        %1399 = vmatprep.mubr.f32.mxu0 0.0
        %1400 = vmatmul.mubr.f32.gmra.mrb[0].mxu0 %v766
        %v1401 = vpop.f32.mrb[0].mxu0
        %v1402 = vadd.f32 0.0, %v1401
        %v1403 = vpop.f32.mrb[0].mxu0
        %1404 = vmatprep.mubr.f32.mxu0 0.0
        %1405 = vmatmul.mubr.f32.gmra.mrb[0].mxu0 %v769
        %v1406 = vpop.f32.mrb[0].mxu0
        %v1407 = vadd.f32 0.0, %v1406
        %v1408 = vpop.f32.mrb[0].mxu0
        %1409 = vmatprep.mubr.f32.mxu0 0.0
        %1410 = vmatmul.mubr.f32.gmra.mrb[0].mxu0 %v772
        %v1411 = vpop.f32.mrb[0].mxu0
        %v1412 = vadd.f32 0.0, %v1411
        %v1413 = vpop.f32.mrb[0].mxu0
        %1414 = vmatprep.mubr.f32.mxu0 0.0
        %1415 = vmatmul.mubr.f32.gmra.mrb[0].mxu0 %v775
        %v1416 = vpop.f32.mrb[0].mxu0
        %v1417 = vadd.f32 0.0, %v1416
        %v1418 = vpop.f32.mrb[0].mxu0
        %1419 = vmatprep.mubr.f32.mxu0 0.0
        %1420 = vmatmul.mubr.f32.gmra.mrb[0].mxu0 %v778
        %v1421 = vpop.f32.mrb[0].mxu0
        %v1422 = vadd.f32 0.0, %v1421
        %v1423 = vpop.f32.mrb[0].mxu0
        %1424 = vmatprep.mubr.f32.mxu0 0.0
        %1425 = vmatmul.mubr.f32.gmra.mrb[0].mxu0 %v781
        %v1426 = vpop.f32.mrb[0].mxu0
        %v1427 = vadd.f32 0.0, %v1426
        %v1428 = vpop.f32.mrb[0].mxu0
        %1429 = vmatprep.mubr.f32.mxu0 0.0
        %1430 = vmatmul.mubr.f32.gmra.mrb[0].mxu0 %v784
        %v1431 = vpop.f32.mrb[0].mxu0
        %v1432 = vadd.f32 0.0, %v1431
        %v1433 = vpop.f32.mrb[0].mxu0
        %1434 = vmatprep.mubr.f32.mxu0 0.0
        %1435 = vmatmul.mubr.f32.gmra.mrb[0].mxu0 %v787
        %v1436 = vpop.f32.mrb[0].mxu0
        %v1437 = vadd.f32 0.0, %v1436
        %v1438 = vpop.f32.mrb[0].mxu0
        %1439 = vmatprep.mubr.f32.mxu0 0.0
        %1440 = vmatmul.mubr.f32.gmra.mrb[0].mxu0 %v790
        %v1441 = vpop.f32.mrb[0].mxu0
        %v1442 = vadd.f32 0.0, %v1441
        %v1443 = vpop.f32.mrb[0].mxu0
        %1444 = vmatprep.mubr.f32.mxu0 0.0
        %1445 = vmatmul.mubr.f32.gmra.mrb[0].mxu0 %v793
        %v1446 = vpop.f32.mrb[0].mxu0
        %v1447 = vadd.f32 0.0, %v1446
        %v1448 = vpop.f32.mrb[0].mxu0
        %1449 = vmatprep.mubr.f32.mxu0 0.0
        %1450 = vmatmul.mubr.f32.gmra.mrb[0].mxu0 %v796
        %v1451 = vpop.f32.mrb[0].mxu0
        %v1452 = vadd.f32 0.0, %v1451
        %v1453 = vpop.f32.mrb[0].mxu0
        %1454 = vmatprep.mubr.f32.mxu0 0.0
        %1455 = vmatmul.mubr.f32.gmra.mrb[0].mxu0 %v799
        %v1456 = vpop.f32.mrb[0].mxu0
        %v1457 = vadd.f32 0.0, %v1456
        %v1458 = vpop.f32.mrb[0].mxu0
        %1459 = vmatprep.mubr.f32.mxu0 0.0
        %1460 = vmatmul.mubr.f32.gmra.mrb[0].mxu0 %v802
        %v1461 = vpop.f32.mrb[0].mxu0
        %v1462 = vadd.f32 0.0, %v1461
        %v1463 = vpop.f32.mrb[0].mxu0
        %1464 = vmatprep.mubr.f32.mxu0 0.0
        %1465 = vmatmul.mubr.f32.gmra.mrb[0].mxu0 %v805
        %v1466 = vpop.f32.mrb[0].mxu0
        %v1467 = vadd.f32 0.0, %v1466
        %v1468 = vpop.f32.mrb[0].mxu0
        %1469 = vmatprep.mubr.f32.mxu0 0.0
        %1470 = vmatmul.mubr.f32.gmra.mrb[0].mxu0 %v808
        %v1471 = vpop.f32.mrb[0].mxu0
        %v1472 = vadd.f32 0.0, %v1471
        %v1473 = vpop.f32.mrb[0].mxu0
        %1474 = vmatprep.mubr.f32.mxu0 0.0
        %1475 = vmatmul.mubr.f32.gmra.mrb[0].mxu0 %v811
        %v1476 = vpop.f32.mrb[0].mxu0
        %v1477 = vadd.f32 0.0, %v1476
        %v1478 = vpop.f32.mrb[0].mxu0
        %1479 = vmatprep.mubr.f32.mxu0 0.0
        %1480 = vmatmul.mubr.f32.gmra.mrb[0].mxu0 %v814
        %v1481 = vpop.f32.mrb[0].mxu0
        %v1482 = vadd.f32 0.0, %v1481
        %v1483 = vpop.f32.mrb[0].mxu0
        %1484 = vmatprep.mubr.f32.mxu0 0.0
        %1485 = vmatmul.mubr.f32.gmra.mrb[0].mxu0 %v817
        %v1486 = vpop.f32.mrb[0].mxu0
        %v1487 = vadd.f32 0.0, %v1486
        %v1488 = vpop.f32.mrb[0].mxu0
        %1489 = vmatprep.mubr.f32.mxu0 0.0
        %1490 = vmatmul.mubr.f32.gmra.mrb[0].mxu0 %v820
        %v1491 = vpop.f32.mrb[0].mxu0
        %v1492 = vadd.f32 0.0, %v1491
        %v1493 = vpop.f32.mrb[0].mxu0
        %1494 = vmatprep.mubr.f32.mxu0 0.0
        %1495 = vmatmul.mubr.f32.gmra.mrb[0].mxu0 %v823
        %v1496 = vpop.f32.mrb[0].mxu0
        %v1497 = vadd.f32 0.0, %v1496
        %v1498 = vpop.f32.mrb[0].mxu0
        %1499 = vmatprep.mubr.f32.mxu0 0.0
        %1500 = vmatmul.mubr.f32.gmra.mrb[0].mxu0 %v826
        %v1501 = vpop.f32.mrb[0].mxu0
        %v1502 = vadd.f32 0.0, %v1501
        %v1503 = vpop.f32.mrb[0].mxu0
        %1504 = vmatprep.mubr.f32.mxu0 0.0
        %1505 = vmatmul.mubr.f32.gmra.mrb[0].mxu0 %v829
        %v1506 = vpop.f32.mrb[0].mxu0
        %v1507 = vadd.f32 0.0, %v1506
        %v1508 = vpop.f32.mrb[0].mxu0
        %1509 = vmatprep.mubr.f32.mxu0 0.0
        %1510 = vmatmul.mubr.f32.gmra.mrb[0].mxu0 %v832
        %v1511 = vpop.f32.mrb[0].mxu0
        %v1512 = vadd.f32 0.0, %v1511
        %v1513 = vpop.f32.mrb[0].mxu0
        %1514 = vmatprep.mubr.f32.mxu0 0.0
        %1515 = vmatmul.mubr.f32.gmra.mrb[0].mxu0 %v835
        %v1516 = vpop.f32.mrb[0].mxu0
        %v1517 = vadd.f32 0.0, %v1516
        %v1518 = vpop.f32.mrb[0].mxu0
        %1519 = vmatprep.mubr.f32.mxu0 0.0
        %1520 = vmatmul.mubr.f32.gmra.mrb[0].mxu0 %v838
        %v1521 = vpop.f32.mrb[0].mxu0
        %v1522 = vadd.f32 0.0, %v1521
        %v1523 = vpop.f32.mrb[0].mxu0
        %1524 = vmatprep.mubr.f32.mxu0 0.0
        %1525 = vmatmul.mubr.f32.gmra.mrb[0].mxu0 %v841
        %v1526 = vpop.f32.mrb[0].mxu0
        %v1527 = vadd.f32 0.0, %v1526
        %v1528 = vpop.f32.mrb[0].mxu0
        %1529 = vmatprep.mubr.f32.mxu0 0.0
        %1530 = vmatmul.mubr.f32.gmra.mrb[0].mxu0 %v844
        %v1531 = vpop.f32.mrb[0].mxu0
        %v1532 = vadd.f32 0.0, %v1531
        %v1533 = vpop.f32.mrb[0].mxu0
        %1534 = vmatprep.mubr.f32.mxu0 0.0
        %1535 = vmatmul.mubr.f32.gmra.mrb[0].mxu0 %v847
        %v1536 = vpop.f32.mrb[0].mxu0
        %v1537 = vadd.f32 0.0, %v1536
        %v1538 = vpop.f32.mrb[0].mxu0
        %1539 = vmatprep.mubr.f32.mxu0 0.0
        %1540 = vmatmul.mubr.f32.gmra.mrb[0].mxu0 %v850
        %v1541 = vpop.f32.mrb[0].mxu0
        %v1542 = vadd.f32 0.0, %v1541
        %v1543 = vpop.f32.mrb[0].mxu0
        %1544 = vmatprep.mubr.f32.mxu0 0.0
        %1545 = vmatmul.mubr.f32.gmra.mrb[0].mxu0 %v853
        %v1546 = vpop.f32.mrb[0].mxu0
        %v1547 = vadd.f32 0.0, %v1546
        %v1548 = vpop.f32.mrb[0].mxu0
        %1549 = vmatprep.mubr.f32.mxu0 0.0
        %1550 = vmatmul.mubr.f32.gmra.mrb[0].mxu0 %v856
        %v1551 = vpop.f32.mrb[0].mxu0
        %v1552 = vadd.f32 0.0, %v1551
        %v1553 = vpop.f32.mrb[0].mxu0
        %1554 = vmatprep.mubr.f32.mxu0 0.0
        %1555 = vmatmul.mubr.f32.gmra.mrb[0].mxu0 %v859
        %v1556 = vpop.f32.mrb[0].mxu0
        %v1557 = vadd.f32 0.0, %v1556
        %v1558 = vpop.f32.mrb[0].mxu0
        %1559 = vmatprep.mubr.f32.mxu0 0.0
        %1560 = vmatmul.mubr.f32.gmra.mrb[0].mxu0 %v862
        %v1561 = vpop.f32.mrb[0].mxu0
        %v1562 = vadd.f32 0.0, %v1561
        %v1563 = vpop.f32.mrb[0].mxu0
        %1564 = vmatprep.mubr.f32.mxu0 0.0
        %1565 = vmatmul.mubr.f32.gmra.mrb[0].mxu0 %v865
        %v1566 = vpop.f32.mrb[0].mxu0
        %v1567 = vadd.f32 0.0, %v1566
        %v1568 = vpop.f32.mrb[0].mxu0
        %1569 = vmatprep.mubr.f32.mxu0 0.0
        %1570 = vmatmul.mubr.f32.gmra.mrb[0].mxu0 %v868
        %v1571 = vpop.f32.mrb[0].mxu0
        %v1572 = vadd.f32 0.0, %v1571
        %v1573 = vpop.f32.mrb[0].mxu0
        %1574 = vmatprep.mubr.f32.mxu0 0.0
        %1575 = vmatmul.mubr.f32.gmra.mrb[0].mxu0 %v871
        %v1576 = vpop.f32.mrb[0].mxu0
        %v1577 = vadd.f32 0.0, %v1576
        %v1578 = vpop.f32.mrb[0].mxu0
        %1579 = vmatprep.mubr.f32.mxu0 0.0
        %1580 = vmatmul.mubr.f32.gmra.mrb[0].mxu0 %v874
        %v1581 = vpop.f32.mrb[0].mxu0
        %v1582 = vadd.f32 0.0, %v1581
        %v1583 = vpop.f32.mrb[0].mxu0
        %1584 = vdwg.mxu0
        %v1585 = vmax.f32 %v947, %v1107
        %v1586 = vmax.f32 %v952, %v1112
        %v1587 = vmax.f32 %v957, %v1117
        %v1588 = vmax.f32 %v962, %v1122
        %v1589 = vmax.f32 %v967, %v1127
        %v1590 = vmax.f32 %v972, %v1132
        %v1591 = vmax.f32 %v977, %v1137
        %v1592 = vmax.f32 %v982, %v1142
        %v1593 = vmax.f32 %v987, %v1147
        %v1594 = vmax.f32 %v992, %v1152
        %v1595 = vmax.f32 %v997, %v1157
        %v1596 = vmax.f32 %v1002, %v1162
        %v1597 = vmax.f32 %v1007, %v1167
        %v1598 = vmax.f32 %v1012, %v1172
        %v1599 = vmax.f32 %v1017, %v1177
        %v1600 = vmax.f32 %v1022, %v1182
        %v1601 = vmax.f32 %v1027, %v1187
        %v1602 = vmax.f32 %v1032, %v1192
        %v1603 = vmax.f32 %v1037, %v1197
        %v1604 = vmax.f32 %v1042, %v1202
        %v1605 = vmax.f32 %v1047, %v1207
        %v1606 = vmax.f32 %v1052, %v1212
        %v1607 = vmax.f32 %v1057, %v1217
        %v1608 = vmax.f32 %v1062, %v1222
        %v1609 = vmax.f32 %v1067, %v1227
        %v1610 = vmax.f32 %v1072, %v1232
        %v1611 = vmax.f32 %v1077, %v1237
        %v1612 = vmax.f32 %v1082, %v1242
        %v1613 = vmax.f32 %v1087, %v1247
        %v1614 = vmax.f32 %v1092, %v1252
        %v1615 = vmax.f32 %v1097, %v1257
        %v1616 = vmax.f32 %v1102, %v1262
        %v1617 = vmax.f32 %v1267, %v1427
        %v1618 = vmax.f32 %v1272, %v1432
        %v1619 = vmax.f32 %v1277, %v1437
        %v1620 = vmax.f32 %v1282, %v1442
        %v1621 = vmax.f32 %v1287, %v1447
        %v1622 = vmax.f32 %v1292, %v1452
        %v1623 = vmax.f32 %v1297, %v1457
        %v1624 = vmax.f32 %v1302, %v1462
        %v1625 = vmax.f32 %v1307, %v1467
        %v1626 = vmax.f32 %v1312, %v1472
        %v1627 = vmax.f32 %v1317, %v1477
        %v1628 = vmax.f32 %v1322, %v1482
        %v1629 = vmax.f32 %v1327, %v1487
        %v1630 = vmax.f32 %v1332, %v1492
        %v1631 = vmax.f32 %v1337, %v1497
        %v1632 = vmax.f32 %v1342, %v1502
        %v1633 = vmax.f32 %v1347, %v1507
        %v1634 = vmax.f32 %v1352, %v1512
        %v1635 = vmax.f32 %v1357, %v1517
        %v1636 = vmax.f32 %v1362, %v1522
        %v1637 = vmax.f32 %v1367, %v1527
        %v1638 = vmax.f32 %v1372, %v1532
        %v1639 = vmax.f32 %v1377, %v1537
        %v1640 = vmax.f32 %v1382, %v1542
        %v1641 = vmax.f32 %v1387, %v1547
        %v1642 = vmax.f32 %v1392, %v1552
        %v1643 = vmax.f32 %v1397, %v1557
        %v1644 = vmax.f32 %v1402, %v1562
        %v1645 = vmax.f32 %v1407, %v1567
        %v1646 = vmax.f32 %v1412, %v1572
        %v1647 = vmax.f32 %v1417, %v1577
        %v1648 = vmax.f32 %v1422, %v1582
        %v1649 = vmax.f32 %v1585, %v1617
        %v1650 = vmax.f32 %v1586, %v1618
        %v1651 = vmax.f32 %v1587, %v1619
        %v1652 = vmax.f32 %v1588, %v1620
        %v1653 = vmax.f32 %v1589, %v1621
        %v1654 = vmax.f32 %v1590, %v1622
        %v1655 = vmax.f32 %v1591, %v1623
        %v1656 = vmax.f32 %v1592, %v1624
        %v1657 = vmax.f32 %v1593, %v1625
        %v1658 = vmax.f32 %v1594, %v1626
        %v1659 = vmax.f32 %v1595, %v1627
        %v1660 = vmax.f32 %v1596, %v1628
        %v1661 = vmax.f32 %v1597, %v1629
        %v1662 = vmax.f32 %v1598, %v1630
        %v1663 = vmax.f32 %v1599, %v1631
        %v1664 = vmax.f32 %v1600, %v1632
        %v1665 = vmax.f32 %v1601, %v1633
        %v1666 = vmax.f32 %v1602, %v1634
        %v1667 = vmax.f32 %v1603, %v1635
        %v1668 = vmax.f32 %v1604, %v1636
        %v1669 = vmax.f32 %v1605, %v1637
        %v1670 = vmax.f32 %v1606, %v1638
        %v1671 = vmax.f32 %v1607, %v1639
        %v1672 = vmax.f32 %v1608, %v1640
        %v1673 = vmax.f32 %v1609, %v1641
        %v1674 = vmax.f32 %v1610, %v1642
        %v1675 = vmax.f32 %v1611, %v1643
        %v1676 = vmax.f32 %v1612, %v1644
        %v1677 = vmax.f32 %v1613, %v1645
        %v1678 = vmax.f32 %v1614, %v1646
        %v1679 = vmax.f32 %v1615, %v1647
        %v1680 = vmax.f32 %v1616, %v1648
        %v1681 = vld [vmem:[%s2] sm:$0x1]
        %v1683 = vlaneseq
        %v1684 = vshrl.u32 %v1683, 7
        %v1685 = vsub.s32 0, %v1684
        %v1686 = vrot.slane %v1681, %v1685
        %v1688 = vadd.f32 %v1649, %v1686
        %v1689 = vadd.f32 %v1650, %v1686
        %v1690 = vadd.f32 %v1651, %v1686
        %v1691 = vadd.f32 %v1652, %v1686
        %v1692 = vadd.f32 %v1653, %v1686
        %v1693 = vadd.f32 %v1654, %v1686
        %v1694 = vadd.f32 %v1655, %v1686
        %v1695 = vadd.f32 %v1656, %v1686
        %v1696 = vadd.f32 %v1657, %v1686
        %v1697 = vadd.f32 %v1658, %v1686
        %v1698 = vadd.f32 %v1659, %v1686
        %v1699 = vadd.f32 %v1660, %v1686
        %v1700 = vadd.f32 %v1661, %v1686
        %v1701 = vadd.f32 %v1662, %v1686
        %v1702 = vadd.f32 %v1663, %v1686
        %v1703 = vadd.f32 %v1664, %v1686
        %v1704 = vadd.f32 %v1665, %v1686
        %v1705 = vadd.f32 %v1666, %v1686
        %v1706 = vadd.f32 %v1667, %v1686
        %v1707 = vadd.f32 %v1668, %v1686
        %v1708 = vadd.f32 %v1669, %v1686
        %v1709 = vadd.f32 %v1670, %v1686
        %v1710 = vadd.f32 %v1671, %v1686
        %v1711 = vadd.f32 %v1672, %v1686
        %v1712 = vadd.f32 %v1673, %v1686
        %v1713 = vadd.f32 %v1674, %v1686
        %v1714 = vadd.f32 %v1675, %v1686
        %v1715 = vadd.f32 %v1676, %v1686
        %v1716 = vadd.f32 %v1677, %v1686
        %v1717 = vadd.f32 %v1678, %v1686
        %v1718 = vadd.f32 %v1679, %v1686
        %v1719 = vadd.f32 %v1680, %v1686
        %v1720 = vmax.f32 %v1688, 0.0
        %v1721 = vmax.f32 %v1689, 0.0
        %v1722 = vmax.f32 %v1690, 0.0
        %v1723 = vmax.f32 %v1691, 0.0
        %v1724 = vmax.f32 %v1692, 0.0
        %v1725 = vmax.f32 %v1693, 0.0
        %v1726 = vmax.f32 %v1694, 0.0
        %v1727 = vmax.f32 %v1695, 0.0
        %v1728 = vmax.f32 %v1696, 0.0
        %v1729 = vmax.f32 %v1697, 0.0
        %v1730 = vmax.f32 %v1698, 0.0
        %v1731 = vmax.f32 %v1699, 0.0
        %v1732 = vmax.f32 %v1700, 0.0
        %v1733 = vmax.f32 %v1701, 0.0
        %v1734 = vmax.f32 %v1702, 0.0
        %v1735 = vmax.f32 %v1703, 0.0
        %v1736 = vmax.f32 %v1704, 0.0
        %v1737 = vmax.f32 %v1705, 0.0
        %v1738 = vmax.f32 %v1706, 0.0
        %v1739 = vmax.f32 %v1707, 0.0
        %v1740 = vmax.f32 %v1708, 0.0
        %v1741 = vmax.f32 %v1709, 0.0
        %v1742 = vmax.f32 %v1710, 0.0
        %v1743 = vmax.f32 %v1711, 0.0
        %v1744 = vmax.f32 %v1712, 0.0
        %v1745 = vmax.f32 %v1713, 0.0
        %v1746 = vmax.f32 %v1714, 0.0
        %v1747 = vmax.f32 %v1715, 0.0
        %v1748 = vmax.f32 %v1716, 0.0
        %v1749 = vmax.f32 %v1717, 0.0
        %v1750 = vmax.f32 %v1718, 0.0
        %v1751 = vmax.f32 %v1719, 0.0
        %v1752 = vld [vmem:[%s3] sm:$0xff]
        %v1753 = vld [vmem:[%s3 + $0x8] sm:$0xff]
        %v1754 = vld [vmem:[%s3 + $0x10] sm:$0xff]
        %v1755 = vld [vmem:[%s3 + $0x18] sm:$0xff]
        %v1756 = vld [vmem:[%s3 + $0x20] sm:$0xff]
        %v1757 = vld [vmem:[%s3 + $0x28] sm:$0xff]
        %v1758 = vld [vmem:[%s3 + $0x30] sm:$0xff]
        %v1759 = vld [vmem:[%s3 + $0x38] sm:$0xff]
        %s1760 = scalar_lea.vmem %s3, 64
        %v1761 = vld [vmem:[%s1760] sm:$0xff]
        %v1762 = vld [vmem:[%s1760 + $0x8] sm:$0xff]
        %v1763 = vld [vmem:[%s1760 + $0x10] sm:$0xff]
        %v1764 = vld [vmem:[%s1760 + $0x18] sm:$0xff]
        %v1765 = vld [vmem:[%s1760 + $0x20] sm:$0xff]
        %v1766 = vld [vmem:[%s1760 + $0x28] sm:$0xff]
        %v1767 = vld [vmem:[%s1760 + $0x30] sm:$0xff]
        %v1768 = vld [vmem:[%s1760 + $0x38] sm:$0xff]
        %vm1769 = vcmask 523264
        %v1771 = vsel %vm1769, 0.0, 0
        %v1774 = vsel %vm1769, %v1728, 0
        %v1777 = vsel %vm1769, %v1729, 0
        %v1780 = vsel %vm1769, %v1730, 0
        %v1783 = vsel %vm1769, %v1731, 0
        %v1786 = vsel %vm1769, %v1732, 0
        %v1789 = vsel %vm1769, %v1733, 0
        %v1792 = vsel %vm1769, %v1734, 0
        %v1795 = vsel %vm1769, %v1735, 0
        %v1798 = vsel %vm1769, %v1744, 0
        %v1801 = vsel %vm1769, %v1745, 0
        %v1804 = vsel %vm1769, %v1746, 0
        %v1807 = vsel %vm1769, %v1747, 0
        %v1810 = vsel %vm1769, %v1748, 0
        %v1813 = vsel %vm1769, %v1749, 0
        %v1816 = vsel %vm1769, %v1750, 0
        %v1819 = vsel %vm1769, %v1751, 0
        %1821 = vmatprep.subr.mxu0 0.0
        %1822 = vmatpush1.msra.mxu0 %v1761
        %1823 = vmatprep.subr.mxu0 0.0
        %1824 = vmatpush1.msra.mxu0 %v1762
        %1825 = vmatprep.subr.mxu0 0.0
        %1826 = vmatpush1.msra.mxu0 %v1763
        %1827 = vmatprep.subr.mxu0 0.0
        %1828 = vmatpush1.msra.mxu0 %v1764
        %1829 = vmatprep.subr.mxu0 0.0
        %1830 = vmatpush1.msra.mxu0 %v1765
        %1831 = vmatprep.subr.mxu0 0.0
        %1832 = vmatpush1.msra.mxu0 %v1766
        %1833 = vmatprep.subr.mxu0 0.0
        %1834 = vmatpush1.msra.mxu0 %v1767
        %1835 = vmatprep.subr.mxu0 0.0
        %1836 = vmatpush1.msra.mxu0 %v1768
        %1837 = vmatprep.subr.mxu0 0.0
        %1838 = vmatpush1.msra.mxu0 0.0
        %1839 = vmatprep.subr.mxu0 0.0
        %1840 = vmatpush1.msra.mxu0 0.0
        %1841 = vmatprep.subr.mxu0 0.0
        %1842 = vmatpush1.msra.mxu0 0.0
        %1843 = vmatprep.subr.mxu0 0.0
        %1844 = vmatpush1.msra.mxu0 0.0
        %1845 = vmatprep.subr.mxu0 0.0
        %1846 = vmatpush1.msra.mxu0 0.0
        %1847 = vmatprep.subr.mxu0 0.0
        %1848 = vmatpush1.msra.mxu0 0.0
        %1849 = vmatprep.subr.mxu0 0.0
        %1850 = vmatpush1.msra.mxu0 0.0
        %1851 = vmatprep.subr.mxu0 0.0
        %1852 = vmatpush1.msra.mxu0 0.0
        %1853 = vmatprep.subr.mxu0 0.0
        %1854 = vmatpush1.msra.mxu0 0.0
        %1855 = vmatprep.subr.mxu0 0.0
        %1856 = vmatpush1.msra.mxu0 0.0
        %1857 = vmatprep.subr.mxu0 0.0
        %1858 = vmatpush1.msra.mxu0 0.0
        %1859 = vmatprep.subr.mxu0 0.0
        %1860 = vmatpush1.msra.mxu0 0.0
        %1861 = vmatprep.subr.mxu0 0.0
        %1862 = vmatpush1.msra.mxu0 0.0
        %1863 = vmatprep.subr.mxu0 0.0
        %1864 = vmatpush1.msra.mxu0 0.0
        %1865 = vmatprep.subr.mxu0 0.0
        %1866 = vmatpush1.msra.mxu0 0.0
        %1867 = vmatprep.subr.mxu0 0.0
        %1868 = vmatpush1.msra.mxu0 0.0
        %1869 = vmatprep.subr.mxu0 0.0
        %1870 = vmatpush1.msra.mxu0 0.0
        %1871 = vmatprep.subr.mxu0 0.0
        %1872 = vmatpush1.msra.mxu0 0.0
        %1873 = vmatprep.subr.mxu0 0.0
        %1874 = vmatpush1.msra.mxu0 0.0
        %1875 = vmatprep.subr.mxu0 0.0
        %1876 = vmatpush1.msra.mxu0 0.0
        %1877 = vmatprep.subr.mxu0 0.0
        %1878 = vmatpush1.msra.mxu0 0.0
        %1879 = vmatprep.subr.mxu0 0.0
        %1880 = vmatpush1.msra.mxu0 0.0
        %1881 = vmatprep.subr.mxu0 0.0
        %1882 = vmatpush1.msra.mxu0 0.0
        %1883 = vmatprep.subr.mxu0 0.0
        %1884 = vmatpush1.msra.mxu0 0.0
        %1885 = vmatprep.mubr.f32.mxu0 0.0
        %1886 = vmatmul.mubr.f32.gmra.mrb[0].mxu0 %v1771
        %v1887 = vpop.f32.mrb[0].mxu0
        %v1888 = vadd.f32 0.0, %v1887
        %v1889 = vpop.f32.mrb[0].mxu0
        %1890 = vmatprep.mubr.f32.mxu0 0.0
        %1891 = vmatmul.mubr.f32.gmra.mrb[0].mxu0 %v1771
        %v1892 = vpop.f32.mrb[0].mxu0
        %v1893 = vadd.f32 0.0, %v1892
        %v1894 = vpop.f32.mrb[0].mxu0
        %1895 = vmatprep.mubr.f32.mxu0 0.0
        %1896 = vmatmul.mubr.f32.gmra.mrb[0].mxu0 %v1771
        %v1897 = vpop.f32.mrb[0].mxu0
        %v1898 = vadd.f32 0.0, %v1897
        %v1899 = vpop.f32.mrb[0].mxu0
        %1900 = vmatprep.mubr.f32.mxu0 0.0
        %1901 = vmatmul.mubr.f32.gmra.mrb[0].mxu0 %v1771
        %v1902 = vpop.f32.mrb[0].mxu0
        %v1903 = vadd.f32 0.0, %v1902
        %v1904 = vpop.f32.mrb[0].mxu0
        %1905 = vmatprep.mubr.f32.mxu0 0.0
        %1906 = vmatmul.mubr.f32.gmra.mrb[0].mxu0 %v1771
        %v1907 = vpop.f32.mrb[0].mxu0
        %v1908 = vadd.f32 0.0, %v1907
        %v1909 = vpop.f32.mrb[0].mxu0
        %1910 = vmatprep.mubr.f32.mxu0 0.0
        %1911 = vmatmul.mubr.f32.gmra.mrb[0].mxu0 %v1774
        %v1912 = vpop.f32.mrb[0].mxu0
        %v1913 = vadd.f32 0.0, %v1912
        %v1914 = vpop.f32.mrb[0].mxu0
        %1915 = vmatprep.mubr.f32.mxu0 0.0
        %1916 = vmatmul.mubr.f32.gmra.mrb[0].mxu0 %v1777
        %v1917 = vpop.f32.mrb[0].mxu0
        %v1918 = vadd.f32 0.0, %v1917
        %v1919 = vpop.f32.mrb[0].mxu0
        %1920 = vmatprep.mubr.f32.mxu0 0.0
        %1921 = vmatmul.mubr.f32.gmra.mrb[0].mxu0 %v1780
        %v1922 = vpop.f32.mrb[0].mxu0
        %v1923 = vadd.f32 0.0, %v1922
        %v1924 = vpop.f32.mrb[0].mxu0
        %1925 = vmatprep.mubr.f32.mxu0 0.0
        %1926 = vmatmul.mubr.f32.gmra.mrb[0].mxu0 %v1783
        %v1927 = vpop.f32.mrb[0].mxu0
        %v1928 = vadd.f32 0.0, %v1927
        %v1929 = vpop.f32.mrb[0].mxu0
        %1930 = vmatprep.mubr.f32.mxu0 0.0
        %1931 = vmatmul.mubr.f32.gmra.mrb[0].mxu0 %v1786
        %v1932 = vpop.f32.mrb[0].mxu0
        %v1933 = vadd.f32 0.0, %v1932
        %v1934 = vpop.f32.mrb[0].mxu0
        %1935 = vmatprep.mubr.f32.mxu0 0.0
        %1936 = vmatmul.mubr.f32.gmra.mrb[0].mxu0 %v1789
        %v1937 = vpop.f32.mrb[0].mxu0
        %v1938 = vadd.f32 0.0, %v1937
        %v1939 = vpop.f32.mrb[0].mxu0
        %1940 = vmatprep.mubr.f32.mxu0 0.0
        %1941 = vmatmul.mubr.f32.gmra.mrb[0].mxu0 %v1792
        %v1942 = vpop.f32.mrb[0].mxu0
        %v1943 = vadd.f32 0.0, %v1942
        %v1944 = vpop.f32.mrb[0].mxu0
        %1945 = vmatprep.mubr.f32.mxu0 0.0
        %1946 = vmatmul.mubr.f32.gmra.mrb[0].mxu0 %v1795
        %v1947 = vpop.f32.mrb[0].mxu0
        %v1948 = vadd.f32 0.0, %v1947
        %v1949 = vpop.f32.mrb[0].mxu0
        %1950 = vmatprep.mubr.f32.mxu0 0.0
        %1951 = vmatmul.mubr.f32.gmra.mrb[0].mxu0 %v1771
        %v1952 = vpop.f32.mrb[0].mxu0
        %v1953 = vadd.f32 0.0, %v1952
        %v1954 = vpop.f32.mrb[0].mxu0
        %1955 = vmatprep.mubr.f32.mxu0 0.0
        %1956 = vmatmul.mubr.f32.gmra.mrb[0].mxu0 %v1771
        %v1957 = vpop.f32.mrb[0].mxu0
        %v1958 = vadd.f32 0.0, %v1957
        %v1959 = vpop.f32.mrb[0].mxu0
        %1960 = vmatprep.mubr.f32.mxu0 0.0
        %1961 = vmatmul.mubr.f32.gmra.mrb[0].mxu0 %v1771
        %v1962 = vpop.f32.mrb[0].mxu0
        %v1963 = vadd.f32 0.0, %v1962
        %v1964 = vpop.f32.mrb[0].mxu0
        %1965 = vmatprep.mubr.f32.mxu0 0.0
        %1966 = vmatmul.mubr.f32.gmra.mrb[0].mxu0 %v1771
        %v1967 = vpop.f32.mrb[0].mxu0
        %v1968 = vadd.f32 0.0, %v1967
        %v1969 = vpop.f32.mrb[0].mxu0
        %1970 = vmatprep.mubr.f32.mxu0 0.0
        %1971 = vmatmul.mubr.f32.gmra.mrb[0].mxu0 %v1771
        %v1972 = vpop.f32.mrb[0].mxu0
        %v1973 = vadd.f32 0.0, %v1972
        %v1974 = vpop.f32.mrb[0].mxu0
        %1975 = vmatprep.mubr.f32.mxu0 0.0
        %1976 = vmatmul.mubr.f32.gmra.mrb[0].mxu0 %v1771
        %v1977 = vpop.f32.mrb[0].mxu0
        %v1978 = vadd.f32 0.0, %v1977
        %v1979 = vpop.f32.mrb[0].mxu0
        %1980 = vmatprep.mubr.f32.mxu0 0.0
        %1981 = vmatmul.mubr.f32.gmra.mrb[0].mxu0 %v1771
        %v1982 = vpop.f32.mrb[0].mxu0
        %v1983 = vadd.f32 0.0, %v1982
        %v1984 = vpop.f32.mrb[0].mxu0
        %1985 = vmatprep.mubr.f32.mxu0 0.0
        %1986 = vmatmul.mubr.f32.gmra.mrb[0].mxu0 %v1771
        %v1987 = vpop.f32.mrb[0].mxu0
        %v1988 = vadd.f32 0.0, %v1987
        %v1989 = vpop.f32.mrb[0].mxu0
        %1990 = vmatprep.mubr.f32.mxu0 0.0
        %1991 = vmatmul.mubr.f32.gmra.mrb[0].mxu0 %v1798
        %v1992 = vpop.f32.mrb[0].mxu0
        %v1993 = vadd.f32 0.0, %v1992
        %v1994 = vpop.f32.mrb[0].mxu0
        %1995 = vmatprep.mubr.f32.mxu0 0.0
        %1996 = vmatmul.mubr.f32.gmra.mrb[0].mxu0 %v1801
        %v1997 = vpop.f32.mrb[0].mxu0
        %v1998 = vadd.f32 0.0, %v1997
        %v1999 = vpop.f32.mrb[0].mxu0
        %2000 = vmatprep.mubr.f32.mxu0 0.0
        %2001 = vmatmul.mubr.f32.gmra.mrb[0].mxu0 %v1804
        %v2002 = vpop.f32.mrb[0].mxu0
        %v2003 = vadd.f32 0.0, %v2002
        %v2004 = vpop.f32.mrb[0].mxu0
        %2005 = vmatprep.mubr.f32.mxu0 0.0
        %2006 = vmatmul.mubr.f32.gmra.mrb[0].mxu0 %v1807
        %v2007 = vpop.f32.mrb[0].mxu0
        %v2008 = vadd.f32 0.0, %v2007
        %v2009 = vpop.f32.mrb[0].mxu0
        %2010 = vmatprep.mubr.f32.mxu0 0.0
        %2011 = vmatmul.mubr.f32.gmra.mrb[0].mxu0 %v1810
        %v2012 = vpop.f32.mrb[0].mxu0
        %v2013 = vadd.f32 0.0, %v2012
        %v2014 = vpop.f32.mrb[0].mxu0
        %2015 = vmatprep.mubr.f32.mxu0 0.0
        %2016 = vmatmul.mubr.f32.gmra.mrb[0].mxu0 %v1813
        %v2017 = vpop.f32.mrb[0].mxu0
        %v2018 = vadd.f32 0.0, %v2017
        %v2019 = vpop.f32.mrb[0].mxu0
        %2020 = vmatprep.mubr.f32.mxu0 0.0
        %2021 = vmatmul.mubr.f32.gmra.mrb[0].mxu0 %v1816
        %v2022 = vpop.f32.mrb[0].mxu0
        %v2023 = vadd.f32 0.0, %v2022
        %v2024 = vpop.f32.mrb[0].mxu0
        %2025 = vmatprep.mubr.f32.mxu0 0.0
        %2026 = vmatmul.mubr.f32.gmra.mrb[0].mxu0 %v1819
        %v2027 = vpop.f32.mrb[0].mxu0
        %v2028 = vadd.f32 0.0, %v2027
        %v2029 = vpop.f32.mrb[0].mxu0
        %2030 = vmatprep.mubr.f32.mxu0 0.0
        %2031 = vmatmul.mubr.f32.gmra.mrb[0].mxu0 %v1771
        %v2032 = vpop.f32.mrb[0].mxu0
        %v2033 = vadd.f32 0.0, %v2032
        %v2034 = vpop.f32.mrb[0].mxu0
        %2035 = vmatprep.mubr.f32.mxu0 0.0
        %2036 = vmatmul.mubr.f32.gmra.mrb[0].mxu0 %v1771
        %v2037 = vpop.f32.mrb[0].mxu0
        %v2038 = vadd.f32 0.0, %v2037
        %v2039 = vpop.f32.mrb[0].mxu0
        %2040 = vmatprep.mubr.f32.mxu0 0.0
        %2041 = vmatmul.mubr.f32.gmra.mrb[0].mxu0 %v1771
        %v2042 = vpop.f32.mrb[0].mxu0
        %v2043 = vadd.f32 0.0, %v2042
        %v2044 = vpop.f32.mrb[0].mxu0
        %2045 = vdwg.mxu0
        %v2047 = vsel %vm1769, %v1720, 0
        %v2050 = vsel %vm1769, %v1721, 0
        %v2053 = vsel %vm1769, %v1722, 0
        %v2056 = vsel %vm1769, %v1723, 0
        %v2059 = vsel %vm1769, %v1724, 0
        %v2062 = vsel %vm1769, %v1725, 0
        %v2065 = vsel %vm1769, %v1726, 0
        %v2068 = vsel %vm1769, %v1727, 0
        %v2071 = vsel %vm1769, %v1736, 0
        %v2074 = vsel %vm1769, %v1737, 0
        %v2077 = vsel %vm1769, %v1738, 0
        %v2080 = vsel %vm1769, %v1739, 0
        %v2083 = vsel %vm1769, %v1740, 0
        %v2086 = vsel %vm1769, %v1741, 0
        %v2089 = vsel %vm1769, %v1742, 0
        %v2092 = vsel %vm1769, %v1743, 0
        %2094 = vmatprep.subr.mxu0 0.0
        %2095 = vmatpush1.msra.mxu0 %v1752
        %2096 = vmatprep.subr.mxu0 0.0
        %2097 = vmatpush1.msra.mxu0 %v1753
        %2098 = vmatprep.subr.mxu0 0.0
        %2099 = vmatpush1.msra.mxu0 %v1754
        %2100 = vmatprep.subr.mxu0 0.0
        %2101 = vmatpush1.msra.mxu0 %v1755
        %2102 = vmatprep.subr.mxu0 0.0
        %2103 = vmatpush1.msra.mxu0 %v1756
        %2104 = vmatprep.subr.mxu0 0.0
        %2105 = vmatpush1.msra.mxu0 %v1757
        %2106 = vmatprep.subr.mxu0 0.0
        %2107 = vmatpush1.msra.mxu0 %v1758
        %2108 = vmatprep.subr.mxu0 0.0
        %2109 = vmatpush1.msra.mxu0 %v1759
        %2110 = vmatprep.subr.mxu0 0.0
        %2111 = vmatpush1.msra.mxu0 0.0
        %2112 = vmatprep.subr.mxu0 0.0
        %2113 = vmatpush1.msra.mxu0 0.0
        %2114 = vmatprep.subr.mxu0 0.0
        %2115 = vmatpush1.msra.mxu0 0.0
        %2116 = vmatprep.subr.mxu0 0.0
        %2117 = vmatpush1.msra.mxu0 0.0
        %2118 = vmatprep.subr.mxu0 0.0
        %2119 = vmatpush1.msra.mxu0 0.0
        %2120 = vmatprep.subr.mxu0 0.0
        %2121 = vmatpush1.msra.mxu0 0.0
        %2122 = vmatprep.subr.mxu0 0.0
        %2123 = vmatpush1.msra.mxu0 0.0
        %2124 = vmatprep.subr.mxu0 0.0
        %2125 = vmatpush1.msra.mxu0 0.0
        %2126 = vmatprep.subr.mxu0 0.0
        %2127 = vmatpush1.msra.mxu0 0.0
        %2128 = vmatprep.subr.mxu0 0.0
        %2129 = vmatpush1.msra.mxu0 0.0
        %2130 = vmatprep.subr.mxu0 0.0
        %2131 = vmatpush1.msra.mxu0 0.0
        %2132 = vmatprep.subr.mxu0 0.0
        %2133 = vmatpush1.msra.mxu0 0.0
        %2134 = vmatprep.subr.mxu0 0.0
        %2135 = vmatpush1.msra.mxu0 0.0
        %2136 = vmatprep.subr.mxu0 0.0
        %2137 = vmatpush1.msra.mxu0 0.0
        %2138 = vmatprep.subr.mxu0 0.0
        %2139 = vmatpush1.msra.mxu0 0.0
        %2140 = vmatprep.subr.mxu0 0.0
        %2141 = vmatpush1.msra.mxu0 0.0
        %2142 = vmatprep.subr.mxu0 0.0
        %2143 = vmatpush1.msra.mxu0 0.0
        %2144 = vmatprep.subr.mxu0 0.0
        %2145 = vmatpush1.msra.mxu0 0.0
        %2146 = vmatprep.subr.mxu0 0.0
        %2147 = vmatpush1.msra.mxu0 0.0
        %2148 = vmatprep.subr.mxu0 0.0
        %2149 = vmatpush1.msra.mxu0 0.0
        %2150 = vmatprep.subr.mxu0 0.0
        %2151 = vmatpush1.msra.mxu0 0.0
        %2152 = vmatprep.subr.mxu0 0.0
        %2153 = vmatpush1.msra.mxu0 0.0
        %2154 = vmatprep.subr.mxu0 0.0
        %2155 = vmatpush1.msra.mxu0 0.0
        %2156 = vmatprep.subr.mxu0 0.0
        %2157 = vmatpush1.msra.mxu0 0.0
        %2158 = vmatprep.mubr.f32.mxu0 0.0
        %2159 = vmatmul.mubr.f32.gmra.mrb[0].mxu0 %v1771
        %v2160 = vpop.f32.mrb[0].mxu0
        %v2161 = vadd.f32 %v1888, %v2160
        %v2162 = vpop.f32.mrb[0].mxu0
        %2163 = vmatprep.mubr.f32.mxu0 0.0
        %2164 = vmatmul.mubr.f32.gmra.mrb[0].mxu0 %v1771
        %v2165 = vpop.f32.mrb[0].mxu0
        %v2166 = vadd.f32 %v1893, %v2165
        %v2167 = vpop.f32.mrb[0].mxu0
        %2168 = vmatprep.mubr.f32.mxu0 0.0
        %2169 = vmatmul.mubr.f32.gmra.mrb[0].mxu0 %v1771
        %v2170 = vpop.f32.mrb[0].mxu0
        %v2171 = vadd.f32 %v1898, %v2170
        %v2172 = vpop.f32.mrb[0].mxu0
        %2173 = vmatprep.mubr.f32.mxu0 0.0
        %2174 = vmatmul.mubr.f32.gmra.mrb[0].mxu0 %v1771
        %v2175 = vpop.f32.mrb[0].mxu0
        %v2176 = vadd.f32 %v1903, %v2175
        %v2177 = vpop.f32.mrb[0].mxu0
        %2178 = vmatprep.mubr.f32.mxu0 0.0
        %2179 = vmatmul.mubr.f32.gmra.mrb[0].mxu0 %v1771
        %v2180 = vpop.f32.mrb[0].mxu0
        %v2181 = vadd.f32 %v1908, %v2180
        %v2182 = vpop.f32.mrb[0].mxu0
        %2183 = vmatprep.mubr.f32.mxu0 0.0
        %2184 = vmatmul.mubr.f32.gmra.mrb[0].mxu0 %v2047
        %v2185 = vpop.f32.mrb[0].mxu0
        %v2186 = vadd.f32 %v1913, %v2185
        %v2187 = vpop.f32.mrb[0].mxu0
        %2188 = vmatprep.mubr.f32.mxu0 0.0
        %2189 = vmatmul.mubr.f32.gmra.mrb[0].mxu0 %v2050
        %v2190 = vpop.f32.mrb[0].mxu0
        %v2191 = vadd.f32 %v1918, %v2190
        %v2192 = vpop.f32.mrb[0].mxu0
        %2193 = vmatprep.mubr.f32.mxu0 0.0
        %2194 = vmatmul.mubr.f32.gmra.mrb[0].mxu0 %v2053
        %v2195 = vpop.f32.mrb[0].mxu0
        %v2196 = vadd.f32 %v1923, %v2195
        %v2197 = vpop.f32.mrb[0].mxu0
        %2198 = vmatprep.mubr.f32.mxu0 0.0
        %2199 = vmatmul.mubr.f32.gmra.mrb[0].mxu0 %v2056
        %v2200 = vpop.f32.mrb[0].mxu0
        %v2201 = vadd.f32 %v1928, %v2200
        %v2202 = vpop.f32.mrb[0].mxu0
        %2203 = vmatprep.mubr.f32.mxu0 0.0
        %2204 = vmatmul.mubr.f32.gmra.mrb[0].mxu0 %v2059
        %v2205 = vpop.f32.mrb[0].mxu0
        %v2206 = vadd.f32 %v1933, %v2205
        %v2207 = vpop.f32.mrb[0].mxu0
        %2208 = vmatprep.mubr.f32.mxu0 0.0
        %2209 = vmatmul.mubr.f32.gmra.mrb[0].mxu0 %v2062
        %v2210 = vpop.f32.mrb[0].mxu0
        %v2211 = vadd.f32 %v1938, %v2210
        %v2212 = vpop.f32.mrb[0].mxu0
        %2213 = vmatprep.mubr.f32.mxu0 0.0
        %2214 = vmatmul.mubr.f32.gmra.mrb[0].mxu0 %v2065
        %v2215 = vpop.f32.mrb[0].mxu0
        %v2216 = vadd.f32 %v1943, %v2215
        %v2217 = vpop.f32.mrb[0].mxu0
        %2218 = vmatprep.mubr.f32.mxu0 0.0
        %2219 = vmatmul.mubr.f32.gmra.mrb[0].mxu0 %v2068
        %v2220 = vpop.f32.mrb[0].mxu0
        %v2221 = vadd.f32 %v1948, %v2220
        %v2222 = vpop.f32.mrb[0].mxu0
        %2223 = vmatprep.mubr.f32.mxu0 0.0
        %2224 = vmatmul.mubr.f32.gmra.mrb[0].mxu0 %v1771
        %v2225 = vpop.f32.mrb[0].mxu0
        %v2226 = vadd.f32 %v1953, %v2225
        %v2227 = vpop.f32.mrb[0].mxu0
        %2228 = vmatprep.mubr.f32.mxu0 0.0
        %2229 = vmatmul.mubr.f32.gmra.mrb[0].mxu0 %v1771
        %v2230 = vpop.f32.mrb[0].mxu0
        %v2231 = vadd.f32 %v1958, %v2230
        %v2232 = vpop.f32.mrb[0].mxu0
        %2233 = vmatprep.mubr.f32.mxu0 0.0
        %2234 = vmatmul.mubr.f32.gmra.mrb[0].mxu0 %v1771
        %v2235 = vpop.f32.mrb[0].mxu0
        %v2236 = vadd.f32 %v1963, %v2235
        %v2237 = vpop.f32.mrb[0].mxu0
        %2238 = vmatprep.mubr.f32.mxu0 0.0
        %2239 = vmatmul.mubr.f32.gmra.mrb[0].mxu0 %v1771
        %v2240 = vpop.f32.mrb[0].mxu0
        %v2241 = vadd.f32 %v1968, %v2240
        %v2242 = vpop.f32.mrb[0].mxu0
        %2243 = vmatprep.mubr.f32.mxu0 0.0
        %2244 = vmatmul.mubr.f32.gmra.mrb[0].mxu0 %v1771
        %v2245 = vpop.f32.mrb[0].mxu0
        %v2246 = vadd.f32 %v1973, %v2245
        %v2247 = vpop.f32.mrb[0].mxu0
        %2248 = vmatprep.mubr.f32.mxu0 0.0
        %2249 = vmatmul.mubr.f32.gmra.mrb[0].mxu0 %v1771
        %v2250 = vpop.f32.mrb[0].mxu0
        %v2251 = vadd.f32 %v1978, %v2250
        %v2252 = vpop.f32.mrb[0].mxu0
        %2253 = vmatprep.mubr.f32.mxu0 0.0
        %2254 = vmatmul.mubr.f32.gmra.mrb[0].mxu0 %v1771
        %v2255 = vpop.f32.mrb[0].mxu0
        %v2256 = vadd.f32 %v1983, %v2255
        %v2257 = vpop.f32.mrb[0].mxu0
        %2258 = vmatprep.mubr.f32.mxu0 0.0
        %2259 = vmatmul.mubr.f32.gmra.mrb[0].mxu0 %v1771
        %v2260 = vpop.f32.mrb[0].mxu0
        %v2261 = vadd.f32 %v1988, %v2260
        %v2262 = vpop.f32.mrb[0].mxu0
        %2263 = vmatprep.mubr.f32.mxu0 0.0
        %2264 = vmatmul.mubr.f32.gmra.mrb[0].mxu0 %v2071
        %v2265 = vpop.f32.mrb[0].mxu0
        %v2266 = vadd.f32 %v1993, %v2265
        %v2267 = vpop.f32.mrb[0].mxu0
        %2268 = vmatprep.mubr.f32.mxu0 0.0
        %2269 = vmatmul.mubr.f32.gmra.mrb[0].mxu0 %v2074
        %v2270 = vpop.f32.mrb[0].mxu0
        %v2271 = vadd.f32 %v1998, %v2270
        %v2272 = vpop.f32.mrb[0].mxu0
        %2273 = vmatprep.mubr.f32.mxu0 0.0
        %2274 = vmatmul.mubr.f32.gmra.mrb[0].mxu0 %v2077
        %v2275 = vpop.f32.mrb[0].mxu0
        %v2276 = vadd.f32 %v2003, %v2275
        %v2277 = vpop.f32.mrb[0].mxu0
        %2278 = vmatprep.mubr.f32.mxu0 0.0
        %2279 = vmatmul.mubr.f32.gmra.mrb[0].mxu0 %v2080
        %v2280 = vpop.f32.mrb[0].mxu0
        %v2281 = vadd.f32 %v2008, %v2280
        %v2282 = vpop.f32.mrb[0].mxu0
        %2283 = vmatprep.mubr.f32.mxu0 0.0
        %2284 = vmatmul.mubr.f32.gmra.mrb[0].mxu0 %v2083
        %v2285 = vpop.f32.mrb[0].mxu0
        %v2286 = vadd.f32 %v2013, %v2285
        %v2287 = vpop.f32.mrb[0].mxu0
        %2288 = vmatprep.mubr.f32.mxu0 0.0
        %2289 = vmatmul.mubr.f32.gmra.mrb[0].mxu0 %v2086
        %v2290 = vpop.f32.mrb[0].mxu0
        %v2291 = vadd.f32 %v2018, %v2290
        %v2292 = vpop.f32.mrb[0].mxu0
        %2293 = vmatprep.mubr.f32.mxu0 0.0
        %2294 = vmatmul.mubr.f32.gmra.mrb[0].mxu0 %v2089
        %v2295 = vpop.f32.mrb[0].mxu0
        %v2296 = vadd.f32 %v2023, %v2295
        %v2297 = vpop.f32.mrb[0].mxu0
        %2298 = vmatprep.mubr.f32.mxu0 0.0
        %2299 = vmatmul.mubr.f32.gmra.mrb[0].mxu0 %v2092
        %v2300 = vpop.f32.mrb[0].mxu0
        %v2301 = vadd.f32 %v2028, %v2300
        %v2302 = vpop.f32.mrb[0].mxu0
        %2303 = vmatprep.mubr.f32.mxu0 0.0
        %2304 = vmatmul.mubr.f32.gmra.mrb[0].mxu0 %v1771
        %v2305 = vpop.f32.mrb[0].mxu0
        %v2306 = vadd.f32 %v2033, %v2305
        %v2307 = vpop.f32.mrb[0].mxu0
        %2308 = vmatprep.mubr.f32.mxu0 0.0
        %2309 = vmatmul.mubr.f32.gmra.mrb[0].mxu0 %v1771
        %v2310 = vpop.f32.mrb[0].mxu0
        %v2311 = vadd.f32 %v2038, %v2310
        %v2312 = vpop.f32.mrb[0].mxu0
        %2313 = vmatprep.mubr.f32.mxu0 0.0
        %2314 = vmatmul.mubr.f32.gmra.mrb[0].mxu0 %v1771
        %v2315 = vpop.f32.mrb[0].mxu0
        %v2316 = vadd.f32 %v2043, %v2315
        %v2317 = vpop.f32.mrb[0].mxu0
        %2318 = vdwg.mxu0
        %s2319 = scalar_lea.vmem %s3, 128
        %v2320 = vld [vmem:[%s2319] sm:$0xff]
        %v2321 = vld [vmem:[%s2319 + $0x8] sm:$0xff]
        %v2322 = vld [vmem:[%s2319 + $0x10] sm:$0xff]
        %v2323 = vld [vmem:[%s2319 + $0x18] sm:$0xff]
        %v2324 = vld [vmem:[%s2319 + $0x20] sm:$0xff]
        %v2325 = vld [vmem:[%s2319 + $0x28] sm:$0xff]
        %v2326 = vld [vmem:[%s2319 + $0x30] sm:$0xff]
        %v2327 = vld [vmem:[%s2319 + $0x38] sm:$0xff]
        %2328 = vmatprep.subr.mxu0 0.0
        %2329 = vmatpush1.msra.mxu0 %v2320
        %2330 = vmatprep.subr.mxu0 0.0
        %2331 = vmatpush1.msra.mxu0 %v2321
        %2332 = vmatprep.subr.mxu0 0.0
        %2333 = vmatpush1.msra.mxu0 %v2322
        %2334 = vmatprep.subr.mxu0 0.0
        %2335 = vmatpush1.msra.mxu0 %v2323
        %2336 = vmatprep.subr.mxu0 0.0
        %2337 = vmatpush1.msra.mxu0 %v2324
        %2338 = vmatprep.subr.mxu0 0.0
        %2339 = vmatpush1.msra.mxu0 %v2325
        %2340 = vmatprep.subr.mxu0 0.0
        %2341 = vmatpush1.msra.mxu0 %v2326
        %2342 = vmatprep.subr.mxu0 0.0
        %2343 = vmatpush1.msra.mxu0 %v2327
        %2344 = vmatprep.subr.mxu0 0.0
        %2345 = vmatpush1.msra.mxu0 0.0
        %2346 = vmatprep.subr.mxu0 0.0
        %2347 = vmatpush1.msra.mxu0 0.0
        %2348 = vmatprep.subr.mxu0 0.0
        %2349 = vmatpush1.msra.mxu0 0.0
        %2350 = vmatprep.subr.mxu0 0.0
        %2351 = vmatpush1.msra.mxu0 0.0
        %2352 = vmatprep.subr.mxu0 0.0
        %2353 = vmatpush1.msra.mxu0 0.0
        %2354 = vmatprep.subr.mxu0 0.0
        %2355 = vmatpush1.msra.mxu0 0.0
        %2356 = vmatprep.subr.mxu0 0.0
        %2357 = vmatpush1.msra.mxu0 0.0
        %2358 = vmatprep.subr.mxu0 0.0
        %2359 = vmatpush1.msra.mxu0 0.0
        %2360 = vmatprep.subr.mxu0 0.0
        %2361 = vmatpush1.msra.mxu0 0.0
        %2362 = vmatprep.subr.mxu0 0.0
        %2363 = vmatpush1.msra.mxu0 0.0
        %2364 = vmatprep.subr.mxu0 0.0
        %2365 = vmatpush1.msra.mxu0 0.0
        %2366 = vmatprep.subr.mxu0 0.0
        %2367 = vmatpush1.msra.mxu0 0.0
        %2368 = vmatprep.subr.mxu0 0.0
        %2369 = vmatpush1.msra.mxu0 0.0
        %2370 = vmatprep.subr.mxu0 0.0
        %2371 = vmatpush1.msra.mxu0 0.0
        %2372 = vmatprep.subr.mxu0 0.0
        %2373 = vmatpush1.msra.mxu0 0.0
        %2374 = vmatprep.subr.mxu0 0.0
        %2375 = vmatpush1.msra.mxu0 0.0
        %2376 = vmatprep.subr.mxu0 0.0
        %2377 = vmatpush1.msra.mxu0 0.0
        %2378 = vmatprep.subr.mxu0 0.0
        %2379 = vmatpush1.msra.mxu0 0.0
        %2380 = vmatprep.subr.mxu0 0.0
        %2381 = vmatpush1.msra.mxu0 0.0
        %2382 = vmatprep.subr.mxu0 0.0
        %2383 = vmatpush1.msra.mxu0 0.0
        %2384 = vmatprep.subr.mxu0 0.0
        %2385 = vmatpush1.msra.mxu0 0.0
        %2386 = vmatprep.subr.mxu0 0.0
        %2387 = vmatpush1.msra.mxu0 0.0
        %2388 = vmatprep.subr.mxu0 0.0
        %2389 = vmatpush1.msra.mxu0 0.0
        %2390 = vmatprep.subr.mxu0 0.0
        %2391 = vmatpush1.msra.mxu0 0.0
        %2392 = vmatprep.mubr.f32.mxu0 0.0
        %2393 = vmatmul.mubr.f32.gmra.mrb[0].mxu0 %v1771
        %v2394 = vpop.f32.mrb[0].mxu0
        %v2395 = vadd.f32 0.0, %v2394
        %v2396 = vpop.f32.mrb[0].mxu0
        %2397 = vmatprep.mubr.f32.mxu0 0.0
        %2398 = vmatmul.mubr.f32.gmra.mrb[0].mxu0 %v1771
        %v2399 = vpop.f32.mrb[0].mxu0
        %v2400 = vadd.f32 0.0, %v2399
        %v2401 = vpop.f32.mrb[0].mxu0
        %2402 = vmatprep.mubr.f32.mxu0 0.0
        %2403 = vmatmul.mubr.f32.gmra.mrb[0].mxu0 %v1771
        %v2404 = vpop.f32.mrb[0].mxu0
        %v2405 = vadd.f32 0.0, %v2404
        %v2406 = vpop.f32.mrb[0].mxu0
        %2407 = vmatprep.mubr.f32.mxu0 0.0
        %2408 = vmatmul.mubr.f32.gmra.mrb[0].mxu0 %v1771
        %v2409 = vpop.f32.mrb[0].mxu0
        %v2410 = vadd.f32 0.0, %v2409
        %v2411 = vpop.f32.mrb[0].mxu0
        %2412 = vmatprep.mubr.f32.mxu0 0.0
        %2413 = vmatmul.mubr.f32.gmra.mrb[0].mxu0 %v1771
        %v2414 = vpop.f32.mrb[0].mxu0
        %v2415 = vadd.f32 0.0, %v2414
        %v2416 = vpop.f32.mrb[0].mxu0
        %2417 = vmatprep.mubr.f32.mxu0 0.0
        %2418 = vmatmul.mubr.f32.gmra.mrb[0].mxu0 %v2071
        %v2419 = vpop.f32.mrb[0].mxu0
        %v2420 = vadd.f32 0.0, %v2419
        %v2421 = vpop.f32.mrb[0].mxu0
        %2422 = vmatprep.mubr.f32.mxu0 0.0
        %2423 = vmatmul.mubr.f32.gmra.mrb[0].mxu0 %v2074
        %v2424 = vpop.f32.mrb[0].mxu0
        %v2425 = vadd.f32 0.0, %v2424
        %v2426 = vpop.f32.mrb[0].mxu0
        %2427 = vmatprep.mubr.f32.mxu0 0.0
        %2428 = vmatmul.mubr.f32.gmra.mrb[0].mxu0 %v2077
        %v2429 = vpop.f32.mrb[0].mxu0
        %v2430 = vadd.f32 0.0, %v2429
        %v2431 = vpop.f32.mrb[0].mxu0
        %2432 = vmatprep.mubr.f32.mxu0 0.0
        %2433 = vmatmul.mubr.f32.gmra.mrb[0].mxu0 %v2080
        %v2434 = vpop.f32.mrb[0].mxu0
        %v2435 = vadd.f32 0.0, %v2434
        %v2436 = vpop.f32.mrb[0].mxu0
        %2437 = vmatprep.mubr.f32.mxu0 0.0
        %2438 = vmatmul.mubr.f32.gmra.mrb[0].mxu0 %v2083
        %v2439 = vpop.f32.mrb[0].mxu0
        %v2440 = vadd.f32 0.0, %v2439
        %v2441 = vpop.f32.mrb[0].mxu0
        %2442 = vmatprep.mubr.f32.mxu0 0.0
        %2443 = vmatmul.mubr.f32.gmra.mrb[0].mxu0 %v2086
        %v2444 = vpop.f32.mrb[0].mxu0
        %v2445 = vadd.f32 0.0, %v2444
        %v2446 = vpop.f32.mrb[0].mxu0
        %2447 = vmatprep.mubr.f32.mxu0 0.0
        %2448 = vmatmul.mubr.f32.gmra.mrb[0].mxu0 %v2089
        %v2449 = vpop.f32.mrb[0].mxu0
        %v2450 = vadd.f32 0.0, %v2449
        %v2451 = vpop.f32.mrb[0].mxu0
        %2452 = vmatprep.mubr.f32.mxu0 0.0
        %2453 = vmatmul.mubr.f32.gmra.mrb[0].mxu0 %v2092
        %v2454 = vpop.f32.mrb[0].mxu0
        %v2455 = vadd.f32 0.0, %v2454
        %v2456 = vpop.f32.mrb[0].mxu0
        %2457 = vmatprep.mubr.f32.mxu0 0.0
        %2458 = vmatmul.mubr.f32.gmra.mrb[0].mxu0 %v1771
        %v2459 = vpop.f32.mrb[0].mxu0
        %v2460 = vadd.f32 0.0, %v2459
        %v2461 = vpop.f32.mrb[0].mxu0
        %2462 = vmatprep.mubr.f32.mxu0 0.0
        %2463 = vmatmul.mubr.f32.gmra.mrb[0].mxu0 %v1771
        %v2464 = vpop.f32.mrb[0].mxu0
        %v2465 = vadd.f32 0.0, %v2464
        %v2466 = vpop.f32.mrb[0].mxu0
        %2467 = vmatprep.mubr.f32.mxu0 0.0
        %2468 = vmatmul.mubr.f32.gmra.mrb[0].mxu0 %v1771
        %v2469 = vpop.f32.mrb[0].mxu0
        %v2470 = vadd.f32 0.0, %v2469
        %v2471 = vpop.f32.mrb[0].mxu0
        %2472 = vmatprep.mubr.f32.mxu0 0.0
        %2473 = vmatmul.mubr.f32.gmra.mrb[0].mxu0 %v1771
        %v2474 = vpop.f32.mrb[0].mxu0
        %v2475 = vadd.f32 0.0, %v2474
        %v2476 = vpop.f32.mrb[0].mxu0
        %2477 = vmatprep.mubr.f32.mxu0 0.0
        %2478 = vmatmul.mubr.f32.gmra.mrb[0].mxu0 %v1771
        %v2479 = vpop.f32.mrb[0].mxu0
        %v2480 = vadd.f32 0.0, %v2479
        %v2481 = vpop.f32.mrb[0].mxu0
        %2482 = vmatprep.mubr.f32.mxu0 0.0
        %2483 = vmatmul.mubr.f32.gmra.mrb[0].mxu0 %v1771
        %v2484 = vpop.f32.mrb[0].mxu0
        %v2485 = vadd.f32 0.0, %v2484
        %v2486 = vpop.f32.mrb[0].mxu0
        %2487 = vmatprep.mubr.f32.mxu0 0.0
        %2488 = vmatmul.mubr.f32.gmra.mrb[0].mxu0 %v1771
        %v2489 = vpop.f32.mrb[0].mxu0
        %v2490 = vadd.f32 0.0, %v2489
        %v2491 = vpop.f32.mrb[0].mxu0
        %2492 = vmatprep.mubr.f32.mxu0 0.0
        %2493 = vmatmul.mubr.f32.gmra.mrb[0].mxu0 %v2047
        %v2494 = vpop.f32.mrb[0].mxu0
        %v2495 = vadd.f32 0.0, %v2494
        %v2496 = vpop.f32.mrb[0].mxu0
        %2497 = vmatprep.mubr.f32.mxu0 0.0
        %2498 = vmatmul.mubr.f32.gmra.mrb[0].mxu0 %v2050
        %v2499 = vpop.f32.mrb[0].mxu0
        %v2500 = vadd.f32 0.0, %v2499
        %v2501 = vpop.f32.mrb[0].mxu0
        %2502 = vmatprep.mubr.f32.mxu0 0.0
        %2503 = vmatmul.mubr.f32.gmra.mrb[0].mxu0 %v2053
        %v2504 = vpop.f32.mrb[0].mxu0
        %v2505 = vadd.f32 0.0, %v2504
        %v2506 = vpop.f32.mrb[0].mxu0
        %2507 = vmatprep.mubr.f32.mxu0 0.0
        %2508 = vmatmul.mubr.f32.gmra.mrb[0].mxu0 %v2056
        %v2509 = vpop.f32.mrb[0].mxu0
        %v2510 = vadd.f32 0.0, %v2509
        %v2511 = vpop.f32.mrb[0].mxu0
        %2512 = vmatprep.mubr.f32.mxu0 0.0
        %2513 = vmatmul.mubr.f32.gmra.mrb[0].mxu0 %v2059
        %v2514 = vpop.f32.mrb[0].mxu0
        %v2515 = vadd.f32 0.0, %v2514
        %v2516 = vpop.f32.mrb[0].mxu0
        %2517 = vmatprep.mubr.f32.mxu0 0.0
        %2518 = vmatmul.mubr.f32.gmra.mrb[0].mxu0 %v2062
        %v2519 = vpop.f32.mrb[0].mxu0
        %v2520 = vadd.f32 0.0, %v2519
        %v2521 = vpop.f32.mrb[0].mxu0
        %2522 = vmatprep.mubr.f32.mxu0 0.0
        %2523 = vmatmul.mubr.f32.gmra.mrb[0].mxu0 %v2065
        %v2524 = vpop.f32.mrb[0].mxu0
        %v2525 = vadd.f32 0.0, %v2524
        %v2526 = vpop.f32.mrb[0].mxu0
        %2527 = vmatprep.mubr.f32.mxu0 0.0
        %2528 = vmatmul.mubr.f32.gmra.mrb[0].mxu0 %v2068
        %v2529 = vpop.f32.mrb[0].mxu0
        %v2530 = vadd.f32 0.0, %v2529
        %v2531 = vpop.f32.mrb[0].mxu0
        %2532 = vmatprep.mubr.f32.mxu0 0.0
        %2533 = vmatmul.mubr.f32.gmra.mrb[0].mxu0 %v1771
        %v2534 = vpop.f32.mrb[0].mxu0
        %v2535 = vadd.f32 0.0, %v2534
        %v2536 = vpop.f32.mrb[0].mxu0
        %2537 = vmatprep.mubr.f32.mxu0 0.0
        %2538 = vmatmul.mubr.f32.gmra.mrb[0].mxu0 %v1771
        %v2539 = vpop.f32.mrb[0].mxu0
        %v2540 = vadd.f32 0.0, %v2539
        %v2541 = vpop.f32.mrb[0].mxu0
        %2542 = vmatprep.mubr.f32.mxu0 0.0
        %2543 = vmatmul.mubr.f32.gmra.mrb[0].mxu0 %v1771
        %v2544 = vpop.f32.mrb[0].mxu0
        %v2545 = vadd.f32 0.0, %v2544
        %v2546 = vpop.f32.mrb[0].mxu0
        %2547 = vmatprep.mubr.f32.mxu0 0.0
        %2548 = vmatmul.mubr.f32.gmra.mrb[0].mxu0 %v1771
        %v2549 = vpop.f32.mrb[0].mxu0
        %v2550 = vadd.f32 0.0, %v2549
        %v2551 = vpop.f32.mrb[0].mxu0
        %2552 = vdwg.mxu0
        %v2553 = vadd.f32 %v2161, %v2395
        %v2554 = vadd.f32 %v2166, %v2400
        %v2555 = vadd.f32 %v2171, %v2405
        %v2556 = vadd.f32 %v2176, %v2410
        %v2557 = vadd.f32 %v2181, %v2415
        %v2558 = vadd.f32 %v2186, %v2420
        %v2559 = vadd.f32 %v2191, %v2425
        %v2560 = vadd.f32 %v2196, %v2430
        %v2561 = vadd.f32 %v2201, %v2435
        %v2562 = vadd.f32 %v2206, %v2440
        %v2563 = vadd.f32 %v2211, %v2445
        %v2564 = vadd.f32 %v2216, %v2450
        %v2565 = vadd.f32 %v2221, %v2455
        %v2566 = vadd.f32 %v2226, %v2460
        %v2567 = vadd.f32 %v2231, %v2465
        %v2568 = vadd.f32 %v2236, %v2470
        %v2569 = vadd.f32 %v2241, %v2475
        %v2570 = vadd.f32 %v2246, %v2480
        %v2571 = vadd.f32 %v2251, %v2485
        %v2572 = vadd.f32 %v2256, %v2490
        %v2573 = vadd.f32 %v2261, %v2495
        %v2574 = vadd.f32 %v2266, %v2500
        %v2575 = vadd.f32 %v2271, %v2505
        %v2576 = vadd.f32 %v2276, %v2510
        %v2577 = vadd.f32 %v2281, %v2515
        %v2578 = vadd.f32 %v2286, %v2520
        %v2579 = vadd.f32 %v2291, %v2525
        %v2580 = vadd.f32 %v2296, %v2530
        %v2581 = vadd.f32 %v2301, %v2535
        %v2582 = vadd.f32 %v2306, %v2540
        %v2583 = vadd.f32 %v2311, %v2545
        %v2584 = vadd.f32 %v2316, %v2550
        %s2585 = scalar_lea.vmem %s3, 192
        %v2586 = vld [vmem:[%s2585] sm:$0xff]
        %v2587 = vld [vmem:[%s2585 + $0x8] sm:$0xff]
        %v2588 = vld [vmem:[%s2585 + $0x10] sm:$0xff]
        %v2589 = vld [vmem:[%s2585 + $0x18] sm:$0xff]
        %v2590 = vld [vmem:[%s2585 + $0x20] sm:$0xff]
        %v2591 = vld [vmem:[%s2585 + $0x28] sm:$0xff]
        %v2592 = vld [vmem:[%s2585 + $0x30] sm:$0xff]
        %v2593 = vld [vmem:[%s2585 + $0x38] sm:$0xff]
        %2594 = vmatprep.subr.mxu0 0.0
        %2595 = vmatpush1.msra.mxu0 %v2586
        %2596 = vmatprep.subr.mxu0 0.0
        %2597 = vmatpush1.msra.mxu0 %v2587
        %2598 = vmatprep.subr.mxu0 0.0
        %2599 = vmatpush1.msra.mxu0 %v2588
        %2600 = vmatprep.subr.mxu0 0.0
        %2601 = vmatpush1.msra.mxu0 %v2589
        %2602 = vmatprep.subr.mxu0 0.0
        %2603 = vmatpush1.msra.mxu0 %v2590
        %2604 = vmatprep.subr.mxu0 0.0
        %2605 = vmatpush1.msra.mxu0 %v2591
        %2606 = vmatprep.subr.mxu0 0.0
        %2607 = vmatpush1.msra.mxu0 %v2592
        %2608 = vmatprep.subr.mxu0 0.0
        %2609 = vmatpush1.msra.mxu0 %v2593
        %2610 = vmatprep.subr.mxu0 0.0
        %2611 = vmatpush1.msra.mxu0 0.0
        %2612 = vmatprep.subr.mxu0 0.0
        %2613 = vmatpush1.msra.mxu0 0.0
        %2614 = vmatprep.subr.mxu0 0.0
        %2615 = vmatpush1.msra.mxu0 0.0
        %2616 = vmatprep.subr.mxu0 0.0
        %2617 = vmatpush1.msra.mxu0 0.0
        %2618 = vmatprep.subr.mxu0 0.0
        %2619 = vmatpush1.msra.mxu0 0.0
        %2620 = vmatprep.subr.mxu0 0.0
        %2621 = vmatpush1.msra.mxu0 0.0
        %2622 = vmatprep.subr.mxu0 0.0
        %2623 = vmatpush1.msra.mxu0 0.0
        %2624 = vmatprep.subr.mxu0 0.0
        %2625 = vmatpush1.msra.mxu0 0.0
        %2626 = vmatprep.subr.mxu0 0.0
        %2627 = vmatpush1.msra.mxu0 0.0
        %2628 = vmatprep.subr.mxu0 0.0
        %2629 = vmatpush1.msra.mxu0 0.0
        %2630 = vmatprep.subr.mxu0 0.0
        %2631 = vmatpush1.msra.mxu0 0.0
        %2632 = vmatprep.subr.mxu0 0.0
        %2633 = vmatpush1.msra.mxu0 0.0
        %2634 = vmatprep.subr.mxu0 0.0
        %2635 = vmatpush1.msra.mxu0 0.0
        %2636 = vmatprep.subr.mxu0 0.0
        %2637 = vmatpush1.msra.mxu0 0.0
        %2638 = vmatprep.subr.mxu0 0.0
        %2639 = vmatpush1.msra.mxu0 0.0
        %2640 = vmatprep.subr.mxu0 0.0
        %2641 = vmatpush1.msra.mxu0 0.0
        %2642 = vmatprep.subr.mxu0 0.0
        %2643 = vmatpush1.msra.mxu0 0.0
        %2644 = vmatprep.subr.mxu0 0.0
        %2645 = vmatpush1.msra.mxu0 0.0
        %2646 = vmatprep.subr.mxu0 0.0
        %2647 = vmatpush1.msra.mxu0 0.0
        %2648 = vmatprep.subr.mxu0 0.0
        %2649 = vmatpush1.msra.mxu0 0.0
        %2650 = vmatprep.subr.mxu0 0.0
        %2651 = vmatpush1.msra.mxu0 0.0
        %2652 = vmatprep.subr.mxu0 0.0
        %2653 = vmatpush1.msra.mxu0 0.0
        %2654 = vmatprep.subr.mxu0 0.0
        %2655 = vmatpush1.msra.mxu0 0.0
        %2656 = vmatprep.subr.mxu0 0.0
        %2657 = vmatpush1.msra.mxu0 0.0
        %2658 = vmatprep.mubr.f32.mxu0 0.0
        %2659 = vmatmul.mubr.f32.gmra.mrb[0].mxu0 %v1771
        %v2660 = vpop.f32.mrb[0].mxu0
        %v2661 = vadd.f32 0.0, %v2660
        %v2662 = vpop.f32.mrb[0].mxu0
        %2663 = vmatprep.mubr.f32.mxu0 0.0
        %2664 = vmatmul.mubr.f32.gmra.mrb[0].mxu0 %v1771
        %v2665 = vpop.f32.mrb[0].mxu0
        %v2666 = vadd.f32 0.0, %v2665
        %v2667 = vpop.f32.mrb[0].mxu0
        %2668 = vmatprep.mubr.f32.mxu0 0.0
        %2669 = vmatmul.mubr.f32.gmra.mrb[0].mxu0 %v1771
        %v2670 = vpop.f32.mrb[0].mxu0
        %v2671 = vadd.f32 0.0, %v2670
        %v2672 = vpop.f32.mrb[0].mxu0
        %2673 = vmatprep.mubr.f32.mxu0 0.0
        %2674 = vmatmul.mubr.f32.gmra.mrb[0].mxu0 %v1771
        %v2675 = vpop.f32.mrb[0].mxu0
        %v2676 = vadd.f32 0.0, %v2675
        %v2677 = vpop.f32.mrb[0].mxu0
        %2678 = vmatprep.mubr.f32.mxu0 0.0
        %2679 = vmatmul.mubr.f32.gmra.mrb[0].mxu0 %v1771
        %v2680 = vpop.f32.mrb[0].mxu0
        %v2681 = vadd.f32 0.0, %v2680
        %v2682 = vpop.f32.mrb[0].mxu0
        %2683 = vmatprep.mubr.f32.mxu0 0.0
        %2684 = vmatmul.mubr.f32.gmra.mrb[0].mxu0 %v1798
        %v2685 = vpop.f32.mrb[0].mxu0
        %v2686 = vadd.f32 0.0, %v2685
        %v2687 = vpop.f32.mrb[0].mxu0
        %2688 = vmatprep.mubr.f32.mxu0 0.0
        %2689 = vmatmul.mubr.f32.gmra.mrb[0].mxu0 %v1801
        %v2690 = vpop.f32.mrb[0].mxu0
        %v2691 = vadd.f32 0.0, %v2690
        %v2692 = vpop.f32.mrb[0].mxu0
        %2693 = vmatprep.mubr.f32.mxu0 0.0
        %2694 = vmatmul.mubr.f32.gmra.mrb[0].mxu0 %v1804
        %v2695 = vpop.f32.mrb[0].mxu0
        %v2696 = vadd.f32 0.0, %v2695
        %v2697 = vpop.f32.mrb[0].mxu0
        %2698 = vmatprep.mubr.f32.mxu0 0.0
        %2699 = vmatmul.mubr.f32.gmra.mrb[0].mxu0 %v1807
        %v2700 = vpop.f32.mrb[0].mxu0
        %v2701 = vadd.f32 0.0, %v2700
        %v2702 = vpop.f32.mrb[0].mxu0
        %2703 = vmatprep.mubr.f32.mxu0 0.0
        %2704 = vmatmul.mubr.f32.gmra.mrb[0].mxu0 %v1810
        %v2705 = vpop.f32.mrb[0].mxu0
        %v2706 = vadd.f32 0.0, %v2705
        %v2707 = vpop.f32.mrb[0].mxu0
        %2708 = vmatprep.mubr.f32.mxu0 0.0
        %2709 = vmatmul.mubr.f32.gmra.mrb[0].mxu0 %v1813
        %v2710 = vpop.f32.mrb[0].mxu0
        %v2711 = vadd.f32 0.0, %v2710
        %v2712 = vpop.f32.mrb[0].mxu0
        %2713 = vmatprep.mubr.f32.mxu0 0.0
        %2714 = vmatmul.mubr.f32.gmra.mrb[0].mxu0 %v1816
        %v2715 = vpop.f32.mrb[0].mxu0
        %v2716 = vadd.f32 0.0, %v2715
        %v2717 = vpop.f32.mrb[0].mxu0
        %2718 = vmatprep.mubr.f32.mxu0 0.0
        %2719 = vmatmul.mubr.f32.gmra.mrb[0].mxu0 %v1819
        %v2720 = vpop.f32.mrb[0].mxu0
        %v2721 = vadd.f32 0.0, %v2720
        %v2722 = vpop.f32.mrb[0].mxu0
        %2723 = vmatprep.mubr.f32.mxu0 0.0
        %2724 = vmatmul.mubr.f32.gmra.mrb[0].mxu0 %v1771
        %v2725 = vpop.f32.mrb[0].mxu0
        %v2726 = vadd.f32 0.0, %v2725
        %v2727 = vpop.f32.mrb[0].mxu0
        %2728 = vmatprep.mubr.f32.mxu0 0.0
        %2729 = vmatmul.mubr.f32.gmra.mrb[0].mxu0 %v1771
        %v2730 = vpop.f32.mrb[0].mxu0
        %v2731 = vadd.f32 0.0, %v2730
        %v2732 = vpop.f32.mrb[0].mxu0
        %2733 = vmatprep.mubr.f32.mxu0 0.0
        %2734 = vmatmul.mubr.f32.gmra.mrb[0].mxu0 %v1771
        %v2735 = vpop.f32.mrb[0].mxu0
        %v2736 = vadd.f32 0.0, %v2735
        %v2737 = vpop.f32.mrb[0].mxu0
        %2738 = vmatprep.mubr.f32.mxu0 0.0
        %2739 = vmatmul.mubr.f32.gmra.mrb[0].mxu0 %v1771
        %v2740 = vpop.f32.mrb[0].mxu0
        %v2741 = vadd.f32 0.0, %v2740
        %v2742 = vpop.f32.mrb[0].mxu0
        %2743 = vmatprep.mubr.f32.mxu0 0.0
        %2744 = vmatmul.mubr.f32.gmra.mrb[0].mxu0 %v1771
        %v2745 = vpop.f32.mrb[0].mxu0
        %v2746 = vadd.f32 0.0, %v2745
        %v2747 = vpop.f32.mrb[0].mxu0
        %2748 = vmatprep.mubr.f32.mxu0 0.0
        %2749 = vmatmul.mubr.f32.gmra.mrb[0].mxu0 %v1771
        %v2750 = vpop.f32.mrb[0].mxu0
        %v2751 = vadd.f32 0.0, %v2750
        %v2752 = vpop.f32.mrb[0].mxu0
        %2753 = vmatprep.mubr.f32.mxu0 0.0
        %2754 = vmatmul.mubr.f32.gmra.mrb[0].mxu0 %v1771
        %v2755 = vpop.f32.mrb[0].mxu0
        %v2756 = vadd.f32 0.0, %v2755
        %v2757 = vpop.f32.mrb[0].mxu0
        %2758 = vmatprep.mubr.f32.mxu0 0.0
        %2759 = vmatmul.mubr.f32.gmra.mrb[0].mxu0 %v1774
        %v2760 = vpop.f32.mrb[0].mxu0
        %v2761 = vadd.f32 0.0, %v2760
        %v2762 = vpop.f32.mrb[0].mxu0
        %2763 = vmatprep.mubr.f32.mxu0 0.0
        %2764 = vmatmul.mubr.f32.gmra.mrb[0].mxu0 %v1777
        %v2765 = vpop.f32.mrb[0].mxu0
        %v2766 = vadd.f32 0.0, %v2765
        %v2767 = vpop.f32.mrb[0].mxu0
        %2768 = vmatprep.mubr.f32.mxu0 0.0
        %2769 = vmatmul.mubr.f32.gmra.mrb[0].mxu0 %v1780
        %v2770 = vpop.f32.mrb[0].mxu0
        %v2771 = vadd.f32 0.0, %v2770
        %v2772 = vpop.f32.mrb[0].mxu0
        %2773 = vmatprep.mubr.f32.mxu0 0.0
        %2774 = vmatmul.mubr.f32.gmra.mrb[0].mxu0 %v1783
        %v2775 = vpop.f32.mrb[0].mxu0
        %v2776 = vadd.f32 0.0, %v2775
        %v2777 = vpop.f32.mrb[0].mxu0
        %2778 = vmatprep.mubr.f32.mxu0 0.0
        %2779 = vmatmul.mubr.f32.gmra.mrb[0].mxu0 %v1786
        %v2780 = vpop.f32.mrb[0].mxu0
        %v2781 = vadd.f32 0.0, %v2780
        %v2782 = vpop.f32.mrb[0].mxu0
        %2783 = vmatprep.mubr.f32.mxu0 0.0
        %2784 = vmatmul.mubr.f32.gmra.mrb[0].mxu0 %v1789
        %v2785 = vpop.f32.mrb[0].mxu0
        %v2786 = vadd.f32 0.0, %v2785
        %v2787 = vpop.f32.mrb[0].mxu0
        %2788 = vmatprep.mubr.f32.mxu0 0.0
        %2789 = vmatmul.mubr.f32.gmra.mrb[0].mxu0 %v1792
        %v2790 = vpop.f32.mrb[0].mxu0
        %v2791 = vadd.f32 0.0, %v2790
        %v2792 = vpop.f32.mrb[0].mxu0
        %2793 = vmatprep.mubr.f32.mxu0 0.0
        %2794 = vmatmul.mubr.f32.gmra.mrb[0].mxu0 %v1795
        %v2795 = vpop.f32.mrb[0].mxu0
        %v2796 = vadd.f32 0.0, %v2795
        %v2797 = vpop.f32.mrb[0].mxu0
        %2798 = vmatprep.mubr.f32.mxu0 0.0
        %2799 = vmatmul.mubr.f32.gmra.mrb[0].mxu0 %v1771
        %v2800 = vpop.f32.mrb[0].mxu0
        %v2801 = vadd.f32 0.0, %v2800
        %v2802 = vpop.f32.mrb[0].mxu0
        %2803 = vmatprep.mubr.f32.mxu0 0.0
        %2804 = vmatmul.mubr.f32.gmra.mrb[0].mxu0 %v1771
        %v2805 = vpop.f32.mrb[0].mxu0
        %v2806 = vadd.f32 0.0, %v2805
        %v2807 = vpop.f32.mrb[0].mxu0
        %2808 = vmatprep.mubr.f32.mxu0 0.0
        %2809 = vmatmul.mubr.f32.gmra.mrb[0].mxu0 %v1771
        %v2810 = vpop.f32.mrb[0].mxu0
        %v2811 = vadd.f32 0.0, %v2810
        %v2812 = vpop.f32.mrb[0].mxu0
        %2813 = vmatprep.mubr.f32.mxu0 0.0
        %2814 = vmatmul.mubr.f32.gmra.mrb[0].mxu0 %v1771
        %v2815 = vpop.f32.mrb[0].mxu0
        %v2816 = vadd.f32 0.0, %v2815
        %v2817 = vpop.f32.mrb[0].mxu0
        %2818 = vdwg.mxu0
        %v2819 = vadd.f32 %v2553, %v2661
        %v2820 = vadd.f32 %v2554, %v2666
        %v2821 = vadd.f32 %v2555, %v2671
        %v2822 = vadd.f32 %v2556, %v2676
        %v2823 = vadd.f32 %v2557, %v2681
        %v2824 = vadd.f32 %v2558, %v2686
        %v2825 = vadd.f32 %v2559, %v2691
        %v2826 = vadd.f32 %v2560, %v2696
        %v2827 = vadd.f32 %v2561, %v2701
        %v2828 = vadd.f32 %v2562, %v2706
        %v2829 = vadd.f32 %v2563, %v2711
        %v2830 = vadd.f32 %v2564, %v2716
        %v2831 = vadd.f32 %v2565, %v2721
        %v2832 = vadd.f32 %v2566, %v2726
        %v2833 = vadd.f32 %v2567, %v2731
        %v2834 = vadd.f32 %v2568, %v2736
        %v2835 = vadd.f32 %v2569, %v2741
        %v2836 = vadd.f32 %v2570, %v2746
        %v2837 = vadd.f32 %v2571, %v2751
        %v2838 = vadd.f32 %v2572, %v2756
        %v2839 = vadd.f32 %v2573, %v2761
        %v2840 = vadd.f32 %v2574, %v2766
        %v2841 = vadd.f32 %v2575, %v2771
        %v2842 = vadd.f32 %v2576, %v2776
        %v2843 = vadd.f32 %v2577, %v2781
        %v2844 = vadd.f32 %v2578, %v2786
        %v2845 = vadd.f32 %v2579, %v2791
        %v2846 = vadd.f32 %v2580, %v2796
        %v2847 = vadd.f32 %v2581, %v2801
        %v2848 = vadd.f32 %v2582, %v2806
        %v2849 = vadd.f32 %v2583, %v2811
        %v2850 = vadd.f32 %v2584, %v2816
        %s2851 = scalar_lea.vmem %s3, 256
        %v2852 = vld [vmem:[%s2851] sm:$0xff]
        %v2853 = vld [vmem:[%s2851 + $0x8] sm:$0xff]
        %v2854 = vld [vmem:[%s2851 + $0x10] sm:$0xff]
        %v2855 = vld [vmem:[%s2851 + $0x18] sm:$0xff]
        %v2856 = vld [vmem:[%s2851 + $0x20] sm:$0xff]
        %v2857 = vld [vmem:[%s2851 + $0x28] sm:$0xff]
        %v2858 = vld [vmem:[%s2851 + $0x30] sm:$0xff]
        %v2859 = vld [vmem:[%s2851 + $0x38] sm:$0xff]
        %2860 = vmatprep.subr.mxu0 0.0
        %2861 = vmatpush1.msra.mxu0 %v2852
        %2862 = vmatprep.subr.mxu0 0.0
        %2863 = vmatpush1.msra.mxu0 %v2853
        %2864 = vmatprep.subr.mxu0 0.0
        %2865 = vmatpush1.msra.mxu0 %v2854
        %2866 = vmatprep.subr.mxu0 0.0
        %2867 = vmatpush1.msra.mxu0 %v2855
        %2868 = vmatprep.subr.mxu0 0.0
        %2869 = vmatpush1.msra.mxu0 %v2856
        %2870 = vmatprep.subr.mxu0 0.0
        %2871 = vmatpush1.msra.mxu0 %v2857
        %2872 = vmatprep.subr.mxu0 0.0
        %2873 = vmatpush1.msra.mxu0 %v2858
        %2874 = vmatprep.subr.mxu0 0.0
        %2875 = vmatpush1.msra.mxu0 %v2859
        %2876 = vmatprep.subr.mxu0 0.0
        %2877 = vmatpush1.msra.mxu0 0.0
        %2878 = vmatprep.subr.mxu0 0.0
        %2879 = vmatpush1.msra.mxu0 0.0
        %2880 = vmatprep.subr.mxu0 0.0
        %2881 = vmatpush1.msra.mxu0 0.0
        %2882 = vmatprep.subr.mxu0 0.0
        %2883 = vmatpush1.msra.mxu0 0.0
        %2884 = vmatprep.subr.mxu0 0.0
        %2885 = vmatpush1.msra.mxu0 0.0
        %2886 = vmatprep.subr.mxu0 0.0
        %2887 = vmatpush1.msra.mxu0 0.0
        %2888 = vmatprep.subr.mxu0 0.0
        %2889 = vmatpush1.msra.mxu0 0.0
        %2890 = vmatprep.subr.mxu0 0.0
        %2891 = vmatpush1.msra.mxu0 0.0
        %2892 = vmatprep.subr.mxu0 0.0
        %2893 = vmatpush1.msra.mxu0 0.0
        %2894 = vmatprep.subr.mxu0 0.0
        %2895 = vmatpush1.msra.mxu0 0.0
        %2896 = vmatprep.subr.mxu0 0.0
        %2897 = vmatpush1.msra.mxu0 0.0
        %2898 = vmatprep.subr.mxu0 0.0
        %2899 = vmatpush1.msra.mxu0 0.0
        %2900 = vmatprep.subr.mxu0 0.0
        %2901 = vmatpush1.msra.mxu0 0.0
        %2902 = vmatprep.subr.mxu0 0.0
        %2903 = vmatpush1.msra.mxu0 0.0
        %2904 = vmatprep.subr.mxu0 0.0
        %2905 = vmatpush1.msra.mxu0 0.0
        %2906 = vmatprep.subr.mxu0 0.0
        %2907 = vmatpush1.msra.mxu0 0.0
        %2908 = vmatprep.subr.mxu0 0.0
        %2909 = vmatpush1.msra.mxu0 0.0
        %2910 = vmatprep.subr.mxu0 0.0
        %2911 = vmatpush1.msra.mxu0 0.0
        %2912 = vmatprep.subr.mxu0 0.0
        %2913 = vmatpush1.msra.mxu0 0.0
        %2914 = vmatprep.subr.mxu0 0.0
        %2915 = vmatpush1.msra.mxu0 0.0
        %2916 = vmatprep.subr.mxu0 0.0
        %2917 = vmatpush1.msra.mxu0 0.0
        %2918 = vmatprep.subr.mxu0 0.0
        %2919 = vmatpush1.msra.mxu0 0.0
        %2920 = vmatprep.subr.mxu0 0.0
        %2921 = vmatpush1.msra.mxu0 0.0
        %2922 = vmatprep.subr.mxu0 0.0
        %2923 = vmatpush1.msra.mxu0 0.0
        %2924 = vmatprep.mubr.f32.mxu0 0.0
        %2925 = vmatmul.mubr.f32.gmra.mrb[0].mxu0 %v1771
        %v2926 = vpop.f32.mrb[0].mxu0
        %v2927 = vadd.f32 0.0, %v2926
        %v2928 = vpop.f32.mrb[0].mxu0
        %2929 = vmatprep.mubr.f32.mxu0 0.0
        %2930 = vmatmul.mubr.f32.gmra.mrb[0].mxu0 %v1771
        %v2931 = vpop.f32.mrb[0].mxu0
        %v2932 = vadd.f32 0.0, %v2931
        %v2933 = vpop.f32.mrb[0].mxu0
        %2934 = vmatprep.mubr.f32.mxu0 0.0
        %2935 = vmatmul.mubr.f32.gmra.mrb[0].mxu0 %v1771
        %v2936 = vpop.f32.mrb[0].mxu0
        %v2937 = vadd.f32 0.0, %v2936
        %v2938 = vpop.f32.mrb[0].mxu0
        %2939 = vmatprep.mubr.f32.mxu0 0.0
        %2940 = vmatmul.mubr.f32.gmra.mrb[0].mxu0 %v1771
        %v2941 = vpop.f32.mrb[0].mxu0
        %v2942 = vadd.f32 0.0, %v2941
        %v2943 = vpop.f32.mrb[0].mxu0
        %2944 = vmatprep.mubr.f32.mxu0 0.0
        %2945 = vmatmul.mubr.f32.gmra.mrb[0].mxu0 %v2047
        %v2946 = vpop.f32.mrb[0].mxu0
        %v2947 = vadd.f32 0.0, %v2946
        %v2948 = vpop.f32.mrb[0].mxu0
        %2949 = vmatprep.mubr.f32.mxu0 0.0
        %2950 = vmatmul.mubr.f32.gmra.mrb[0].mxu0 %v2050
        %v2951 = vpop.f32.mrb[0].mxu0
        %v2952 = vadd.f32 0.0, %v2951
        %v2953 = vpop.f32.mrb[0].mxu0
        %2954 = vmatprep.mubr.f32.mxu0 0.0
        %2955 = vmatmul.mubr.f32.gmra.mrb[0].mxu0 %v2053
        %v2956 = vpop.f32.mrb[0].mxu0
        %v2957 = vadd.f32 0.0, %v2956
        %v2958 = vpop.f32.mrb[0].mxu0
        %2959 = vmatprep.mubr.f32.mxu0 0.0
        %2960 = vmatmul.mubr.f32.gmra.mrb[0].mxu0 %v2056
        %v2961 = vpop.f32.mrb[0].mxu0
        %v2962 = vadd.f32 0.0, %v2961
        %v2963 = vpop.f32.mrb[0].mxu0
        %2964 = vmatprep.mubr.f32.mxu0 0.0
        %2965 = vmatmul.mubr.f32.gmra.mrb[0].mxu0 %v2059
        %v2966 = vpop.f32.mrb[0].mxu0
        %v2967 = vadd.f32 0.0, %v2966
        %v2968 = vpop.f32.mrb[0].mxu0
        %2969 = vmatprep.mubr.f32.mxu0 0.0
        %2970 = vmatmul.mubr.f32.gmra.mrb[0].mxu0 %v2062
        %v2971 = vpop.f32.mrb[0].mxu0
        %v2972 = vadd.f32 0.0, %v2971
        %v2973 = vpop.f32.mrb[0].mxu0
        %2974 = vmatprep.mubr.f32.mxu0 0.0
        %2975 = vmatmul.mubr.f32.gmra.mrb[0].mxu0 %v2065
        %v2976 = vpop.f32.mrb[0].mxu0
        %v2977 = vadd.f32 0.0, %v2976
        %v2978 = vpop.f32.mrb[0].mxu0
        %2979 = vmatprep.mubr.f32.mxu0 0.0
        %2980 = vmatmul.mubr.f32.gmra.mrb[0].mxu0 %v2068
        %v2981 = vpop.f32.mrb[0].mxu0
        %v2982 = vadd.f32 0.0, %v2981
        %v2983 = vpop.f32.mrb[0].mxu0
        %2984 = vmatprep.mubr.f32.mxu0 0.0
        %2985 = vmatmul.mubr.f32.gmra.mrb[0].mxu0 %v1771
        %v2986 = vpop.f32.mrb[0].mxu0
        %v2987 = vadd.f32 0.0, %v2986
        %v2988 = vpop.f32.mrb[0].mxu0
        %2989 = vmatprep.mubr.f32.mxu0 0.0
        %2990 = vmatmul.mubr.f32.gmra.mrb[0].mxu0 %v1771
        %v2991 = vpop.f32.mrb[0].mxu0
        %v2992 = vadd.f32 0.0, %v2991
        %v2993 = vpop.f32.mrb[0].mxu0
        %2994 = vmatprep.mubr.f32.mxu0 0.0
        %2995 = vmatmul.mubr.f32.gmra.mrb[0].mxu0 %v1771
        %v2996 = vpop.f32.mrb[0].mxu0
        %v2997 = vadd.f32 0.0, %v2996
        %v2998 = vpop.f32.mrb[0].mxu0
        %2999 = vmatprep.mubr.f32.mxu0 0.0
        %3000 = vmatmul.mubr.f32.gmra.mrb[0].mxu0 %v1771
        %v3001 = vpop.f32.mrb[0].mxu0
        %v3002 = vadd.f32 0.0, %v3001
        %v3003 = vpop.f32.mrb[0].mxu0
        %3004 = vmatprep.mubr.f32.mxu0 0.0
        %3005 = vmatmul.mubr.f32.gmra.mrb[0].mxu0 %v1771
        %v3006 = vpop.f32.mrb[0].mxu0
        %v3007 = vadd.f32 0.0, %v3006
        %v3008 = vpop.f32.mrb[0].mxu0
        %3009 = vmatprep.mubr.f32.mxu0 0.0
        %3010 = vmatmul.mubr.f32.gmra.mrb[0].mxu0 %v1771
        %v3011 = vpop.f32.mrb[0].mxu0
        %v3012 = vadd.f32 0.0, %v3011
        %v3013 = vpop.f32.mrb[0].mxu0
        %3014 = vmatprep.mubr.f32.mxu0 0.0
        %3015 = vmatmul.mubr.f32.gmra.mrb[0].mxu0 %v1771
        %v3016 = vpop.f32.mrb[0].mxu0
        %v3017 = vadd.f32 0.0, %v3016
        %v3018 = vpop.f32.mrb[0].mxu0
        %3019 = vmatprep.mubr.f32.mxu0 0.0
        %3020 = vmatmul.mubr.f32.gmra.mrb[0].mxu0 %v1771
        %v3021 = vpop.f32.mrb[0].mxu0
        %v3022 = vadd.f32 0.0, %v3021
        %v3023 = vpop.f32.mrb[0].mxu0
        %3024 = vmatprep.mubr.f32.mxu0 0.0
        %3025 = vmatmul.mubr.f32.gmra.mrb[0].mxu0 %v2071
        %v3026 = vpop.f32.mrb[0].mxu0
        %v3027 = vadd.f32 0.0, %v3026
        %v3028 = vpop.f32.mrb[0].mxu0
        %3029 = vmatprep.mubr.f32.mxu0 0.0
        %3030 = vmatmul.mubr.f32.gmra.mrb[0].mxu0 %v2074
        %v3031 = vpop.f32.mrb[0].mxu0
        %v3032 = vadd.f32 0.0, %v3031
        %v3033 = vpop.f32.mrb[0].mxu0
        %3034 = vmatprep.mubr.f32.mxu0 0.0
        %3035 = vmatmul.mubr.f32.gmra.mrb[0].mxu0 %v2077
        %v3036 = vpop.f32.mrb[0].mxu0
        %v3037 = vadd.f32 0.0, %v3036
        %v3038 = vpop.f32.mrb[0].mxu0
        %3039 = vmatprep.mubr.f32.mxu0 0.0
        %3040 = vmatmul.mubr.f32.gmra.mrb[0].mxu0 %v2080
        %v3041 = vpop.f32.mrb[0].mxu0
        %v3042 = vadd.f32 0.0, %v3041
        %v3043 = vpop.f32.mrb[0].mxu0
        %3044 = vmatprep.mubr.f32.mxu0 0.0
        %3045 = vmatmul.mubr.f32.gmra.mrb[0].mxu0 %v2083
        %v3046 = vpop.f32.mrb[0].mxu0
        %v3047 = vadd.f32 0.0, %v3046
        %v3048 = vpop.f32.mrb[0].mxu0
        %3049 = vmatprep.mubr.f32.mxu0 0.0
        %3050 = vmatmul.mubr.f32.gmra.mrb[0].mxu0 %v2086
        %v3051 = vpop.f32.mrb[0].mxu0
        %v3052 = vadd.f32 0.0, %v3051
        %v3053 = vpop.f32.mrb[0].mxu0
        %3054 = vmatprep.mubr.f32.mxu0 0.0
        %3055 = vmatmul.mubr.f32.gmra.mrb[0].mxu0 %v2089
        %v3056 = vpop.f32.mrb[0].mxu0
        %v3057 = vadd.f32 0.0, %v3056
        %v3058 = vpop.f32.mrb[0].mxu0
        %3059 = vmatprep.mubr.f32.mxu0 0.0
        %3060 = vmatmul.mubr.f32.gmra.mrb[0].mxu0 %v2092
        %v3061 = vpop.f32.mrb[0].mxu0
        %v3062 = vadd.f32 0.0, %v3061
        %v3063 = vpop.f32.mrb[0].mxu0
        %3064 = vmatprep.mubr.f32.mxu0 0.0
        %3065 = vmatmul.mubr.f32.gmra.mrb[0].mxu0 %v1771
        %v3066 = vpop.f32.mrb[0].mxu0
        %v3067 = vadd.f32 0.0, %v3066
        %v3068 = vpop.f32.mrb[0].mxu0
        %3069 = vmatprep.mubr.f32.mxu0 0.0
        %3070 = vmatmul.mubr.f32.gmra.mrb[0].mxu0 %v1771
        %v3071 = vpop.f32.mrb[0].mxu0
        %v3072 = vadd.f32 0.0, %v3071
        %v3073 = vpop.f32.mrb[0].mxu0
        %3074 = vmatprep.mubr.f32.mxu0 0.0
        %3075 = vmatmul.mubr.f32.gmra.mrb[0].mxu0 %v1771
        %v3076 = vpop.f32.mrb[0].mxu0
        %v3077 = vadd.f32 0.0, %v3076
        %v3078 = vpop.f32.mrb[0].mxu0
        %3079 = vmatprep.mubr.f32.mxu0 0.0
        %3080 = vmatmul.mubr.f32.gmra.mrb[0].mxu0 %v1771
        %v3081 = vpop.f32.mrb[0].mxu0
        %v3082 = vadd.f32 0.0, %v3081
        %v3083 = vpop.f32.mrb[0].mxu0
        %3084 = vdwg.mxu0
        %v3085 = vadd.f32 %v2819, %v2927
        %v3086 = vadd.f32 %v2820, %v2932
        %v3087 = vadd.f32 %v2821, %v2937
        %v3088 = vadd.f32 %v2822, %v2942
        %v3089 = vadd.f32 %v2823, %v2947
        %v3090 = vadd.f32 %v2824, %v2952
        %v3091 = vadd.f32 %v2825, %v2957
        %v3092 = vadd.f32 %v2826, %v2962
        %v3093 = vadd.f32 %v2827, %v2967
        %v3094 = vadd.f32 %v2828, %v2972
        %v3095 = vadd.f32 %v2829, %v2977
        %v3096 = vadd.f32 %v2830, %v2982
        %v3097 = vadd.f32 %v2831, %v2987
        %v3098 = vadd.f32 %v2832, %v2992
        %v3099 = vadd.f32 %v2833, %v2997
        %v3100 = vadd.f32 %v2834, %v3002
        %v3101 = vadd.f32 %v2835, %v3007
        %v3102 = vadd.f32 %v2836, %v3012
        %v3103 = vadd.f32 %v2837, %v3017
        %v3104 = vadd.f32 %v2838, %v3022
        %v3105 = vadd.f32 %v2839, %v3027
        %v3106 = vadd.f32 %v2840, %v3032
        %v3107 = vadd.f32 %v2841, %v3037
        %v3108 = vadd.f32 %v2842, %v3042
        %v3109 = vadd.f32 %v2843, %v3047
        %v3110 = vadd.f32 %v2844, %v3052
        %v3111 = vadd.f32 %v2845, %v3057
        %v3112 = vadd.f32 %v2846, %v3062
        %v3113 = vadd.f32 %v2847, %v3067
        %v3114 = vadd.f32 %v2848, %v3072
        %v3115 = vadd.f32 %v2849, %v3077
        %v3116 = vadd.f32 %v2850, %v3082
        %v3117 = vld [vmem:[%s5] sm:$0xff]
        %v3118 = vld [vmem:[%s5 + $0x8] sm:$0xff]
        %v3119 = vld [vmem:[%s5 + $0x10] sm:$0xff]
        %v3120 = vld [vmem:[%s5 + $0x18] sm:$0xff]
        %v3121 = vld [vmem:[%s5 + $0x20] sm:$0xff]
        %v3122 = vld [vmem:[%s5 + $0x28] sm:$0xff]
        %v3123 = vld [vmem:[%s5 + $0x30] sm:$0xff]
        %v3124 = vld [vmem:[%s5 + $0x38] sm:$0xff]
        %v3125 = vld [vmem:[%s5 + $0x40] sm:$0xff]
        %v3126 = vld [vmem:[%s5 + $0x48] sm:$0xff]
        %v3127 = vld [vmem:[%s5 + $0x50] sm:$0xff]
        %v3128 = vld [vmem:[%s5 + $0x58] sm:$0xff]
        %v3129 = vld [vmem:[%s5 + $0x60] sm:$0xff]
        %v3130 = vld [vmem:[%s5 + $0x68] sm:$0xff]
        %v3131 = vld [vmem:[%s5 + $0x70] sm:$0xff]
        %v3132 = vld [vmem:[%s5 + $0x78] sm:$0xff]
        %v3133 = vld [vmem:[%s5 + $0x80] sm:$0xff]
        %v3134 = vld [vmem:[%s5 + $0x88] sm:$0xff]
        %v3135 = vld [vmem:[%s5 + $0x90] sm:$0xff]
        %v3136 = vld [vmem:[%s5 + $0x98] sm:$0xff]
        %v3137 = vld [vmem:[%s5 + $0xa0] sm:$0xff]
        %v3138 = vld [vmem:[%s5 + $0xa8] sm:$0xff]
        %v3139 = vld [vmem:[%s5 + $0xb0] sm:$0xff]
        %v3140 = vld [vmem:[%s5 + $0xb8] sm:$0xff]
        %v3141 = vld [vmem:[%s5 + $0xc0] sm:$0xff]
        %v3142 = vld [vmem:[%s5 + $0xc8] sm:$0xff]
        %v3143 = vld [vmem:[%s5 + $0xd0] sm:$0xff]
        %v3144 = vld [vmem:[%s5 + $0xd8] sm:$0xff]
        %v3145 = vld [vmem:[%s5 + $0xe0] sm:$0xff]
        %v3146 = vld [vmem:[%s5 + $0xe8] sm:$0xff]
        %v3147 = vld [vmem:[%s5 + $0xf0] sm:$0xff]
        %v3148 = vld [vmem:[%s5 + $0xf8] sm:$0xff]
        %v3149 = vadd.f32 %v3085, %v3117
        %v3150 = vadd.f32 %v3086, %v3118
        %v3151 = vadd.f32 %v3087, %v3119
        %v3152 = vadd.f32 %v3088, %v3120
        %v3153 = vadd.f32 %v3089, %v3121
        %v3154 = vadd.f32 %v3090, %v3122
        %v3155 = vadd.f32 %v3091, %v3123
        %v3156 = vadd.f32 %v3092, %v3124
        %v3157 = vadd.f32 %v3093, %v3125
        %v3158 = vadd.f32 %v3094, %v3126
        %v3159 = vadd.f32 %v3095, %v3127
        %v3160 = vadd.f32 %v3096, %v3128
        %v3161 = vadd.f32 %v3097, %v3129
        %v3162 = vadd.f32 %v3098, %v3130
        %v3163 = vadd.f32 %v3099, %v3131
        %v3164 = vadd.f32 %v3100, %v3132
        %v3165 = vadd.f32 %v3101, %v3133
        %v3166 = vadd.f32 %v3102, %v3134
        %v3167 = vadd.f32 %v3103, %v3135
        %v3168 = vadd.f32 %v3104, %v3136
        %v3169 = vadd.f32 %v3105, %v3137
        %v3170 = vadd.f32 %v3106, %v3138
        %v3171 = vadd.f32 %v3107, %v3139
        %v3172 = vadd.f32 %v3108, %v3140
        %v3173 = vadd.f32 %v3109, %v3141
        %v3174 = vadd.f32 %v3110, %v3142
        %v3175 = vadd.f32 %v3111, %v3143
        %v3176 = vadd.f32 %v3112, %v3144
        %v3177 = vadd.f32 %v3113, %v3145
        %v3178 = vadd.f32 %v3114, %v3146
        %v3179 = vadd.f32 %v3115, %v3147
        %v3180 = vadd.f32 %v3116, %v3148
        %v3181 = vmax.f32 %v3149, %v3165
        %v3182 = vmax.f32 %v3150, %v3166
        %v3183 = vmax.f32 %v3151, %v3167
        %v3184 = vmax.f32 %v3152, %v3168
        %v3185 = vmax.f32 %v3153, %v3169
        %v3186 = vmax.f32 %v3154, %v3170
        %v3187 = vmax.f32 %v3155, %v3171
        %v3188 = vmax.f32 %v3156, %v3172
        %v3189 = vmax.f32 %v3157, %v3173
        %v3190 = vmax.f32 %v3158, %v3174
        %v3191 = vmax.f32 %v3159, %v3175
        %v3192 = vmax.f32 %v3160, %v3176
        %v3193 = vmax.f32 %v3161, %v3177
        %v3194 = vmax.f32 %v3162, %v3178
        %v3195 = vmax.f32 %v3163, %v3179
        %v3196 = vmax.f32 %v3164, %v3180
        %v3197 = vld [vmem:[%s4] sm:$0x1]
        %v3199 = vlaneseq
        %v3200 = vshrl.u32 %v3199, 7
        %v3201 = vsub.s32 0, %v3200
        %v3202 = vrot.slane %v3197, %v3201
        %v3204 = vadd.f32 %v3181, %v3202
        %v3205 = vadd.f32 %v3182, %v3202
        %v3206 = vadd.f32 %v3183, %v3202
        %v3207 = vadd.f32 %v3184, %v3202
        %v3208 = vadd.f32 %v3185, %v3202
        %v3209 = vadd.f32 %v3186, %v3202
        %v3210 = vadd.f32 %v3187, %v3202
        %v3211 = vadd.f32 %v3188, %v3202
        %v3212 = vadd.f32 %v3189, %v3202
        %v3213 = vadd.f32 %v3190, %v3202
        %v3214 = vadd.f32 %v3191, %v3202
        %v3215 = vadd.f32 %v3192, %v3202
        %v3216 = vadd.f32 %v3193, %v3202
        %v3217 = vadd.f32 %v3194, %v3202
        %v3218 = vadd.f32 %v3195, %v3202
        %v3219 = vadd.f32 %v3196, %v3202
        %v3220 = vmax.f32 %v3204, 0.0
        %v3221 = vmax.f32 %v3205, 0.0
        %v3222 = vmax.f32 %v3206, 0.0
        %v3223 = vmax.f32 %v3207, 0.0
        %v3224 = vmax.f32 %v3208, 0.0
        %v3225 = vmax.f32 %v3209, 0.0
        %v3226 = vmax.f32 %v3210, 0.0
        %v3227 = vmax.f32 %v3211, 0.0
        %v3228 = vmax.f32 %v3212, 0.0
        %v3229 = vmax.f32 %v3213, 0.0
        %v3230 = vmax.f32 %v3214, 0.0
        %v3231 = vmax.f32 %v3215, 0.0
        %v3232 = vmax.f32 %v3216, 0.0
        %v3233 = vmax.f32 %v3217, 0.0
        %v3234 = vmax.f32 %v3218, 0.0
        %v3235 = vmax.f32 %v3219, 0.0
        %v3236 = vld [vmem:[%s6] sm:$0xff]
        %v3237 = vld [vmem:[%s6 + $0x8] sm:$0xff]
        %v3238 = vld [vmem:[%s6 + $0x10] sm:$0xff]
        %v3239 = vld [vmem:[%s6 + $0x18] sm:$0xff]
        %v3240 = vld [vmem:[%s6 + $0x20] sm:$0xff]
        %v3241 = vld [vmem:[%s6 + $0x28] sm:$0xff]
        %v3242 = vld [vmem:[%s6 + $0x30] sm:$0xff]
        %v3243 = vld [vmem:[%s6 + $0x38] sm:$0xff]
        %s3244 = scalar_lea.vmem %s6, 64
        %v3245 = vld [vmem:[%s3244] sm:$0xff]
        %v3246 = vld [vmem:[%s3244 + $0x8] sm:$0xff]
        %v3247 = vld [vmem:[%s3244 + $0x10] sm:$0xff]
        %v3248 = vld [vmem:[%s3244 + $0x18] sm:$0xff]
        %v3249 = vld [vmem:[%s3244 + $0x20] sm:$0xff]
        %v3250 = vld [vmem:[%s3244 + $0x28] sm:$0xff]
        %v3251 = vld [vmem:[%s3244 + $0x30] sm:$0xff]
        %v3252 = vld [vmem:[%s3244 + $0x38] sm:$0xff]
        %v3254 = vsel %vm1769, %v3221, 0
        %3256 = vmatprep.subr.mxu0 0.0
        %3257 = vmatpush1.msra.mxu0 %v3245
        %3258 = vmatprep.subr.mxu0 0.0
        %3259 = vmatpush1.msra.mxu0 %v3246
        %3260 = vmatprep.subr.mxu0 0.0
        %3261 = vmatpush1.msra.mxu0 %v3247
        %3262 = vmatprep.subr.mxu0 0.0
        %3263 = vmatpush1.msra.mxu0 %v3248
        %3264 = vmatprep.subr.mxu0 0.0
        %3265 = vmatpush1.msra.mxu0 %v3249
        %3266 = vmatprep.subr.mxu0 0.0
        %3267 = vmatpush1.msra.mxu0 %v3250
        %3268 = vmatprep.subr.mxu0 0.0
        %3269 = vmatpush1.msra.mxu0 %v3251
        %3270 = vmatprep.subr.mxu0 0.0
        %3271 = vmatpush1.msra.mxu0 %v3252
        %3272 = vmatprep.subr.mxu0 0.0
        %3273 = vmatpush1.msra.mxu0 0.0
        %3274 = vmatprep.subr.mxu0 0.0
        %3275 = vmatpush1.msra.mxu0 0.0
        %3276 = vmatprep.subr.mxu0 0.0
        %3277 = vmatpush1.msra.mxu0 0.0
        %3278 = vmatprep.subr.mxu0 0.0
        %3279 = vmatpush1.msra.mxu0 0.0
        %3280 = vmatprep.subr.mxu0 0.0
        %3281 = vmatpush1.msra.mxu0 0.0
        %3282 = vmatprep.subr.mxu0 0.0
        %3283 = vmatpush1.msra.mxu0 0.0
        %3284 = vmatprep.subr.mxu0 0.0
        %3285 = vmatpush1.msra.mxu0 0.0
        %3286 = vmatprep.subr.mxu0 0.0
        %3287 = vmatpush1.msra.mxu0 0.0
        %3288 = vmatprep.subr.mxu0 0.0
        %3289 = vmatpush1.msra.mxu0 0.0
        %3290 = vmatprep.subr.mxu0 0.0
        %3291 = vmatpush1.msra.mxu0 0.0
        %3292 = vmatprep.subr.mxu0 0.0
        %3293 = vmatpush1.msra.mxu0 0.0
        %3294 = vmatprep.subr.mxu0 0.0
        %3295 = vmatpush1.msra.mxu0 0.0
        %3296 = vmatprep.subr.mxu0 0.0
        %3297 = vmatpush1.msra.mxu0 0.0
        %3298 = vmatprep.subr.mxu0 0.0
        %3299 = vmatpush1.msra.mxu0 0.0
        %3300 = vmatprep.subr.mxu0 0.0
        %3301 = vmatpush1.msra.mxu0 0.0
        %3302 = vmatprep.subr.mxu0 0.0
        %3303 = vmatpush1.msra.mxu0 0.0
        %3304 = vmatprep.subr.mxu0 0.0
        %3305 = vmatpush1.msra.mxu0 0.0
        %3306 = vmatprep.subr.mxu0 0.0
        %3307 = vmatpush1.msra.mxu0 0.0
        %3308 = vmatprep.subr.mxu0 0.0
        %3309 = vmatpush1.msra.mxu0 0.0
        %3310 = vmatprep.subr.mxu0 0.0
        %3311 = vmatpush1.msra.mxu0 0.0
        %3312 = vmatprep.subr.mxu0 0.0
        %3313 = vmatpush1.msra.mxu0 0.0
        %3314 = vmatprep.subr.mxu0 0.0
        %3315 = vmatpush1.msra.mxu0 0.0
        %3316 = vmatprep.subr.mxu0 0.0
        %3317 = vmatpush1.msra.mxu0 0.0
        %3318 = vmatprep.subr.mxu0 0.0
        %3319 = vmatpush1.msra.mxu0 0.0
        %3320 = vmatprep.mubr.f32.mxu0 0.0
        %3321 = vmatmul.mubr.f32.gmra.mrb[0].mxu0 %v3254
        %v3322 = vpop.f32.mrb[0].mxu0
        %v3323 = vadd.f32 0.0, %v3322
        %v3324 = vpop.f32.mrb[0].mxu0
        %3325 = vdwg.mxu0
        %v3327 = vsel %vm1769, %v3220, 0
        %3329 = vmatprep.subr.mxu0 0.0
        %3330 = vmatpush1.msra.mxu0 %v3236
        %3331 = vmatprep.subr.mxu0 0.0
        %3332 = vmatpush1.msra.mxu0 %v3237
        %3333 = vmatprep.subr.mxu0 0.0
        %3334 = vmatpush1.msra.mxu0 %v3238
        %3335 = vmatprep.subr.mxu0 0.0
        %3336 = vmatpush1.msra.mxu0 %v3239
        %3337 = vmatprep.subr.mxu0 0.0
        %3338 = vmatpush1.msra.mxu0 %v3240
        %3339 = vmatprep.subr.mxu0 0.0
        %3340 = vmatpush1.msra.mxu0 %v3241
        %3341 = vmatprep.subr.mxu0 0.0
        %3342 = vmatpush1.msra.mxu0 %v3242
        %3343 = vmatprep.subr.mxu0 0.0
        %3344 = vmatpush1.msra.mxu0 %v3243
        %3345 = vmatprep.subr.mxu0 0.0
        %3346 = vmatpush1.msra.mxu0 0.0
        %3347 = vmatprep.subr.mxu0 0.0
        %3348 = vmatpush1.msra.mxu0 0.0
        %3349 = vmatprep.subr.mxu0 0.0
        %3350 = vmatpush1.msra.mxu0 0.0
        %3351 = vmatprep.subr.mxu0 0.0
        %3352 = vmatpush1.msra.mxu0 0.0
        %3353 = vmatprep.subr.mxu0 0.0
        %3354 = vmatpush1.msra.mxu0 0.0
        %3355 = vmatprep.subr.mxu0 0.0
        %3356 = vmatpush1.msra.mxu0 0.0
        %3357 = vmatprep.subr.mxu0 0.0
        %3358 = vmatpush1.msra.mxu0 0.0
        %3359 = vmatprep.subr.mxu0 0.0
        %3360 = vmatpush1.msra.mxu0 0.0
        %3361 = vmatprep.subr.mxu0 0.0
        %3362 = vmatpush1.msra.mxu0 0.0
        %3363 = vmatprep.subr.mxu0 0.0
        %3364 = vmatpush1.msra.mxu0 0.0
        %3365 = vmatprep.subr.mxu0 0.0
        %3366 = vmatpush1.msra.mxu0 0.0
        %3367 = vmatprep.subr.mxu0 0.0
        %3368 = vmatpush1.msra.mxu0 0.0
        %3369 = vmatprep.subr.mxu0 0.0
        %3370 = vmatpush1.msra.mxu0 0.0
        %3371 = vmatprep.subr.mxu0 0.0
        %3372 = vmatpush1.msra.mxu0 0.0
        %3373 = vmatprep.subr.mxu0 0.0
        %3374 = vmatpush1.msra.mxu0 0.0
        %3375 = vmatprep.subr.mxu0 0.0
        %3376 = vmatpush1.msra.mxu0 0.0
        %3377 = vmatprep.subr.mxu0 0.0
        %3378 = vmatpush1.msra.mxu0 0.0
        %3379 = vmatprep.subr.mxu0 0.0
        %3380 = vmatpush1.msra.mxu0 0.0
        %3381 = vmatprep.subr.mxu0 0.0
        %3382 = vmatpush1.msra.mxu0 0.0
        %3383 = vmatprep.subr.mxu0 0.0
        %3384 = vmatpush1.msra.mxu0 0.0
        %3385 = vmatprep.subr.mxu0 0.0
        %3386 = vmatpush1.msra.mxu0 0.0
        %3387 = vmatprep.subr.mxu0 0.0
        %3388 = vmatpush1.msra.mxu0 0.0
        %3389 = vmatprep.subr.mxu0 0.0
        %3390 = vmatpush1.msra.mxu0 0.0
        %3391 = vmatprep.subr.mxu0 0.0
        %3392 = vmatpush1.msra.mxu0 0.0
        %3393 = vmatprep.mubr.f32.mxu0 0.0
        %3394 = vmatmul.mubr.f32.gmra.mrb[0].mxu0 %v3327
        %v3395 = vpop.f32.mrb[0].mxu0
        %v3396 = vadd.f32 %v3323, %v3395
        %v3397 = vpop.f32.mrb[0].mxu0
        %3398 = vdwg.mxu0
        %s3399 = scalar_lea.vmem %s6, 128
        %v3400 = vld [vmem:[%s3399] sm:$0xff]
        %v3401 = vld [vmem:[%s3399 + $0x8] sm:$0xff]
        %v3402 = vld [vmem:[%s3399 + $0x10] sm:$0xff]
        %v3403 = vld [vmem:[%s3399 + $0x18] sm:$0xff]
        %v3404 = vld [vmem:[%s3399 + $0x20] sm:$0xff]
        %v3405 = vld [vmem:[%s3399 + $0x28] sm:$0xff]
        %v3406 = vld [vmem:[%s3399 + $0x30] sm:$0xff]
        %v3407 = vld [vmem:[%s3399 + $0x38] sm:$0xff]
        %v3409 = vsel %vm1769, %v3222, 0
        %3411 = vmatprep.subr.mxu0 0.0
        %3412 = vmatpush1.msra.mxu0 %v3400
        %3413 = vmatprep.subr.mxu0 0.0
        %3414 = vmatpush1.msra.mxu0 %v3401
        %3415 = vmatprep.subr.mxu0 0.0
        %3416 = vmatpush1.msra.mxu0 %v3402
        %3417 = vmatprep.subr.mxu0 0.0
        %3418 = vmatpush1.msra.mxu0 %v3403
        %3419 = vmatprep.subr.mxu0 0.0
        %3420 = vmatpush1.msra.mxu0 %v3404
        %3421 = vmatprep.subr.mxu0 0.0
        %3422 = vmatpush1.msra.mxu0 %v3405
        %3423 = vmatprep.subr.mxu0 0.0
        %3424 = vmatpush1.msra.mxu0 %v3406
        %3425 = vmatprep.subr.mxu0 0.0
        %3426 = vmatpush1.msra.mxu0 %v3407
        %3427 = vmatprep.subr.mxu0 0.0
        %3428 = vmatpush1.msra.mxu0 0.0
        %3429 = vmatprep.subr.mxu0 0.0
        %3430 = vmatpush1.msra.mxu0 0.0
        %3431 = vmatprep.subr.mxu0 0.0
        %3432 = vmatpush1.msra.mxu0 0.0
        %3433 = vmatprep.subr.mxu0 0.0
        %3434 = vmatpush1.msra.mxu0 0.0
        %3435 = vmatprep.subr.mxu0 0.0
        %3436 = vmatpush1.msra.mxu0 0.0
        %3437 = vmatprep.subr.mxu0 0.0
        %3438 = vmatpush1.msra.mxu0 0.0
        %3439 = vmatprep.subr.mxu0 0.0
        %3440 = vmatpush1.msra.mxu0 0.0
        %3441 = vmatprep.subr.mxu0 0.0
        %3442 = vmatpush1.msra.mxu0 0.0
        %3443 = vmatprep.subr.mxu0 0.0
        %3444 = vmatpush1.msra.mxu0 0.0
        %3445 = vmatprep.subr.mxu0 0.0
        %3446 = vmatpush1.msra.mxu0 0.0
        %3447 = vmatprep.subr.mxu0 0.0
        %3448 = vmatpush1.msra.mxu0 0.0
        %3449 = vmatprep.subr.mxu0 0.0
        %3450 = vmatpush1.msra.mxu0 0.0
        %3451 = vmatprep.subr.mxu0 0.0
        %3452 = vmatpush1.msra.mxu0 0.0
        %3453 = vmatprep.subr.mxu0 0.0
        %3454 = vmatpush1.msra.mxu0 0.0
        %3455 = vmatprep.subr.mxu0 0.0
        %3456 = vmatpush1.msra.mxu0 0.0
        %3457 = vmatprep.subr.mxu0 0.0
        %3458 = vmatpush1.msra.mxu0 0.0
        %3459 = vmatprep.subr.mxu0 0.0
        %3460 = vmatpush1.msra.mxu0 0.0
        %3461 = vmatprep.subr.mxu0 0.0
        %3462 = vmatpush1.msra.mxu0 0.0
        %3463 = vmatprep.subr.mxu0 0.0
        %3464 = vmatpush1.msra.mxu0 0.0
        %3465 = vmatprep.subr.mxu0 0.0
        %3466 = vmatpush1.msra.mxu0 0.0
        %3467 = vmatprep.subr.mxu0 0.0
        %3468 = vmatpush1.msra.mxu0 0.0
        %3469 = vmatprep.subr.mxu0 0.0
        %3470 = vmatpush1.msra.mxu0 0.0
        %3471 = vmatprep.subr.mxu0 0.0
        %3472 = vmatpush1.msra.mxu0 0.0
        %3473 = vmatprep.subr.mxu0 0.0
        %3474 = vmatpush1.msra.mxu0 0.0
        %3475 = vmatprep.mubr.f32.mxu0 0.0
        %3476 = vmatmul.mubr.f32.gmra.mrb[0].mxu0 %v3409
        %v3477 = vpop.f32.mrb[0].mxu0
        %v3478 = vadd.f32 0.0, %v3477
        %v3479 = vpop.f32.mrb[0].mxu0
        %3480 = vdwg.mxu0
        %v3481 = vadd.f32 %v3396, %v3478
        %s3482 = scalar_lea.vmem %s6, 192
        %v3483 = vld [vmem:[%s3482] sm:$0xff]
        %v3484 = vld [vmem:[%s3482 + $0x8] sm:$0xff]
        %v3485 = vld [vmem:[%s3482 + $0x10] sm:$0xff]
        %v3486 = vld [vmem:[%s3482 + $0x18] sm:$0xff]
        %v3487 = vld [vmem:[%s3482 + $0x20] sm:$0xff]
        %v3488 = vld [vmem:[%s3482 + $0x28] sm:$0xff]
        %v3489 = vld [vmem:[%s3482 + $0x30] sm:$0xff]
        %v3490 = vld [vmem:[%s3482 + $0x38] sm:$0xff]
        %v3492 = vsel %vm1769, %v3223, 0
        %3494 = vmatprep.subr.mxu0 0.0
        %3495 = vmatpush1.msra.mxu0 %v3483
        %3496 = vmatprep.subr.mxu0 0.0
        %3497 = vmatpush1.msra.mxu0 %v3484
        %3498 = vmatprep.subr.mxu0 0.0
        %3499 = vmatpush1.msra.mxu0 %v3485
        %3500 = vmatprep.subr.mxu0 0.0
        %3501 = vmatpush1.msra.mxu0 %v3486
        %3502 = vmatprep.subr.mxu0 0.0
        %3503 = vmatpush1.msra.mxu0 %v3487
        %3504 = vmatprep.subr.mxu0 0.0
        %3505 = vmatpush1.msra.mxu0 %v3488
        %3506 = vmatprep.subr.mxu0 0.0
        %3507 = vmatpush1.msra.mxu0 %v3489
        %3508 = vmatprep.subr.mxu0 0.0
        %3509 = vmatpush1.msra.mxu0 %v3490
        %3510 = vmatprep.subr.mxu0 0.0
        %3511 = vmatpush1.msra.mxu0 0.0
        %3512 = vmatprep.subr.mxu0 0.0
        %3513 = vmatpush1.msra.mxu0 0.0
        %3514 = vmatprep.subr.mxu0 0.0
        %3515 = vmatpush1.msra.mxu0 0.0
        %3516 = vmatprep.subr.mxu0 0.0
        %3517 = vmatpush1.msra.mxu0 0.0
        %3518 = vmatprep.subr.mxu0 0.0
        %3519 = vmatpush1.msra.mxu0 0.0
        %3520 = vmatprep.subr.mxu0 0.0
        %3521 = vmatpush1.msra.mxu0 0.0
        %3522 = vmatprep.subr.mxu0 0.0
        %3523 = vmatpush1.msra.mxu0 0.0
        %3524 = vmatprep.subr.mxu0 0.0
        %3525 = vmatpush1.msra.mxu0 0.0
        %3526 = vmatprep.subr.mxu0 0.0
        %3527 = vmatpush1.msra.mxu0 0.0
        %3528 = vmatprep.subr.mxu0 0.0
        %3529 = vmatpush1.msra.mxu0 0.0
        %3530 = vmatprep.subr.mxu0 0.0
        %3531 = vmatpush1.msra.mxu0 0.0
        %3532 = vmatprep.subr.mxu0 0.0
        %3533 = vmatpush1.msra.mxu0 0.0
        %3534 = vmatprep.subr.mxu0 0.0
        %3535 = vmatpush1.msra.mxu0 0.0
        %3536 = vmatprep.subr.mxu0 0.0
        %3537 = vmatpush1.msra.mxu0 0.0
        %3538 = vmatprep.subr.mxu0 0.0
        %3539 = vmatpush1.msra.mxu0 0.0
        %3540 = vmatprep.subr.mxu0 0.0
        %3541 = vmatpush1.msra.mxu0 0.0
        %3542 = vmatprep.subr.mxu0 0.0
        %3543 = vmatpush1.msra.mxu0 0.0
        %3544 = vmatprep.subr.mxu0 0.0
        %3545 = vmatpush1.msra.mxu0 0.0
        %3546 = vmatprep.subr.mxu0 0.0
        %3547 = vmatpush1.msra.mxu0 0.0
        %3548 = vmatprep.subr.mxu0 0.0
        %3549 = vmatpush1.msra.mxu0 0.0
        %3550 = vmatprep.subr.mxu0 0.0
        %3551 = vmatpush1.msra.mxu0 0.0
        %3552 = vmatprep.subr.mxu0 0.0
        %3553 = vmatpush1.msra.mxu0 0.0
        %3554 = vmatprep.subr.mxu0 0.0
        %3555 = vmatpush1.msra.mxu0 0.0
        %3556 = vmatprep.subr.mxu0 0.0
        %3557 = vmatpush1.msra.mxu0 0.0
        %3558 = vmatprep.mubr.f32.mxu0 0.0
        %3559 = vmatmul.mubr.f32.gmra.mrb[0].mxu0 %v3492
        %v3560 = vpop.f32.mrb[0].mxu0
        %v3561 = vadd.f32 0.0, %v3560
        %v3562 = vpop.f32.mrb[0].mxu0
        %3563 = vdwg.mxu0
        %v3564 = vadd.f32 %v3481, %v3561
        %s3565 = scalar_lea.vmem %s6, 256
        %v3566 = vld [vmem:[%s3565] sm:$0xff]
        %v3567 = vld [vmem:[%s3565 + $0x8] sm:$0xff]
        %v3568 = vld [vmem:[%s3565 + $0x10] sm:$0xff]
        %v3569 = vld [vmem:[%s3565 + $0x18] sm:$0xff]
        %v3570 = vld [vmem:[%s3565 + $0x20] sm:$0xff]
        %v3571 = vld [vmem:[%s3565 + $0x28] sm:$0xff]
        %v3572 = vld [vmem:[%s3565 + $0x30] sm:$0xff]
        %v3573 = vld [vmem:[%s3565 + $0x38] sm:$0xff]
        %v3575 = vsel %vm1769, %v3224, 0
        %3577 = vmatprep.subr.mxu0 0.0
        %3578 = vmatpush1.msra.mxu0 %v3566
        %3579 = vmatprep.subr.mxu0 0.0
        %3580 = vmatpush1.msra.mxu0 %v3567
        %3581 = vmatprep.subr.mxu0 0.0
        %3582 = vmatpush1.msra.mxu0 %v3568
        %3583 = vmatprep.subr.mxu0 0.0
        %3584 = vmatpush1.msra.mxu0 %v3569
        %3585 = vmatprep.subr.mxu0 0.0
        %3586 = vmatpush1.msra.mxu0 %v3570
        %3587 = vmatprep.subr.mxu0 0.0
        %3588 = vmatpush1.msra.mxu0 %v3571
        %3589 = vmatprep.subr.mxu0 0.0
        %3590 = vmatpush1.msra.mxu0 %v3572
        %3591 = vmatprep.subr.mxu0 0.0
        %3592 = vmatpush1.msra.mxu0 %v3573
        %3593 = vmatprep.subr.mxu0 0.0
        %3594 = vmatpush1.msra.mxu0 0.0
        %3595 = vmatprep.subr.mxu0 0.0
        %3596 = vmatpush1.msra.mxu0 0.0
        %3597 = vmatprep.subr.mxu0 0.0
        %3598 = vmatpush1.msra.mxu0 0.0
        %3599 = vmatprep.subr.mxu0 0.0
        %3600 = vmatpush1.msra.mxu0 0.0
        %3601 = vmatprep.subr.mxu0 0.0
        %3602 = vmatpush1.msra.mxu0 0.0
        %3603 = vmatprep.subr.mxu0 0.0
        %3604 = vmatpush1.msra.mxu0 0.0
        %3605 = vmatprep.subr.mxu0 0.0
        %3606 = vmatpush1.msra.mxu0 0.0
        %3607 = vmatprep.subr.mxu0 0.0
        %3608 = vmatpush1.msra.mxu0 0.0
        %3609 = vmatprep.subr.mxu0 0.0
        %3610 = vmatpush1.msra.mxu0 0.0
        %3611 = vmatprep.subr.mxu0 0.0
        %3612 = vmatpush1.msra.mxu0 0.0
        %3613 = vmatprep.subr.mxu0 0.0
        %3614 = vmatpush1.msra.mxu0 0.0
        %3615 = vmatprep.subr.mxu0 0.0
        %3616 = vmatpush1.msra.mxu0 0.0
        %3617 = vmatprep.subr.mxu0 0.0
        %3618 = vmatpush1.msra.mxu0 0.0
        %3619 = vmatprep.subr.mxu0 0.0
        %3620 = vmatpush1.msra.mxu0 0.0
        %3621 = vmatprep.subr.mxu0 0.0
        %3622 = vmatpush1.msra.mxu0 0.0
        %3623 = vmatprep.subr.mxu0 0.0
        %3624 = vmatpush1.msra.mxu0 0.0
        %3625 = vmatprep.subr.mxu0 0.0
        %3626 = vmatpush1.msra.mxu0 0.0
        %3627 = vmatprep.subr.mxu0 0.0
        %3628 = vmatpush1.msra.mxu0 0.0
        %3629 = vmatprep.subr.mxu0 0.0
        %3630 = vmatpush1.msra.mxu0 0.0
        %3631 = vmatprep.subr.mxu0 0.0
        %3632 = vmatpush1.msra.mxu0 0.0
        %3633 = vmatprep.subr.mxu0 0.0
        %3634 = vmatpush1.msra.mxu0 0.0
        %3635 = vmatprep.subr.mxu0 0.0
        %3636 = vmatpush1.msra.mxu0 0.0
        %3637 = vmatprep.subr.mxu0 0.0
        %3638 = vmatpush1.msra.mxu0 0.0
        %3639 = vmatprep.subr.mxu0 0.0
        %3640 = vmatpush1.msra.mxu0 0.0
        %3641 = vmatprep.mubr.f32.mxu0 0.0
        %3642 = vmatmul.mubr.f32.gmra.mrb[0].mxu0 %v3575
        %v3643 = vpop.f32.mrb[0].mxu0
        %v3644 = vadd.f32 0.0, %v3643
        %v3645 = vpop.f32.mrb[0].mxu0
        %3646 = vdwg.mxu0
        %v3647 = vadd.f32 %v3564, %v3644
        %s3648 = scalar_lea.vmem %s6, 320
        %v3649 = vld [vmem:[%s3648] sm:$0xff]
        %v3650 = vld [vmem:[%s3648 + $0x8] sm:$0xff]
        %v3651 = vld [vmem:[%s3648 + $0x10] sm:$0xff]
        %v3652 = vld [vmem:[%s3648 + $0x18] sm:$0xff]
        %v3653 = vld [vmem:[%s3648 + $0x20] sm:$0xff]
        %v3654 = vld [vmem:[%s3648 + $0x28] sm:$0xff]
        %v3655 = vld [vmem:[%s3648 + $0x30] sm:$0xff]
        %v3656 = vld [vmem:[%s3648 + $0x38] sm:$0xff]
        %v3658 = vsel %vm1769, %v3225, 0
        %3660 = vmatprep.subr.mxu0 0.0
        %3661 = vmatpush1.msra.mxu0 %v3649
        %3662 = vmatprep.subr.mxu0 0.0
        %3663 = vmatpush1.msra.mxu0 %v3650
        %3664 = vmatprep.subr.mxu0 0.0
        %3665 = vmatpush1.msra.mxu0 %v3651
        %3666 = vmatprep.subr.mxu0 0.0
        %3667 = vmatpush1.msra.mxu0 %v3652
        %3668 = vmatprep.subr.mxu0 0.0
        %3669 = vmatpush1.msra.mxu0 %v3653
        %3670 = vmatprep.subr.mxu0 0.0
        %3671 = vmatpush1.msra.mxu0 %v3654
        %3672 = vmatprep.subr.mxu0 0.0
        %3673 = vmatpush1.msra.mxu0 %v3655
        %3674 = vmatprep.subr.mxu0 0.0
        %3675 = vmatpush1.msra.mxu0 %v3656
        %3676 = vmatprep.subr.mxu0 0.0
        %3677 = vmatpush1.msra.mxu0 0.0
        %3678 = vmatprep.subr.mxu0 0.0
        %3679 = vmatpush1.msra.mxu0 0.0
        %3680 = vmatprep.subr.mxu0 0.0
        %3681 = vmatpush1.msra.mxu0 0.0
        %3682 = vmatprep.subr.mxu0 0.0
        %3683 = vmatpush1.msra.mxu0 0.0
        %3684 = vmatprep.subr.mxu0 0.0
        %3685 = vmatpush1.msra.mxu0 0.0
        %3686 = vmatprep.subr.mxu0 0.0
        %3687 = vmatpush1.msra.mxu0 0.0
        %3688 = vmatprep.subr.mxu0 0.0
        %3689 = vmatpush1.msra.mxu0 0.0
        %3690 = vmatprep.subr.mxu0 0.0
        %3691 = vmatpush1.msra.mxu0 0.0
        %3692 = vmatprep.subr.mxu0 0.0
        %3693 = vmatpush1.msra.mxu0 0.0
        %3694 = vmatprep.subr.mxu0 0.0
        %3695 = vmatpush1.msra.mxu0 0.0
        %3696 = vmatprep.subr.mxu0 0.0
        %3697 = vmatpush1.msra.mxu0 0.0
        %3698 = vmatprep.subr.mxu0 0.0
        %3699 = vmatpush1.msra.mxu0 0.0
        %3700 = vmatprep.subr.mxu0 0.0
        %3701 = vmatpush1.msra.mxu0 0.0
        %3702 = vmatprep.subr.mxu0 0.0
        %3703 = vmatpush1.msra.mxu0 0.0
        %3704 = vmatprep.subr.mxu0 0.0
        %3705 = vmatpush1.msra.mxu0 0.0
        %3706 = vmatprep.subr.mxu0 0.0
        %3707 = vmatpush1.msra.mxu0 0.0
        %3708 = vmatprep.subr.mxu0 0.0
        %3709 = vmatpush1.msra.mxu0 0.0
        %3710 = vmatprep.subr.mxu0 0.0
        %3711 = vmatpush1.msra.mxu0 0.0
        %3712 = vmatprep.subr.mxu0 0.0
        %3713 = vmatpush1.msra.mxu0 0.0
        %3714 = vmatprep.subr.mxu0 0.0
        %3715 = vmatpush1.msra.mxu0 0.0
        %3716 = vmatprep.subr.mxu0 0.0
        %3717 = vmatpush1.msra.mxu0 0.0
        %3718 = vmatprep.subr.mxu0 0.0
        %3719 = vmatpush1.msra.mxu0 0.0
        %3720 = vmatprep.subr.mxu0 0.0
        %3721 = vmatpush1.msra.mxu0 0.0
        %3722 = vmatprep.subr.mxu0 0.0
        %3723 = vmatpush1.msra.mxu0 0.0
        %3724 = vmatprep.mubr.f32.mxu0 0.0
        %3725 = vmatmul.mubr.f32.gmra.mrb[0].mxu0 %v3658
        %v3726 = vpop.f32.mrb[0].mxu0
        %v3727 = vadd.f32 0.0, %v3726
        %v3728 = vpop.f32.mrb[0].mxu0
        %3729 = vdwg.mxu0
        %v3730 = vadd.f32 %v3647, %v3727
        %s3731 = scalar_lea.vmem %s6, 384
        %v3732 = vld [vmem:[%s3731] sm:$0xff]
        %v3733 = vld [vmem:[%s3731 + $0x8] sm:$0xff]
        %v3734 = vld [vmem:[%s3731 + $0x10] sm:$0xff]
        %v3735 = vld [vmem:[%s3731 + $0x18] sm:$0xff]
        %v3736 = vld [vmem:[%s3731 + $0x20] sm:$0xff]
        %v3737 = vld [vmem:[%s3731 + $0x28] sm:$0xff]
        %v3738 = vld [vmem:[%s3731 + $0x30] sm:$0xff]
        %v3739 = vld [vmem:[%s3731 + $0x38] sm:$0xff]
        %v3741 = vsel %vm1769, %v3226, 0
        %3743 = vmatprep.subr.mxu0 0.0
        %3744 = vmatpush1.msra.mxu0 %v3732
        %3745 = vmatprep.subr.mxu0 0.0
        %3746 = vmatpush1.msra.mxu0 %v3733
        %3747 = vmatprep.subr.mxu0 0.0
        %3748 = vmatpush1.msra.mxu0 %v3734
        %3749 = vmatprep.subr.mxu0 0.0
        %3750 = vmatpush1.msra.mxu0 %v3735
        %3751 = vmatprep.subr.mxu0 0.0
        %3752 = vmatpush1.msra.mxu0 %v3736
        %3753 = vmatprep.subr.mxu0 0.0
        %3754 = vmatpush1.msra.mxu0 %v3737
        %3755 = vmatprep.subr.mxu0 0.0
        %3756 = vmatpush1.msra.mxu0 %v3738
        %3757 = vmatprep.subr.mxu0 0.0
        %3758 = vmatpush1.msra.mxu0 %v3739
        %3759 = vmatprep.subr.mxu0 0.0
        %3760 = vmatpush1.msra.mxu0 0.0
        %3761 = vmatprep.subr.mxu0 0.0
        %3762 = vmatpush1.msra.mxu0 0.0
        %3763 = vmatprep.subr.mxu0 0.0
        %3764 = vmatpush1.msra.mxu0 0.0
        %3765 = vmatprep.subr.mxu0 0.0
        %3766 = vmatpush1.msra.mxu0 0.0
        %3767 = vmatprep.subr.mxu0 0.0
        %3768 = vmatpush1.msra.mxu0 0.0
        %3769 = vmatprep.subr.mxu0 0.0
        %3770 = vmatpush1.msra.mxu0 0.0
        %3771 = vmatprep.subr.mxu0 0.0
        %3772 = vmatpush1.msra.mxu0 0.0
        %3773 = vmatprep.subr.mxu0 0.0
        %3774 = vmatpush1.msra.mxu0 0.0
        %3775 = vmatprep.subr.mxu0 0.0
        %3776 = vmatpush1.msra.mxu0 0.0
        %3777 = vmatprep.subr.mxu0 0.0
        %3778 = vmatpush1.msra.mxu0 0.0
        %3779 = vmatprep.subr.mxu0 0.0
        %3780 = vmatpush1.msra.mxu0 0.0
        %3781 = vmatprep.subr.mxu0 0.0
        %3782 = vmatpush1.msra.mxu0 0.0
        %3783 = vmatprep.subr.mxu0 0.0
        %3784 = vmatpush1.msra.mxu0 0.0
        %3785 = vmatprep.subr.mxu0 0.0
        %3786 = vmatpush1.msra.mxu0 0.0
        %3787 = vmatprep.subr.mxu0 0.0
        %3788 = vmatpush1.msra.mxu0 0.0
        %3789 = vmatprep.subr.mxu0 0.0
        %3790 = vmatpush1.msra.mxu0 0.0
        %3791 = vmatprep.subr.mxu0 0.0
        %3792 = vmatpush1.msra.mxu0 0.0
        %3793 = vmatprep.subr.mxu0 0.0
        %3794 = vmatpush1.msra.mxu0 0.0
        %3795 = vmatprep.subr.mxu0 0.0
        %3796 = vmatpush1.msra.mxu0 0.0
        %3797 = vmatprep.subr.mxu0 0.0
        %3798 = vmatpush1.msra.mxu0 0.0
        %3799 = vmatprep.subr.mxu0 0.0
        %3800 = vmatpush1.msra.mxu0 0.0
        %3801 = vmatprep.subr.mxu0 0.0
        %3802 = vmatpush1.msra.mxu0 0.0
        %3803 = vmatprep.subr.mxu0 0.0
        %3804 = vmatpush1.msra.mxu0 0.0
        %3805 = vmatprep.subr.mxu0 0.0
        %3806 = vmatpush1.msra.mxu0 0.0
        %3807 = vmatprep.mubr.f32.mxu0 0.0
        %3808 = vmatmul.mubr.f32.gmra.mrb[0].mxu0 %v3741
        %v3809 = vpop.f32.mrb[0].mxu0
        %v3810 = vadd.f32 0.0, %v3809
        %v3811 = vpop.f32.mrb[0].mxu0
        %3812 = vdwg.mxu0
        %v3813 = vadd.f32 %v3730, %v3810
        %s3814 = scalar_lea.vmem %s6, 448
        %v3815 = vld [vmem:[%s3814] sm:$0xff]
        %v3816 = vld [vmem:[%s3814 + $0x8] sm:$0xff]
        %v3817 = vld [vmem:[%s3814 + $0x10] sm:$0xff]
        %v3818 = vld [vmem:[%s3814 + $0x18] sm:$0xff]
        %v3819 = vld [vmem:[%s3814 + $0x20] sm:$0xff]
        %v3820 = vld [vmem:[%s3814 + $0x28] sm:$0xff]
        %v3821 = vld [vmem:[%s3814 + $0x30] sm:$0xff]
        %v3822 = vld [vmem:[%s3814 + $0x38] sm:$0xff]
        %v3824 = vsel %vm1769, %v3227, 0
        %3826 = vmatprep.subr.mxu0 0.0
        %3827 = vmatpush1.msra.mxu0 %v3815
        %3828 = vmatprep.subr.mxu0 0.0
        %3829 = vmatpush1.msra.mxu0 %v3816
        %3830 = vmatprep.subr.mxu0 0.0
        %3831 = vmatpush1.msra.mxu0 %v3817
        %3832 = vmatprep.subr.mxu0 0.0
        %3833 = vmatpush1.msra.mxu0 %v3818
        %3834 = vmatprep.subr.mxu0 0.0
        %3835 = vmatpush1.msra.mxu0 %v3819
        %3836 = vmatprep.subr.mxu0 0.0
        %3837 = vmatpush1.msra.mxu0 %v3820
        %3838 = vmatprep.subr.mxu0 0.0
        %3839 = vmatpush1.msra.mxu0 %v3821
        %3840 = vmatprep.subr.mxu0 0.0
        %3841 = vmatpush1.msra.mxu0 %v3822
        %3842 = vmatprep.subr.mxu0 0.0
        %3843 = vmatpush1.msra.mxu0 0.0
        %3844 = vmatprep.subr.mxu0 0.0
        %3845 = vmatpush1.msra.mxu0 0.0
        %3846 = vmatprep.subr.mxu0 0.0
        %3847 = vmatpush1.msra.mxu0 0.0
        %3848 = vmatprep.subr.mxu0 0.0
        %3849 = vmatpush1.msra.mxu0 0.0
        %3850 = vmatprep.subr.mxu0 0.0
        %3851 = vmatpush1.msra.mxu0 0.0
        %3852 = vmatprep.subr.mxu0 0.0
        %3853 = vmatpush1.msra.mxu0 0.0
        %3854 = vmatprep.subr.mxu0 0.0
        %3855 = vmatpush1.msra.mxu0 0.0
        %3856 = vmatprep.subr.mxu0 0.0
        %3857 = vmatpush1.msra.mxu0 0.0
        %3858 = vmatprep.subr.mxu0 0.0
        %3859 = vmatpush1.msra.mxu0 0.0
        %3860 = vmatprep.subr.mxu0 0.0
        %3861 = vmatpush1.msra.mxu0 0.0
        %3862 = vmatprep.subr.mxu0 0.0
        %3863 = vmatpush1.msra.mxu0 0.0
        %3864 = vmatprep.subr.mxu0 0.0
        %3865 = vmatpush1.msra.mxu0 0.0
        %3866 = vmatprep.subr.mxu0 0.0
        %3867 = vmatpush1.msra.mxu0 0.0
        %3868 = vmatprep.subr.mxu0 0.0
        %3869 = vmatpush1.msra.mxu0 0.0
        %3870 = vmatprep.subr.mxu0 0.0
        %3871 = vmatpush1.msra.mxu0 0.0
        %3872 = vmatprep.subr.mxu0 0.0
        %3873 = vmatpush1.msra.mxu0 0.0
        %3874 = vmatprep.subr.mxu0 0.0
        %3875 = vmatpush1.msra.mxu0 0.0
        %3876 = vmatprep.subr.mxu0 0.0
        %3877 = vmatpush1.msra.mxu0 0.0
        %3878 = vmatprep.subr.mxu0 0.0
        %3879 = vmatpush1.msra.mxu0 0.0
        %3880 = vmatprep.subr.mxu0 0.0
        %3881 = vmatpush1.msra.mxu0 0.0
        %3882 = vmatprep.subr.mxu0 0.0
        %3883 = vmatpush1.msra.mxu0 0.0
        %3884 = vmatprep.subr.mxu0 0.0
        %3885 = vmatpush1.msra.mxu0 0.0
        %3886 = vmatprep.subr.mxu0 0.0
        %3887 = vmatpush1.msra.mxu0 0.0
        %3888 = vmatprep.subr.mxu0 0.0
        %3889 = vmatpush1.msra.mxu0 0.0
        %3890 = vmatprep.mubr.f32.mxu0 0.0
        %3891 = vmatmul.mubr.f32.gmra.mrb[0].mxu0 %v3824
        %v3892 = vpop.f32.mrb[0].mxu0
        %v3893 = vadd.f32 0.0, %v3892
        %v3894 = vpop.f32.mrb[0].mxu0
        %3895 = vdwg.mxu0
        %v3896 = vadd.f32 %v3813, %v3893
        %s3897 = scalar_lea.vmem %s6, 512
        %v3898 = vld [vmem:[%s3897] sm:$0xff]
        %v3899 = vld [vmem:[%s3897 + $0x8] sm:$0xff]
        %v3900 = vld [vmem:[%s3897 + $0x10] sm:$0xff]
        %v3901 = vld [vmem:[%s3897 + $0x18] sm:$0xff]
        %v3902 = vld [vmem:[%s3897 + $0x20] sm:$0xff]
        %v3903 = vld [vmem:[%s3897 + $0x28] sm:$0xff]
        %v3904 = vld [vmem:[%s3897 + $0x30] sm:$0xff]
        %v3905 = vld [vmem:[%s3897 + $0x38] sm:$0xff]
        %v3907 = vsel %vm1769, %v3228, 0
        %3909 = vmatprep.subr.mxu0 0.0
        %3910 = vmatpush1.msra.mxu0 %v3898
        %3911 = vmatprep.subr.mxu0 0.0
        %3912 = vmatpush1.msra.mxu0 %v3899
        %3913 = vmatprep.subr.mxu0 0.0
        %3914 = vmatpush1.msra.mxu0 %v3900
        %3915 = vmatprep.subr.mxu0 0.0
        %3916 = vmatpush1.msra.mxu0 %v3901
        %3917 = vmatprep.subr.mxu0 0.0
        %3918 = vmatpush1.msra.mxu0 %v3902
        %3919 = vmatprep.subr.mxu0 0.0
        %3920 = vmatpush1.msra.mxu0 %v3903
        %3921 = vmatprep.subr.mxu0 0.0
        %3922 = vmatpush1.msra.mxu0 %v3904
        %3923 = vmatprep.subr.mxu0 0.0
        %3924 = vmatpush1.msra.mxu0 %v3905
        %3925 = vmatprep.subr.mxu0 0.0
        %3926 = vmatpush1.msra.mxu0 0.0
        %3927 = vmatprep.subr.mxu0 0.0
        %3928 = vmatpush1.msra.mxu0 0.0
        %3929 = vmatprep.subr.mxu0 0.0
        %3930 = vmatpush1.msra.mxu0 0.0
        %3931 = vmatprep.subr.mxu0 0.0
        %3932 = vmatpush1.msra.mxu0 0.0
        %3933 = vmatprep.subr.mxu0 0.0
        %3934 = vmatpush1.msra.mxu0 0.0
        %3935 = vmatprep.subr.mxu0 0.0
        %3936 = vmatpush1.msra.mxu0 0.0
        %3937 = vmatprep.subr.mxu0 0.0
        %3938 = vmatpush1.msra.mxu0 0.0
        %3939 = vmatprep.subr.mxu0 0.0
        %3940 = vmatpush1.msra.mxu0 0.0
        %3941 = vmatprep.subr.mxu0 0.0
        %3942 = vmatpush1.msra.mxu0 0.0
        %3943 = vmatprep.subr.mxu0 0.0
        %3944 = vmatpush1.msra.mxu0 0.0
        %3945 = vmatprep.subr.mxu0 0.0
        %3946 = vmatpush1.msra.mxu0 0.0
        %3947 = vmatprep.subr.mxu0 0.0
        %3948 = vmatpush1.msra.mxu0 0.0
        %3949 = vmatprep.subr.mxu0 0.0
        %3950 = vmatpush1.msra.mxu0 0.0
        %3951 = vmatprep.subr.mxu0 0.0
        %3952 = vmatpush1.msra.mxu0 0.0
        %3953 = vmatprep.subr.mxu0 0.0
        %3954 = vmatpush1.msra.mxu0 0.0
        %3955 = vmatprep.subr.mxu0 0.0
        %3956 = vmatpush1.msra.mxu0 0.0
        %3957 = vmatprep.subr.mxu0 0.0
        %3958 = vmatpush1.msra.mxu0 0.0
        %3959 = vmatprep.subr.mxu0 0.0
        %3960 = vmatpush1.msra.mxu0 0.0
        %3961 = vmatprep.subr.mxu0 0.0
        %3962 = vmatpush1.msra.mxu0 0.0
        %3963 = vmatprep.subr.mxu0 0.0
        %3964 = vmatpush1.msra.mxu0 0.0
        %3965 = vmatprep.subr.mxu0 0.0
        %3966 = vmatpush1.msra.mxu0 0.0
        %3967 = vmatprep.subr.mxu0 0.0
        %3968 = vmatpush1.msra.mxu0 0.0
        %3969 = vmatprep.subr.mxu0 0.0
        %3970 = vmatpush1.msra.mxu0 0.0
        %3971 = vmatprep.subr.mxu0 0.0
        %3972 = vmatpush1.msra.mxu0 0.0
        %3973 = vmatprep.mubr.f32.mxu0 0.0
        %3974 = vmatmul.mubr.f32.gmra.mrb[0].mxu0 %v3907
        %v3975 = vpop.f32.mrb[0].mxu0
        %v3976 = vadd.f32 0.0, %v3975
        %v3977 = vpop.f32.mrb[0].mxu0
        %3978 = vdwg.mxu0
        %v3979 = vadd.f32 %v3896, %v3976
        %s3980 = scalar_lea.vmem %s6, 576
        %v3981 = vld [vmem:[%s3980] sm:$0xff]
        %v3982 = vld [vmem:[%s3980 + $0x8] sm:$0xff]
        %v3983 = vld [vmem:[%s3980 + $0x10] sm:$0xff]
        %v3984 = vld [vmem:[%s3980 + $0x18] sm:$0xff]
        %v3985 = vld [vmem:[%s3980 + $0x20] sm:$0xff]
        %v3986 = vld [vmem:[%s3980 + $0x28] sm:$0xff]
        %v3987 = vld [vmem:[%s3980 + $0x30] sm:$0xff]
        %v3988 = vld [vmem:[%s3980 + $0x38] sm:$0xff]
        %v3990 = vsel %vm1769, %v3229, 0
        %3992 = vmatprep.subr.mxu0 0.0
        %3993 = vmatpush1.msra.mxu0 %v3981
        %3994 = vmatprep.subr.mxu0 0.0
        %3995 = vmatpush1.msra.mxu0 %v3982
        %3996 = vmatprep.subr.mxu0 0.0
        %3997 = vmatpush1.msra.mxu0 %v3983
        %3998 = vmatprep.subr.mxu0 0.0
        %3999 = vmatpush1.msra.mxu0 %v3984
        %4000 = vmatprep.subr.mxu0 0.0
        %4001 = vmatpush1.msra.mxu0 %v3985
        %4002 = vmatprep.subr.mxu0 0.0
        %4003 = vmatpush1.msra.mxu0 %v3986
        %4004 = vmatprep.subr.mxu0 0.0
        %4005 = vmatpush1.msra.mxu0 %v3987
        %4006 = vmatprep.subr.mxu0 0.0
        %4007 = vmatpush1.msra.mxu0 %v3988
        %4008 = vmatprep.subr.mxu0 0.0
        %4009 = vmatpush1.msra.mxu0 0.0
        %4010 = vmatprep.subr.mxu0 0.0
        %4011 = vmatpush1.msra.mxu0 0.0
        %4012 = vmatprep.subr.mxu0 0.0
        %4013 = vmatpush1.msra.mxu0 0.0
        %4014 = vmatprep.subr.mxu0 0.0
        %4015 = vmatpush1.msra.mxu0 0.0
        %4016 = vmatprep.subr.mxu0 0.0
        %4017 = vmatpush1.msra.mxu0 0.0
        %4018 = vmatprep.subr.mxu0 0.0
        %4019 = vmatpush1.msra.mxu0 0.0
        %4020 = vmatprep.subr.mxu0 0.0
        %4021 = vmatpush1.msra.mxu0 0.0
        %4022 = vmatprep.subr.mxu0 0.0
        %4023 = vmatpush1.msra.mxu0 0.0
        %4024 = vmatprep.subr.mxu0 0.0
        %4025 = vmatpush1.msra.mxu0 0.0
        %4026 = vmatprep.subr.mxu0 0.0
        %4027 = vmatpush1.msra.mxu0 0.0
        %4028 = vmatprep.subr.mxu0 0.0
        %4029 = vmatpush1.msra.mxu0 0.0
        %4030 = vmatprep.subr.mxu0 0.0
        %4031 = vmatpush1.msra.mxu0 0.0
        %4032 = vmatprep.subr.mxu0 0.0
        %4033 = vmatpush1.msra.mxu0 0.0
        %4034 = vmatprep.subr.mxu0 0.0
        %4035 = vmatpush1.msra.mxu0 0.0
        %4036 = vmatprep.subr.mxu0 0.0
        %4037 = vmatpush1.msra.mxu0 0.0
        %4038 = vmatprep.subr.mxu0 0.0
        %4039 = vmatpush1.msra.mxu0 0.0
        %4040 = vmatprep.subr.mxu0 0.0
        %4041 = vmatpush1.msra.mxu0 0.0
        %4042 = vmatprep.subr.mxu0 0.0
        %4043 = vmatpush1.msra.mxu0 0.0
        %4044 = vmatprep.subr.mxu0 0.0
        %4045 = vmatpush1.msra.mxu0 0.0
        %4046 = vmatprep.subr.mxu0 0.0
        %4047 = vmatpush1.msra.mxu0 0.0
        %4048 = vmatprep.subr.mxu0 0.0
        %4049 = vmatpush1.msra.mxu0 0.0
        %4050 = vmatprep.subr.mxu0 0.0
        %4051 = vmatpush1.msra.mxu0 0.0
        %4052 = vmatprep.subr.mxu0 0.0
        %4053 = vmatpush1.msra.mxu0 0.0
        %4054 = vmatprep.subr.mxu0 0.0
        %4055 = vmatpush1.msra.mxu0 0.0
        %4056 = vmatprep.mubr.f32.mxu0 0.0
        %4057 = vmatmul.mubr.f32.gmra.mrb[0].mxu0 %v3990
        %v4058 = vpop.f32.mrb[0].mxu0
        %v4059 = vadd.f32 0.0, %v4058
        %v4060 = vpop.f32.mrb[0].mxu0
        %4061 = vdwg.mxu0
        %v4062 = vadd.f32 %v3979, %v4059
        %s4063 = scalar_lea.vmem %s6, 640
        %v4064 = vld [vmem:[%s4063] sm:$0xff]
        %v4065 = vld [vmem:[%s4063 + $0x8] sm:$0xff]
        %v4066 = vld [vmem:[%s4063 + $0x10] sm:$0xff]
        %v4067 = vld [vmem:[%s4063 + $0x18] sm:$0xff]
        %v4068 = vld [vmem:[%s4063 + $0x20] sm:$0xff]
        %v4069 = vld [vmem:[%s4063 + $0x28] sm:$0xff]
        %v4070 = vld [vmem:[%s4063 + $0x30] sm:$0xff]
        %v4071 = vld [vmem:[%s4063 + $0x38] sm:$0xff]
        %v4073 = vsel %vm1769, %v3230, 0
        %4075 = vmatprep.subr.mxu0 0.0
        %4076 = vmatpush1.msra.mxu0 %v4064
        %4077 = vmatprep.subr.mxu0 0.0
        %4078 = vmatpush1.msra.mxu0 %v4065
        %4079 = vmatprep.subr.mxu0 0.0
        %4080 = vmatpush1.msra.mxu0 %v4066
        %4081 = vmatprep.subr.mxu0 0.0
        %4082 = vmatpush1.msra.mxu0 %v4067
        %4083 = vmatprep.subr.mxu0 0.0
        %4084 = vmatpush1.msra.mxu0 %v4068
        %4085 = vmatprep.subr.mxu0 0.0
        %4086 = vmatpush1.msra.mxu0 %v4069
        %4087 = vmatprep.subr.mxu0 0.0
        %4088 = vmatpush1.msra.mxu0 %v4070
        %4089 = vmatprep.subr.mxu0 0.0
        %4090 = vmatpush1.msra.mxu0 %v4071
        %4091 = vmatprep.subr.mxu0 0.0
        %4092 = vmatpush1.msra.mxu0 0.0
        %4093 = vmatprep.subr.mxu0 0.0
        %4094 = vmatpush1.msra.mxu0 0.0
        %4095 = vmatprep.subr.mxu0 0.0
        %4096 = vmatpush1.msra.mxu0 0.0
        %4097 = vmatprep.subr.mxu0 0.0
        %4098 = vmatpush1.msra.mxu0 0.0
        %4099 = vmatprep.subr.mxu0 0.0
        %4100 = vmatpush1.msra.mxu0 0.0
        %4101 = vmatprep.subr.mxu0 0.0
        %4102 = vmatpush1.msra.mxu0 0.0
        %4103 = vmatprep.subr.mxu0 0.0
        %4104 = vmatpush1.msra.mxu0 0.0
        %4105 = vmatprep.subr.mxu0 0.0
        %4106 = vmatpush1.msra.mxu0 0.0
        %4107 = vmatprep.subr.mxu0 0.0
        %4108 = vmatpush1.msra.mxu0 0.0
        %4109 = vmatprep.subr.mxu0 0.0
        %4110 = vmatpush1.msra.mxu0 0.0
        %4111 = vmatprep.subr.mxu0 0.0
        %4112 = vmatpush1.msra.mxu0 0.0
        %4113 = vmatprep.subr.mxu0 0.0
        %4114 = vmatpush1.msra.mxu0 0.0
        %4115 = vmatprep.subr.mxu0 0.0
        %4116 = vmatpush1.msra.mxu0 0.0
        %4117 = vmatprep.subr.mxu0 0.0
        %4118 = vmatpush1.msra.mxu0 0.0
        %4119 = vmatprep.subr.mxu0 0.0
        %4120 = vmatpush1.msra.mxu0 0.0
        %4121 = vmatprep.subr.mxu0 0.0
        %4122 = vmatpush1.msra.mxu0 0.0
        %4123 = vmatprep.subr.mxu0 0.0
        %4124 = vmatpush1.msra.mxu0 0.0
        %4125 = vmatprep.subr.mxu0 0.0
        %4126 = vmatpush1.msra.mxu0 0.0
        %4127 = vmatprep.subr.mxu0 0.0
        %4128 = vmatpush1.msra.mxu0 0.0
        %4129 = vmatprep.subr.mxu0 0.0
        %4130 = vmatpush1.msra.mxu0 0.0
        %4131 = vmatprep.subr.mxu0 0.0
        %4132 = vmatpush1.msra.mxu0 0.0
        %4133 = vmatprep.subr.mxu0 0.0
        %4134 = vmatpush1.msra.mxu0 0.0
        %4135 = vmatprep.subr.mxu0 0.0
        %4136 = vmatpush1.msra.mxu0 0.0
        %4137 = vmatprep.subr.mxu0 0.0
        %4138 = vmatpush1.msra.mxu0 0.0
        %4139 = vmatprep.mubr.f32.mxu0 0.0
        %4140 = vmatmul.mubr.f32.gmra.mrb[0].mxu0 %v4073
        %v4141 = vpop.f32.mrb[0].mxu0
        %v4142 = vadd.f32 0.0, %v4141
        %v4143 = vpop.f32.mrb[0].mxu0
        %4144 = vdwg.mxu0
        %v4145 = vadd.f32 %v4062, %v4142
        %s4146 = scalar_lea.vmem %s6, 704
        %v4147 = vld [vmem:[%s4146] sm:$0xff]
        %v4148 = vld [vmem:[%s4146 + $0x8] sm:$0xff]
        %v4149 = vld [vmem:[%s4146 + $0x10] sm:$0xff]
        %v4150 = vld [vmem:[%s4146 + $0x18] sm:$0xff]
        %v4151 = vld [vmem:[%s4146 + $0x20] sm:$0xff]
        %v4152 = vld [vmem:[%s4146 + $0x28] sm:$0xff]
        %v4153 = vld [vmem:[%s4146 + $0x30] sm:$0xff]
        %v4154 = vld [vmem:[%s4146 + $0x38] sm:$0xff]
        %v4156 = vsel %vm1769, %v3231, 0
        %4158 = vmatprep.subr.mxu0 0.0
        %4159 = vmatpush1.msra.mxu0 %v4147
        %4160 = vmatprep.subr.mxu0 0.0
        %4161 = vmatpush1.msra.mxu0 %v4148
        %4162 = vmatprep.subr.mxu0 0.0
        %4163 = vmatpush1.msra.mxu0 %v4149
        %4164 = vmatprep.subr.mxu0 0.0
        %4165 = vmatpush1.msra.mxu0 %v4150
        %4166 = vmatprep.subr.mxu0 0.0
        %4167 = vmatpush1.msra.mxu0 %v4151
        %4168 = vmatprep.subr.mxu0 0.0
        %4169 = vmatpush1.msra.mxu0 %v4152
        %4170 = vmatprep.subr.mxu0 0.0
        %4171 = vmatpush1.msra.mxu0 %v4153
        %4172 = vmatprep.subr.mxu0 0.0
        %4173 = vmatpush1.msra.mxu0 %v4154
        %4174 = vmatprep.subr.mxu0 0.0
        %4175 = vmatpush1.msra.mxu0 0.0
        %4176 = vmatprep.subr.mxu0 0.0
        %4177 = vmatpush1.msra.mxu0 0.0
        %4178 = vmatprep.subr.mxu0 0.0
        %4179 = vmatpush1.msra.mxu0 0.0
        %4180 = vmatprep.subr.mxu0 0.0
        %4181 = vmatpush1.msra.mxu0 0.0
        %4182 = vmatprep.subr.mxu0 0.0
        %4183 = vmatpush1.msra.mxu0 0.0
        %4184 = vmatprep.subr.mxu0 0.0
        %4185 = vmatpush1.msra.mxu0 0.0
        %4186 = vmatprep.subr.mxu0 0.0
        %4187 = vmatpush1.msra.mxu0 0.0
        %4188 = vmatprep.subr.mxu0 0.0
        %4189 = vmatpush1.msra.mxu0 0.0
        %4190 = vmatprep.subr.mxu0 0.0
        %4191 = vmatpush1.msra.mxu0 0.0
        %4192 = vmatprep.subr.mxu0 0.0
        %4193 = vmatpush1.msra.mxu0 0.0
        %4194 = vmatprep.subr.mxu0 0.0
        %4195 = vmatpush1.msra.mxu0 0.0
        %4196 = vmatprep.subr.mxu0 0.0
        %4197 = vmatpush1.msra.mxu0 0.0
        %4198 = vmatprep.subr.mxu0 0.0
        %4199 = vmatpush1.msra.mxu0 0.0
        %4200 = vmatprep.subr.mxu0 0.0
        %4201 = vmatpush1.msra.mxu0 0.0
        %4202 = vmatprep.subr.mxu0 0.0
        %4203 = vmatpush1.msra.mxu0 0.0
        %4204 = vmatprep.subr.mxu0 0.0
        %4205 = vmatpush1.msra.mxu0 0.0
        %4206 = vmatprep.subr.mxu0 0.0
        %4207 = vmatpush1.msra.mxu0 0.0
        %4208 = vmatprep.subr.mxu0 0.0
        %4209 = vmatpush1.msra.mxu0 0.0
        %4210 = vmatprep.subr.mxu0 0.0
        %4211 = vmatpush1.msra.mxu0 0.0
        %4212 = vmatprep.subr.mxu0 0.0
        %4213 = vmatpush1.msra.mxu0 0.0
        %4214 = vmatprep.subr.mxu0 0.0
        %4215 = vmatpush1.msra.mxu0 0.0
        %4216 = vmatprep.subr.mxu0 0.0
        %4217 = vmatpush1.msra.mxu0 0.0
        %4218 = vmatprep.subr.mxu0 0.0
        %4219 = vmatpush1.msra.mxu0 0.0
        %4220 = vmatprep.subr.mxu0 0.0
        %4221 = vmatpush1.msra.mxu0 0.0
        %4222 = vmatprep.mubr.f32.mxu0 0.0
        %4223 = vmatmul.mubr.f32.gmra.mrb[0].mxu0 %v4156
        %v4224 = vpop.f32.mrb[0].mxu0
        %v4225 = vadd.f32 0.0, %v4224
        %v4226 = vpop.f32.mrb[0].mxu0
        %4227 = vdwg.mxu0
        %v4228 = vadd.f32 %v4145, %v4225
        %s4229 = scalar_lea.vmem %s6, 768
        %v4230 = vld [vmem:[%s4229] sm:$0xff]
        %v4231 = vld [vmem:[%s4229 + $0x8] sm:$0xff]
        %v4232 = vld [vmem:[%s4229 + $0x10] sm:$0xff]
        %v4233 = vld [vmem:[%s4229 + $0x18] sm:$0xff]
        %v4234 = vld [vmem:[%s4229 + $0x20] sm:$0xff]
        %v4235 = vld [vmem:[%s4229 + $0x28] sm:$0xff]
        %v4236 = vld [vmem:[%s4229 + $0x30] sm:$0xff]
        %v4237 = vld [vmem:[%s4229 + $0x38] sm:$0xff]
        %v4239 = vsel %vm1769, %v3232, 0
        %4241 = vmatprep.subr.mxu0 0.0
        %4242 = vmatpush1.msra.mxu0 %v4230
        %4243 = vmatprep.subr.mxu0 0.0
        %4244 = vmatpush1.msra.mxu0 %v4231
        %4245 = vmatprep.subr.mxu0 0.0
        %4246 = vmatpush1.msra.mxu0 %v4232
        %4247 = vmatprep.subr.mxu0 0.0
        %4248 = vmatpush1.msra.mxu0 %v4233
        %4249 = vmatprep.subr.mxu0 0.0
        %4250 = vmatpush1.msra.mxu0 %v4234
        %4251 = vmatprep.subr.mxu0 0.0
        %4252 = vmatpush1.msra.mxu0 %v4235
        %4253 = vmatprep.subr.mxu0 0.0
        %4254 = vmatpush1.msra.mxu0 %v4236
        %4255 = vmatprep.subr.mxu0 0.0
        %4256 = vmatpush1.msra.mxu0 %v4237
        %4257 = vmatprep.subr.mxu0 0.0
        %4258 = vmatpush1.msra.mxu0 0.0
        %4259 = vmatprep.subr.mxu0 0.0
        %4260 = vmatpush1.msra.mxu0 0.0
        %4261 = vmatprep.subr.mxu0 0.0
        %4262 = vmatpush1.msra.mxu0 0.0
        %4263 = vmatprep.subr.mxu0 0.0
        %4264 = vmatpush1.msra.mxu0 0.0
        %4265 = vmatprep.subr.mxu0 0.0
        %4266 = vmatpush1.msra.mxu0 0.0
        %4267 = vmatprep.subr.mxu0 0.0
        %4268 = vmatpush1.msra.mxu0 0.0
        %4269 = vmatprep.subr.mxu0 0.0
        %4270 = vmatpush1.msra.mxu0 0.0
        %4271 = vmatprep.subr.mxu0 0.0
        %4272 = vmatpush1.msra.mxu0 0.0
        %4273 = vmatprep.subr.mxu0 0.0
        %4274 = vmatpush1.msra.mxu0 0.0
        %4275 = vmatprep.subr.mxu0 0.0
        %4276 = vmatpush1.msra.mxu0 0.0
        %4277 = vmatprep.subr.mxu0 0.0
        %4278 = vmatpush1.msra.mxu0 0.0
        %4279 = vmatprep.subr.mxu0 0.0
        %4280 = vmatpush1.msra.mxu0 0.0
        %4281 = vmatprep.subr.mxu0 0.0
        %4282 = vmatpush1.msra.mxu0 0.0
        %4283 = vmatprep.subr.mxu0 0.0
        %4284 = vmatpush1.msra.mxu0 0.0
        %4285 = vmatprep.subr.mxu0 0.0
        %4286 = vmatpush1.msra.mxu0 0.0
        %4287 = vmatprep.subr.mxu0 0.0
        %4288 = vmatpush1.msra.mxu0 0.0
        %4289 = vmatprep.subr.mxu0 0.0
        %4290 = vmatpush1.msra.mxu0 0.0
        %4291 = vmatprep.subr.mxu0 0.0
        %4292 = vmatpush1.msra.mxu0 0.0
        %4293 = vmatprep.subr.mxu0 0.0
        %4294 = vmatpush1.msra.mxu0 0.0
        %4295 = vmatprep.subr.mxu0 0.0
        %4296 = vmatpush1.msra.mxu0 0.0
        %4297 = vmatprep.subr.mxu0 0.0
        %4298 = vmatpush1.msra.mxu0 0.0
        %4299 = vmatprep.subr.mxu0 0.0
        %4300 = vmatpush1.msra.mxu0 0.0
        %4301 = vmatprep.subr.mxu0 0.0
        %4302 = vmatpush1.msra.mxu0 0.0
        %4303 = vmatprep.subr.mxu0 0.0
        %4304 = vmatpush1.msra.mxu0 0.0
        %4305 = vmatprep.mubr.f32.mxu0 0.0
        %4306 = vmatmul.mubr.f32.gmra.mrb[0].mxu0 %v4239
        %v4307 = vpop.f32.mrb[0].mxu0
        %v4308 = vadd.f32 0.0, %v4307
        %v4309 = vpop.f32.mrb[0].mxu0
        %4310 = vdwg.mxu0
        %v4311 = vadd.f32 %v4228, %v4308
        %s4312 = scalar_lea.vmem %s6, 832
        %v4313 = vld [vmem:[%s4312] sm:$0xff]
        %v4314 = vld [vmem:[%s4312 + $0x8] sm:$0xff]
        %v4315 = vld [vmem:[%s4312 + $0x10] sm:$0xff]
        %v4316 = vld [vmem:[%s4312 + $0x18] sm:$0xff]
        %v4317 = vld [vmem:[%s4312 + $0x20] sm:$0xff]
        %v4318 = vld [vmem:[%s4312 + $0x28] sm:$0xff]
        %v4319 = vld [vmem:[%s4312 + $0x30] sm:$0xff]
        %v4320 = vld [vmem:[%s4312 + $0x38] sm:$0xff]
        %v4322 = vsel %vm1769, %v3233, 0
        %4324 = vmatprep.subr.mxu0 0.0
        %4325 = vmatpush1.msra.mxu0 %v4313
        %4326 = vmatprep.subr.mxu0 0.0
        %4327 = vmatpush1.msra.mxu0 %v4314
        %4328 = vmatprep.subr.mxu0 0.0
        %4329 = vmatpush1.msra.mxu0 %v4315
        %4330 = vmatprep.subr.mxu0 0.0
        %4331 = vmatpush1.msra.mxu0 %v4316
        %4332 = vmatprep.subr.mxu0 0.0
        %4333 = vmatpush1.msra.mxu0 %v4317
        %4334 = vmatprep.subr.mxu0 0.0
        %4335 = vmatpush1.msra.mxu0 %v4318
        %4336 = vmatprep.subr.mxu0 0.0
        %4337 = vmatpush1.msra.mxu0 %v4319
        %4338 = vmatprep.subr.mxu0 0.0
        %4339 = vmatpush1.msra.mxu0 %v4320
        %4340 = vmatprep.subr.mxu0 0.0
        %4341 = vmatpush1.msra.mxu0 0.0
        %4342 = vmatprep.subr.mxu0 0.0
        %4343 = vmatpush1.msra.mxu0 0.0
        %4344 = vmatprep.subr.mxu0 0.0
        %4345 = vmatpush1.msra.mxu0 0.0
        %4346 = vmatprep.subr.mxu0 0.0
        %4347 = vmatpush1.msra.mxu0 0.0
        %4348 = vmatprep.subr.mxu0 0.0
        %4349 = vmatpush1.msra.mxu0 0.0
        %4350 = vmatprep.subr.mxu0 0.0
        %4351 = vmatpush1.msra.mxu0 0.0
        %4352 = vmatprep.subr.mxu0 0.0
        %4353 = vmatpush1.msra.mxu0 0.0
        %4354 = vmatprep.subr.mxu0 0.0
        %4355 = vmatpush1.msra.mxu0 0.0
        %4356 = vmatprep.subr.mxu0 0.0
        %4357 = vmatpush1.msra.mxu0 0.0
        %4358 = vmatprep.subr.mxu0 0.0
        %4359 = vmatpush1.msra.mxu0 0.0
        %4360 = vmatprep.subr.mxu0 0.0
        %4361 = vmatpush1.msra.mxu0 0.0
        %4362 = vmatprep.subr.mxu0 0.0
        %4363 = vmatpush1.msra.mxu0 0.0
        %4364 = vmatprep.subr.mxu0 0.0
        %4365 = vmatpush1.msra.mxu0 0.0
        %4366 = vmatprep.subr.mxu0 0.0
        %4367 = vmatpush1.msra.mxu0 0.0
        %4368 = vmatprep.subr.mxu0 0.0
        %4369 = vmatpush1.msra.mxu0 0.0
        %4370 = vmatprep.subr.mxu0 0.0
        %4371 = vmatpush1.msra.mxu0 0.0
        %4372 = vmatprep.subr.mxu0 0.0
        %4373 = vmatpush1.msra.mxu0 0.0
        %4374 = vmatprep.subr.mxu0 0.0
        %4375 = vmatpush1.msra.mxu0 0.0
        %4376 = vmatprep.subr.mxu0 0.0
        %4377 = vmatpush1.msra.mxu0 0.0
        %4378 = vmatprep.subr.mxu0 0.0
        %4379 = vmatpush1.msra.mxu0 0.0
        %4380 = vmatprep.subr.mxu0 0.0
        %4381 = vmatpush1.msra.mxu0 0.0
        %4382 = vmatprep.subr.mxu0 0.0
        %4383 = vmatpush1.msra.mxu0 0.0
        %4384 = vmatprep.subr.mxu0 0.0
        %4385 = vmatpush1.msra.mxu0 0.0
        %4386 = vmatprep.subr.mxu0 0.0
        %4387 = vmatpush1.msra.mxu0 0.0
        %4388 = vmatprep.mubr.f32.mxu0 0.0
        %4389 = vmatmul.mubr.f32.gmra.mrb[0].mxu0 %v4322
        %v4390 = vpop.f32.mrb[0].mxu0
        %v4391 = vadd.f32 0.0, %v4390
        %v4392 = vpop.f32.mrb[0].mxu0
        %4393 = vdwg.mxu0
        %v4394 = vadd.f32 %v4311, %v4391
        %s4395 = scalar_lea.vmem %s6, 896
        %v4396 = vld [vmem:[%s4395] sm:$0xff]
        %v4397 = vld [vmem:[%s4395 + $0x8] sm:$0xff]
        %v4398 = vld [vmem:[%s4395 + $0x10] sm:$0xff]
        %v4399 = vld [vmem:[%s4395 + $0x18] sm:$0xff]
        %v4400 = vld [vmem:[%s4395 + $0x20] sm:$0xff]
        %v4401 = vld [vmem:[%s4395 + $0x28] sm:$0xff]
        %v4402 = vld [vmem:[%s4395 + $0x30] sm:$0xff]
        %v4403 = vld [vmem:[%s4395 + $0x38] sm:$0xff]
        %v4405 = vsel %vm1769, %v3234, 0
        %4407 = vmatprep.subr.mxu0 0.0
        %4408 = vmatpush1.msra.mxu0 %v4396
        %4409 = vmatprep.subr.mxu0 0.0
        %4410 = vmatpush1.msra.mxu0 %v4397
        %4411 = vmatprep.subr.mxu0 0.0
        %4412 = vmatpush1.msra.mxu0 %v4398
        %4413 = vmatprep.subr.mxu0 0.0
        %4414 = vmatpush1.msra.mxu0 %v4399
        %4415 = vmatprep.subr.mxu0 0.0
        %4416 = vmatpush1.msra.mxu0 %v4400
        %4417 = vmatprep.subr.mxu0 0.0
        %4418 = vmatpush1.msra.mxu0 %v4401
        %4419 = vmatprep.subr.mxu0 0.0
        %4420 = vmatpush1.msra.mxu0 %v4402
        %4421 = vmatprep.subr.mxu0 0.0
        %4422 = vmatpush1.msra.mxu0 %v4403
        %4423 = vmatprep.subr.mxu0 0.0
        %4424 = vmatpush1.msra.mxu0 0.0
        %4425 = vmatprep.subr.mxu0 0.0
        %4426 = vmatpush1.msra.mxu0 0.0
        %4427 = vmatprep.subr.mxu0 0.0
        %4428 = vmatpush1.msra.mxu0 0.0
        %4429 = vmatprep.subr.mxu0 0.0
        %4430 = vmatpush1.msra.mxu0 0.0
        %4431 = vmatprep.subr.mxu0 0.0
        %4432 = vmatpush1.msra.mxu0 0.0
        %4433 = vmatprep.subr.mxu0 0.0
        %4434 = vmatpush1.msra.mxu0 0.0
        %4435 = vmatprep.subr.mxu0 0.0
        %4436 = vmatpush1.msra.mxu0 0.0
        %4437 = vmatprep.subr.mxu0 0.0
        %4438 = vmatpush1.msra.mxu0 0.0
        %4439 = vmatprep.subr.mxu0 0.0
        %4440 = vmatpush1.msra.mxu0 0.0
        %4441 = vmatprep.subr.mxu0 0.0
        %4442 = vmatpush1.msra.mxu0 0.0
        %4443 = vmatprep.subr.mxu0 0.0
        %4444 = vmatpush1.msra.mxu0 0.0
        %4445 = vmatprep.subr.mxu0 0.0
        %4446 = vmatpush1.msra.mxu0 0.0
        %4447 = vmatprep.subr.mxu0 0.0
        %4448 = vmatpush1.msra.mxu0 0.0
        %4449 = vmatprep.subr.mxu0 0.0
        %4450 = vmatpush1.msra.mxu0 0.0
        %4451 = vmatprep.subr.mxu0 0.0
        %4452 = vmatpush1.msra.mxu0 0.0
        %4453 = vmatprep.subr.mxu0 0.0
        %4454 = vmatpush1.msra.mxu0 0.0
        %4455 = vmatprep.subr.mxu0 0.0
        %4456 = vmatpush1.msra.mxu0 0.0
        %4457 = vmatprep.subr.mxu0 0.0
        %4458 = vmatpush1.msra.mxu0 0.0
        %4459 = vmatprep.subr.mxu0 0.0
        %4460 = vmatpush1.msra.mxu0 0.0
        %4461 = vmatprep.subr.mxu0 0.0
        %4462 = vmatpush1.msra.mxu0 0.0
        %4463 = vmatprep.subr.mxu0 0.0
        %4464 = vmatpush1.msra.mxu0 0.0
        %4465 = vmatprep.subr.mxu0 0.0
        %4466 = vmatpush1.msra.mxu0 0.0
        %4467 = vmatprep.subr.mxu0 0.0
        %4468 = vmatpush1.msra.mxu0 0.0
        %4469 = vmatprep.subr.mxu0 0.0
        %4470 = vmatpush1.msra.mxu0 0.0
        %4471 = vmatprep.mubr.f32.mxu0 0.0
        %4472 = vmatmul.mubr.f32.gmra.mrb[0].mxu0 %v4405
        %v4473 = vpop.f32.mrb[0].mxu0
        %v4474 = vadd.f32 0.0, %v4473
        %v4475 = vpop.f32.mrb[0].mxu0
        %4476 = vdwg.mxu0
        %v4477 = vadd.f32 %v4394, %v4474
        %s4478 = scalar_lea.vmem %s6, 960
        %v4479 = vld [vmem:[%s4478] sm:$0xff]
        %v4480 = vld [vmem:[%s4478 + $0x8] sm:$0xff]
        %v4481 = vld [vmem:[%s4478 + $0x10] sm:$0xff]
        %v4482 = vld [vmem:[%s4478 + $0x18] sm:$0xff]
        %v4483 = vld [vmem:[%s4478 + $0x20] sm:$0xff]
        %v4484 = vld [vmem:[%s4478 + $0x28] sm:$0xff]
        %v4485 = vld [vmem:[%s4478 + $0x30] sm:$0xff]
        %v4486 = vld [vmem:[%s4478 + $0x38] sm:$0xff]
        %v4488 = vsel %vm1769, %v3235, 0
        %4490 = vmatprep.subr.mxu0 0.0
        %4491 = vmatpush1.msra.mxu0 %v4479
        %4492 = vmatprep.subr.mxu0 0.0
        %4493 = vmatpush1.msra.mxu0 %v4480
        %4494 = vmatprep.subr.mxu0 0.0
        %4495 = vmatpush1.msra.mxu0 %v4481
        %4496 = vmatprep.subr.mxu0 0.0
        %4497 = vmatpush1.msra.mxu0 %v4482
        %4498 = vmatprep.subr.mxu0 0.0
        %4499 = vmatpush1.msra.mxu0 %v4483
        %4500 = vmatprep.subr.mxu0 0.0
        %4501 = vmatpush1.msra.mxu0 %v4484
        %4502 = vmatprep.subr.mxu0 0.0
        %4503 = vmatpush1.msra.mxu0 %v4485
        %4504 = vmatprep.subr.mxu0 0.0
        %4505 = vmatpush1.msra.mxu0 %v4486
        %4506 = vmatprep.subr.mxu0 0.0
        %4507 = vmatpush1.msra.mxu0 0.0
        %4508 = vmatprep.subr.mxu0 0.0
        %4509 = vmatpush1.msra.mxu0 0.0
        %4510 = vmatprep.subr.mxu0 0.0
        %4511 = vmatpush1.msra.mxu0 0.0
        %4512 = vmatprep.subr.mxu0 0.0
        %4513 = vmatpush1.msra.mxu0 0.0
        %4514 = vmatprep.subr.mxu0 0.0
        %4515 = vmatpush1.msra.mxu0 0.0
        %4516 = vmatprep.subr.mxu0 0.0
        %4517 = vmatpush1.msra.mxu0 0.0
        %4518 = vmatprep.subr.mxu0 0.0
        %4519 = vmatpush1.msra.mxu0 0.0
        %4520 = vmatprep.subr.mxu0 0.0
        %4521 = vmatpush1.msra.mxu0 0.0
        %4522 = vmatprep.subr.mxu0 0.0
        %4523 = vmatpush1.msra.mxu0 0.0
        %4524 = vmatprep.subr.mxu0 0.0
        %4525 = vmatpush1.msra.mxu0 0.0
        %4526 = vmatprep.subr.mxu0 0.0
        %4527 = vmatpush1.msra.mxu0 0.0
        %4528 = vmatprep.subr.mxu0 0.0
        %4529 = vmatpush1.msra.mxu0 0.0
        %4530 = vmatprep.subr.mxu0 0.0
        %4531 = vmatpush1.msra.mxu0 0.0
        %4532 = vmatprep.subr.mxu0 0.0
        %4533 = vmatpush1.msra.mxu0 0.0
        %4534 = vmatprep.subr.mxu0 0.0
        %4535 = vmatpush1.msra.mxu0 0.0
        %4536 = vmatprep.subr.mxu0 0.0
        %4537 = vmatpush1.msra.mxu0 0.0
        %4538 = vmatprep.subr.mxu0 0.0
        %4539 = vmatpush1.msra.mxu0 0.0
        %4540 = vmatprep.subr.mxu0 0.0
        %4541 = vmatpush1.msra.mxu0 0.0
        %4542 = vmatprep.subr.mxu0 0.0
        %4543 = vmatpush1.msra.mxu0 0.0
        %4544 = vmatprep.subr.mxu0 0.0
        %4545 = vmatpush1.msra.mxu0 0.0
        %4546 = vmatprep.subr.mxu0 0.0
        %4547 = vmatpush1.msra.mxu0 0.0
        %4548 = vmatprep.subr.mxu0 0.0
        %4549 = vmatpush1.msra.mxu0 0.0
        %4550 = vmatprep.subr.mxu0 0.0
        %4551 = vmatpush1.msra.mxu0 0.0
        %4552 = vmatprep.subr.mxu0 0.0
        %4553 = vmatpush1.msra.mxu0 0.0
        %4554 = vmatprep.mubr.f32.mxu0 0.0
        %4555 = vmatmul.mubr.f32.gmra.mrb[0].mxu0 %v4488
        %v4556 = vpop.f32.mrb[0].mxu0
        %v4557 = vadd.f32 0.0, %v4556
        %v4558 = vpop.f32.mrb[0].mxu0
        %4559 = vdwg.mxu0
        %v4560 = vadd.f32 %v4477, %v4557
        %v4561 = vld [vmem:[%s7] sm:$0x1]
        %v4563 = vlaneseq
        %v4564 = vshrl.u32 %v4563, 7
        %v4565 = vsub.s32 0, %v4564
        %v4566 = vrot.slane %v4561, %v4565
        %v4568 = vadd.f32 %v4560, %v4566
        %v4569 = vmax.f32 %v4568, 0.0
        %v4570 = vld [vmem:[%s8] sm:$0xff]
        %v4571 = vld [vmem:[%s8 + $0x8] sm:$0xff]
        %v4572 = vld [vmem:[%s8 + $0x10] sm:$0xff]
        %v4573 = vld [vmem:[%s8 + $0x18] sm:$0xff]
        %v4574 = vld [vmem:[%s9] sm:$0x1]
        %v4576 = vlaneseq
        %v4577 = vshrl.u32 %v4576, 7
        %v4578 = vsub.s32 0, %v4577
        %v4579 = vrot.slane %v4574, %v4578
        %vm4581 = vcmask 261120
        %v4583 = vsel %vm4581, %v4569, 0
        %4585 = vmatprep.subr.mxu0 0.0
        %4586 = vmatpush1.msra.mxu0 %v4570
        %4587 = vmatprep.subr.mxu0 0.0
        %4588 = vmatpush1.msra.mxu0 %v4571
        %4589 = vmatprep.subr.mxu0 0.0
        %4590 = vmatpush1.msra.mxu0 %v4572
        %4591 = vmatprep.subr.mxu0 0.0
        %4592 = vmatpush1.msra.mxu0 %v4573
        %4593 = vmatprep.subr.mxu0 0.0
        %4594 = vmatpush1.msra.mxu0 0.0
        %4595 = vmatprep.subr.mxu0 0.0
        %4596 = vmatpush1.msra.mxu0 0.0
        %4597 = vmatprep.subr.mxu0 0.0
        %4598 = vmatpush1.msra.mxu0 0.0
        %4599 = vmatprep.subr.mxu0 0.0
        %4600 = vmatpush1.msra.mxu0 0.0
        %4601 = vmatprep.subr.mxu0 0.0
        %4602 = vmatpush1.msra.mxu0 0.0
        %4603 = vmatprep.subr.mxu0 0.0
        %4604 = vmatpush1.msra.mxu0 0.0
        %4605 = vmatprep.subr.mxu0 0.0
        %4606 = vmatpush1.msra.mxu0 0.0
        %4607 = vmatprep.subr.mxu0 0.0
        %4608 = vmatpush1.msra.mxu0 0.0
        %4609 = vmatprep.subr.mxu0 0.0
        %4610 = vmatpush1.msra.mxu0 0.0
        %4611 = vmatprep.subr.mxu0 0.0
        %4612 = vmatpush1.msra.mxu0 0.0
        %4613 = vmatprep.subr.mxu0 0.0
        %4614 = vmatpush1.msra.mxu0 0.0
        %4615 = vmatprep.subr.mxu0 0.0
        %4616 = vmatpush1.msra.mxu0 0.0
        %4617 = vmatprep.subr.mxu0 0.0
        %4618 = vmatpush1.msra.mxu0 0.0
        %4619 = vmatprep.subr.mxu0 0.0
        %4620 = vmatpush1.msra.mxu0 0.0
        %4621 = vmatprep.subr.mxu0 0.0
        %4622 = vmatpush1.msra.mxu0 0.0
        %4623 = vmatprep.subr.mxu0 0.0
        %4624 = vmatpush1.msra.mxu0 0.0
        %4625 = vmatprep.subr.mxu0 0.0
        %4626 = vmatpush1.msra.mxu0 0.0
        %4627 = vmatprep.subr.mxu0 0.0
        %4628 = vmatpush1.msra.mxu0 0.0
        %4629 = vmatprep.subr.mxu0 0.0
        %4630 = vmatpush1.msra.mxu0 0.0
        %4631 = vmatprep.subr.mxu0 0.0
        %4632 = vmatpush1.msra.mxu0 0.0
        %4633 = vmatprep.subr.mxu0 0.0
        %4634 = vmatpush1.msra.mxu0 0.0
        %4635 = vmatprep.subr.mxu0 0.0
        %4636 = vmatpush1.msra.mxu0 0.0
        %4637 = vmatprep.subr.mxu0 0.0
        %4638 = vmatpush1.msra.mxu0 0.0
        %4639 = vmatprep.subr.mxu0 0.0
        %4640 = vmatpush1.msra.mxu0 0.0
        %4641 = vmatprep.subr.mxu0 0.0
        %4642 = vmatpush1.msra.mxu0 0.0
        %4643 = vmatprep.subr.mxu0 0.0
        %4644 = vmatpush1.msra.mxu0 0.0
        %4645 = vmatprep.subr.mxu0 0.0
        %4646 = vmatpush1.msra.mxu0 0.0
        %4647 = vmatprep.subr.mxu0 0.0
        %4648 = vmatpush1.msra.mxu0 0.0
        %4649 = vmatprep.mubr.f32.mxu0 0.0
        %4650 = vmatmul.mubr.f32.gmra.mrb[0].mxu0 %v4583
        %v4651 = vpop.f32.mrb[0].mxu0
        %v4652 = vadd.f32 %v4579, %v4651
        %v4653 = vpop.f32.mrb[0].mxu0
        %4654 = vdwg.mxu0
        %vm4655 = vcmask 80896
        %4656 = vst.msk [vmem:[%s353] sm:$0xff] %vm4655, %v4652
        %s4657 = sand.u32 %s247, 1
        %s4658 = scalar_lea.sflag [#allocation3], %s4657
        %s4659 = sand.u32 %s247, 1
        %s4660 = smul.addr %s4659, 8
        %s4661 = scalar_lea.vmem [#allocation2], %s4660
        // Predicated region
        $region61: #{cnn1d_forward.1} parent=59 // pred_check
          %p4662 = pneg %p257
        $region62: #{cnn1d_forward.1} parent=59 // pred_check_branch
          %4664 = sbr.rel (%p4662) target = $region64
        $region63: #{cnn1d_forward.1} parent=59 // pred_region
          %s4666 = ssub.s32 128, 128
          %4667 = vsyncadd %s4658, %s4666
          %s4668 = smul.addr %s24, 128
          %s4669 = scalar_lea.hbm %s10, %s4668
          %s4671 = sshll.u32 %s4661, 4
          %s4672 = int_to_ptr.vmem [resolvable:$true] %s4671
          %4674 = dma.vmem_to_hbm [thread:$0]  %s4672, 128, %s4669, %s4658
        $region64: #{cnn1d_forward.1} parent=59 // pred_fallthru
          _
      $region60: #{cnn1d_forward.1} parent=5 // pred_fallthru
        _
      %p4675 = scmp.le.s32.totalorder 2, %s19
      // Predicated region
      $region65: #{cnn1d_forward.1} parent=5 // pred_check
        %p4676 = pneg %p4675
      $region66: #{cnn1d_forward.1} parent=5 // pred_check_branch
        %4678 = sbr.rel (%p4676) target = $region68
      $region67: #{cnn1d_forward.1} parent=5 // pred_region
        %s4679 = ssub.s32 %s19, 2
        // Predicated region
        $region69: #{cnn1d_forward.1} parent=67 // pred_check
          %p4680 = pneg %p263
        $region70: #{cnn1d_forward.1} parent=67 // pred_check_branch
          %4682 = sbr.rel (%p4680) target = $region72
        $region71: #{cnn1d_forward.1} parent=67 // pred_region
          %s4683 = sand.u32 %s248, 1
          %s4684 = scalar_lea.sflag [#allocation3], %s4683
          %s4685 = sand.u32 %s248, 1
          %s4686 = smul.addr %s4685, 8
          %s4687 = scalar_lea.vmem [#allocation2], %s4686
          %4688 = dma.done %s4684, 128
        $region72: #{cnn1d_forward.1} parent=67 // pred_fallthru
          _
      $region68: #{cnn1d_forward.1} parent=5 // pred_fallthru
        _
    $region6: #{cnn1d_forward.1} parent=1 // loop_footer
      %s23 = sadd.s32 1, %s19
    $region7: #{cnn1d_forward.1} parent=1 // loop_footer_branch
      %18 = sbr.rel target = $region3
    $region8: #{cnn1d_forward.1} parent=1 // loop_exit
      _
    %4689 = vsyncpa [#allocation3], 1
    %s4690 = scalar_lea.sflag [#allocation3], 1
    %4691 = vsyncpa %s4690, 1

</llo_original>
